<compile_context>
chip_gen: v7x
topology: tpu7x:2x2x1
jax: 0.10.0
libtpu: 0.0.40
codegen_flags: <defaults>
</compile_context>

<pallas_src>
import math

import jax
import jax.numpy as jnp
from jax.experimental import pallas as pl
from jax.experimental.pallas import tpu as pltpu

C_HID = 32   # conv channel count and hidden width of linear1


def _round_up(n, m):
    return ((n + m - 1) // m) * m


# ----------------------------------------------------------------------------
# Fused forward: conv1(im2col matmul) -> pool -> conv2 -> pool -> conv3 -> pool
#                -> (BN folded) linear1 -> ReLU -> linear2 -> sigmoid
# ----------------------------------------------------------------------------
def build_forward(in_channels, L, motiflen=20, max_tb=16):
    K1, K2, K3 = motiflen, 5, 3
    P1, P2, P3 = 4, 4, 2
    Cin = in_channels
    C = C_HID

    Lc1 = L - K1 + 1                      # conv1 output length (582 for L=601)
    Lp1 = (Lc1 - P1) // P1 + 1            # pool1 output length (145)
    Lc2 = Lp1 - K2 + 1                    # 141
    Lp2 = (Lc2 - P2) // P2 + 1            # 35
    Lc3 = Lp2 - K3 + 1                    # 33
    Lp3 = (Lc3 - P3) // P3 + 1            # 16
    assert C * Lp3 == 512, f"flatten size {C * Lp3} != 512; adjust L"

    Lc1p = _round_up(Lc1, 8)              # 584: sublane-aligned im2col M / sample
    Lp1_pad = _round_up(Lp1, 8)           # 152: stage-1 scratch rows / sample
    Lp2_pad = _round_up(Lp2, 8)           # 40
    W2 = _round_up(P2 * Lp2, 8)           # 144: stage-2 conv window (8-aligned)
    W3 = _round_up(P3 * Lp3, 8)           # 32 : stage-3 conv window (8-aligned)
    assert (K2 - 1) + W2 <= Lp1_pad       # shifted windows stay inside scratch
    assert (K3 - 1) + W3 <= Lp2_pad
    K1C = K1 * Cin
    FLAT = Lp3 * C                        # 512

    def forward(params, x_ncl):
        x = x_ncl.astype(jnp.float32)
        B = x.shape[0]
        if B <= 1:
            tb = 1
        else:
            # keep the grid >= 2 steps so both v7x TensorCores get work
            tb = max(1, min(max_tb, pl.cdiv(B, 2)))
        nblk = pl.cdiv(B, tb)
        b_pad = nblk * tb

        # im2col for conv1, built by XLA at the kernel boundary:
        #   xcol[b, l, k*Cin + c] = x[b, c, l + k]
        win = jnp.arange(Lc1)[:, None] + jnp.arange(K1)[None, :]    # (Lc1, K1)
        xcol = jnp.transpose(x[:, :, win], (0, 2, 3, 1))            # (B,Lc1,K1,Cin)
        xcol = xcol.reshape(B, Lc1, K1C)
        # pad rows Lc1 -> Lc1p (8-aligned M) and batch B -> b_pad (tile multiple);
        # padded rows/samples are sliced away and never affect real outputs.
        xcol = jnp.pad(xcol, ((0, b_pad - B), (0, Lc1p - Lc1), (0, 0)))
        xcol = xcol.astype(jnp.bfloat16)

        # bf16 matmul operands, f32 biases / accumulation.
        w1 = params["w1c"].astype(jnp.bfloat16)
        w2 = params["w2c"].astype(jnp.bfloat16)
        w3 = params["w3c"].astype(jnp.bfloat16)
        wl1 = params["wl1"].astype(jnp.bfloat16)
        b1, b2, b3 = params["b1c"], params["b2c"], params["b3c"]
        bl1, wl2, bl2 = params["bl1"], params["wl2"], params["bl2"]

        def kernel(xcol_ref, w1_ref, b1_ref, w2_ref, b2_ref, w3_ref, b3_ref,
                   wl1_ref, bl1_ref, wl2_ref, bl2_ref, o_ref,
                   h1_ref, h2_ref, hf_ref):
            f32 = jnp.float32

            # ---- stage 1: conv1 as ONE (tb*Lc1p, K1*Cin)@(K1*Cin, 32) matmul
            #      (batch folded into M; Lc1p % 8 == 0 keeps the fold aligned)
            xb = xcol_ref[...].reshape(tb * Lc1p, K1C)
            h = jnp.dot(xb, w1_ref[...], preferred_element_type=f32)
            h = jnp.maximum(h + b1_ref[...], 0.0)
            h = h.reshape(tb, Lc1p, C)[:, :P1 * Lp1, :]
            h = h.reshape(tb, Lp1, P1, C).max(axis=2)               # (tb,Lp1,C)
            h1_ref[:, :Lp1, :] = h.astype(h1_ref.dtype)
            h1_ref[:, Lp1:Lp1_pad, :] = jnp.zeros(
                (tb, Lp1_pad - Lp1, C), h1_ref.dtype)

            # ---- stage 2: conv2(K=5) via shifted ref-windows + ReLU + pool(4)
            #      (dropout = identity in eval mode)
            acc = jnp.dot(h1_ref[:, 0:W2, :].reshape(tb * W2, C), w2_ref[0],
                          preferred_element_type=f32)
            for k in range(1, K2):
                acc = acc + jnp.dot(
                    h1_ref[:, k:k + W2, :].reshape(tb * W2, C), w2_ref[k],
                    preferred_element_type=f32)
            acc = jnp.maximum(acc + b2_ref[...], 0.0)
            h = acc.reshape(tb, W2, C)[:, :P2 * Lp2, :]
            h = h.reshape(tb, Lp2, P2, C).max(axis=2)               # (tb,Lp2,C)
            h2_ref[:, :Lp2, :] = h.astype(h2_ref.dtype)
            h2_ref[:, Lp2:Lp2_pad, :] = jnp.zeros(
                (tb, Lp2_pad - Lp2, C), h2_ref.dtype)

            # ---- stage 3: conv3(K=3) + ReLU; pool(2) fused with the flatten,
            #      written straight into the (tb, 512) head scratch (l-major
            #      order, which is baked into wl1 host-side)
            acc = jnp.dot(h2_ref[:, 0:W3, :].reshape(tb * W3, C), w3_ref[0],
                          preferred_element_type=f32)
            for k in range(1, K3):
                acc = acc + jnp.dot(
                    h2_ref[:, k:k + W3, :].reshape(tb * W3, C), w3_ref[k],
                    preferred_element_type=f32)
            acc = jnp.maximum(acc + b3_ref[...], 0.0).reshape(tb, W3, C)
            for l in range(Lp3):
                pooled = jnp.maximum(acc[:, P3 * l, :], acc[:, P3 * l + 1, :])
                hf_ref[:, l * C:(l + 1) * C] = pooled.astype(hf_ref.dtype)

            # ---- head: BN folded into wl1 -> Linear(512,32) -> ReLU
            #            -> Linear(32,1) -> Sigmoid.  One MXU matmul + lane sum.
            z = jnp.dot(hf_ref[...], wl1_ref[...],
                        preferred_element_type=f32)                  # (tb, 32)
            z = jnp.maximum(z + bl1_ref[...], 0.0)
            y = jnp.sum(z * wl2_ref[...], axis=-1)                   # (tb,)
            o_ref[0] = jax.nn.sigmoid(y[None, :] + bl2_ref[...])     # (1, tb)

        out = pl.pallas_call(
            kernel,
            out_shape=jax.ShapeDtypeStruct((nblk, 1, tb), jnp.float32),
            grid=(nblk,),
            in_specs=[
                pl.BlockSpec((tb, Lc1p, K1C), lambda i: (i, 0, 0)),   # xcol
                pl.BlockSpec((K1C, C), lambda i: (0, 0)),             # w1
                pl.BlockSpec((1, C), lambda i: (0, 0)),               # b1
                pl.BlockSpec((K2, C, C), lambda i: (0, 0, 0)),        # w2
                pl.BlockSpec((1, C), lambda i: (0, 0)),               # b2
                pl.BlockSpec((K3, C, C), lambda i: (0, 0, 0)),        # w3
                pl.BlockSpec((1, C), lambda i: (0, 0)),               # b3
                pl.BlockSpec((FLAT, C), lambda i: (0, 0)),            # wl1 (BN-folded)
                pl.BlockSpec((1, C), lambda i: (0, 0)),               # bl1
                pl.BlockSpec((1, C), lambda i: (0, 0)),               # wl2
                pl.BlockSpec((1, 1), lambda i: (0, 0)),               # bl2
            ],
            out_specs=pl.BlockSpec((1, 1, tb), lambda i: (i, 0, 0)),
            scratch_shapes=[
                pltpu.VMEM((tb, Lp1_pad, C), jnp.bfloat16),   # pool1 output
                pltpu.VMEM((tb, Lp2_pad, C), jnp.bfloat16),   # pool2 output
                pltpu.VMEM((tb, FLAT), jnp.bfloat16),         # flattened pool3
            ],
            compiler_params=pltpu.CompilerParams(
                dimension_semantics=("parallel",)),
        )(xcol, w1, b1, w2, b2, w3, b3, wl1, bl1, wl2, bl2)

        return out.reshape(b_pad, 1)[:B]

    return forward


# ----------------------------------------------------------------------------
# Parameter init matching DeepCNN._init_weights (xavier_uniform, zero bias),
# with BN (eval) and the torch flatten order folded into linear1 host-side.
# ----------------------------------------------------------------------------
def xavier_uniform(key, shape, fan_in, fan_out):
    bound = math.sqrt(6.0 / (fan_in + fan_out))
    return jax.random.uniform(key, shape, jnp.float32, minval=-bound,
                              maxval=bound)


def init_params(key, in_channels, motiflen=20, flat_len=16, eps=1e-5):
    ks = jax.random.split(key, 5)

    def conv_w(k, cout, cin, ksz):
        # torch Conv1d weight (C_out, C_in, K); fan_in=C_in*K, fan_out=C_out*K
        w = xavier_uniform(k, (cout, cin, ksz), cin * ksz, cout * ksz)
        return jnp.transpose(w, (2, 1, 0))            # stored as (K, C_in, C_out)

    w1c = conv_w(ks[0], C_HID, in_channels, motiflen)
    w2c = conv_w(ks[1], C_HID, C_HID, 5)
    w3c = conv_w(ks[2], C_HID, C_HID, 3)

    # Linear layers (torch layout (out, in)): fan_in=in, fan_out=out.
    wl1_t = xavier_uniform(ks[3], (C_HID, 512), 512, C_HID)     # (32, 512)
    wl2_t = xavier_uniform(ks[4], (1, C_HID), C_HID, 1)         # (1, 32)
    bl1 = jnp.zeros((C_HID,), jnp.float32)
    bl2 = jnp.zeros((1,), jnp.float32)

    # BatchNorm1d(512), eval mode with freshly-initialised running stats.
    gamma = jnp.ones((512,), jnp.float32)
    beta = jnp.zeros((512,), jnp.float32)
    run_mean = jnp.zeros((512,), jnp.float32)
    run_var = jnp.ones((512,), jnp.float32)
    s = gamma / jnp.sqrt(run_var + eps)
    t = beta - run_mean * s

    # Fold BN into linear1:  (x*s + t) @ W1^T + b1  ==  x @ W1f + b1f
    w1f = s[:, None] * wl1_t.T                                   # (512, 32), torch order c*16+l
    b1f = bl1 + t @ wl1_t.T                                      # (32,)
    # Re-order rows to the kernel's l-major flatten (row index l*C + c), so the
    # in-kernel (TB,512)@(512,32) matmul needs no transpose.
    wl1_k = jnp.transpose(w1f.reshape(C_HID, flat_len, C_HID), (1, 0, 2))
    wl1_k = wl1_k.reshape(flat_len * C_HID, C_HID)               # (512, 32)

    return {
        "w1c": w1c.reshape(motiflen * in_channels, C_HID),       # (K1*Cin, 32)
        "b1c": jnp.zeros((1, C_HID), jnp.float32),
        "w2c": w2c,                                              # (5, 32, 32)
        "b2c": jnp.zeros((1, C_HID), jnp.float32),
        "w3c": w3c,                                              # (3, 32, 32)
        "b3c": jnp.zeros((1, C_HID), jnp.float32),
        "wl1": wl1_k,                                            # (512, 32)
        "bl1": b1f.reshape(1, C_HID),
        "wl2": wl2_t,                                            # (1, 32)
        "bl2": bl2.reshape(1, 1),
    }


if __name__ == "__main__":
    # Input length 601 gives the 512-wide flatten hard-coded in DeepCNN
    # (32 channels x 16 positions after the three conv/pool stages).
    B, C_in, L = 2, 4, 601
    key = jax.random.PRNGKey(0)
    kx, kp = jax.random.split(key)
    x = jax.random.normal(kx, (B, C_in, L), jnp.float32)
    params = init_params(kp, C_in, motiflen=20)

    forward = jax.jit(build_forward(C_in, L, motiflen=20))
    out = jax.block_until_ready(forward(params, x))
    assert out.shape == (B, 1)
    assert bool(jnp.all(jnp.isfinite(out)))
    assert bool(jnp.all((out >= 0.0) & (out <= 1.0)))
    print("KERNEL_OK")
</pallas_src>

<mosaic_0001>
module attributes {stable_mosaic.version = 11 : i64} {
  func.func @kernel(%arg0: i32, %arg1: memref<1x584x80xbf16, #tpu.memory_space<vmem>>, %arg2: memref<80x32xbf16, #tpu.memory_space<vmem>>, %arg3: memref<1x32xf32, #tpu.memory_space<vmem>>, %arg4: memref<5x32x32xbf16, #tpu.memory_space<vmem>>, %arg5: memref<1x32xf32, #tpu.memory_space<vmem>>, %arg6: memref<3x32x32xbf16, #tpu.memory_space<vmem>>, %arg7: memref<1x32xf32, #tpu.memory_space<vmem>>, %arg8: memref<512x32xbf16, #tpu.memory_space<vmem>>, %arg9: memref<1x32xf32, #tpu.memory_space<vmem>>, %arg10: memref<1x32xf32, #tpu.memory_space<vmem>>, %arg11: memref<1x1xf32, #tpu.memory_space<vmem>>, %arg12: memref<1x1x1xf32, #tpu.memory_space<vmem>>, %arg13: memref<1x152x32xbf16, #tpu.memory_space<vmem>>, %arg14: memref<1x40x32xbf16, #tpu.memory_space<vmem>>, %arg15: memref<1x512xbf16, #tpu.memory_space<vmem>>) attributes {dimension_semantics = [#tpu.dimension_semantics<parallel>], iteration_bounds = array<i64: 2>, scalar_prefetch = 0 : i64, scratch_operands = 3 : i64, tpu.core_type = #tpu.core_type<tc>, window_params = [{transform_indices = @transform_0, window_bounds = array<i64: 1, 584, 80>}, {pipeline_mode = #tpu.pipeline_mode<synchronous>, transform_indices = @transform_1, window_bounds = array<i64: 80, 32>}, {pipeline_mode = #tpu.pipeline_mode<synchronous>, transform_indices = @transform_2, window_bounds = array<i64: 1, 32>}, {pipeline_mode = #tpu.pipeline_mode<synchronous>, transform_indices = @transform_3, window_bounds = array<i64: 5, 32, 32>}, {pipeline_mode = #tpu.pipeline_mode<synchronous>, transform_indices = @transform_4, window_bounds = array<i64: 1, 32>}, {pipeline_mode = #tpu.pipeline_mode<synchronous>, transform_indices = @transform_5, window_bounds = array<i64: 3, 32, 32>}, {pipeline_mode = #tpu.pipeline_mode<synchronous>, transform_indices = @transform_6, window_bounds = array<i64: 1, 32>}, {pipeline_mode = #tpu.pipeline_mode<synchronous>, transform_indices = @transform_7, window_bounds = array<i64: 512, 32>}, {pipeline_mode = #tpu.pipeline_mode<synchronous>, transform_indices = @transform_8, window_bounds = array<i64: 1, 32>}, {pipeline_mode = #tpu.pipeline_mode<synchronous>, transform_indices = @transform_9, window_bounds = array<i64: 1, 32>}, {pipeline_mode = #tpu.pipeline_mode<synchronous>, transform_indices = @transform_10, window_bounds = array<i64: 1, 1>}, {transform_indices = @transform_11, window_bounds = array<i64: 1, 1, 1>}]} {
    %c0 = arith.constant 0 : index
    %c0_0 = arith.constant 0 : index
    %c0_1 = arith.constant 0 : index
    %0 = vector.load %arg1[%c0, %c0_0, %c0_1] : memref<1x584x80xbf16, #tpu.memory_space<vmem>>, vector<1x584x80xbf16>
    %1 = vector.shape_cast %0 : vector<1x584x80xbf16> to vector<584x80xbf16>
    %c0_2 = arith.constant 0 : index
    %c0_3 = arith.constant 0 : index
    %2 = vector.load %arg2[%c0_2, %c0_3] : memref<80x32xbf16, #tpu.memory_space<vmem>>, vector<80x32xbf16>
    %cst = arith.constant dense<0.000000e+00> : vector<584x32xf32>
    %3 = tpu.matmul %1, %2, %cst {dimension_numbers = #tpu.dot_dimension_numbers<[1], [0], [0], [1], [0, 0, 1, 1], [], []>} : vector<584x80xbf16>, vector<80x32xbf16>, vector<584x32xf32> -> vector<584x32xf32>
    %c0_4 = arith.constant 0 : index
    %c0_5 = arith.constant 0 : index
    %4 = vector.load %arg3[%c0_4, %c0_5] : memref<1x32xf32, #tpu.memory_space<vmem>>, vector<1x32xf32>
    %5 = vector.broadcast %4 : vector<1x32xf32> to vector<584x32xf32>
    %6 = arith.addf %3, %5 : vector<584x32xf32>
    %cst_6 = arith.constant 0.000000e+00 : f32
    %7 = vector.broadcast %cst_6 : f32 to vector<584x32xf32>
    %8 = arith.maximumf %6, %7 : vector<584x32xf32>
    %9 = vector.shape_cast %8 : vector<584x32xf32> to vector<1x584x32xf32>
    %10 = vector.extract_strided_slice %9 {offsets = [0, 0, 0], sizes = [1, 580, 32], strides = [1, 1, 1]} : vector<1x584x32xf32> to vector<1x580x32xf32>
    %11 = vector.shape_cast %10 : vector<1x580x32xf32> to vector<1x145x4x32xf32>
    %cst_7 = arith.constant dense<0xFF800000> : vector<1x145x32xf32>
    %12 = vector.multi_reduction <maximumf>, %11, %cst_7 [2] : vector<1x145x4x32xf32> to vector<1x145x32xf32>
    %13 = arith.truncf %12 : vector<1x145x32xf32> to vector<1x145x32xbf16>
    %c0_8 = arith.constant 0 : index
    %c0_9 = arith.constant 0 : index
    %c0_10 = arith.constant 0 : index
    %14 = vector.load %arg13[%c0_8, %c0_9, %c0_10] : memref<1x152x32xbf16, #tpu.memory_space<vmem>>, vector<1x145x32xbf16>
    tpu.vector_store %arg13[%c0_8, %c0_9, %c0_10], %13 {strides = array<i32>} : memref<1x152x32xbf16, #tpu.memory_space<vmem>>, vector<1x145x32xbf16>,
    %cst_11 = arith.constant 0.000000e+00 : bf16
    %15 = vector.broadcast %cst_11 : bf16 to vector<1x7x32xbf16>
    %c0_12 = arith.constant 0 : index
    %c145 = arith.constant 145 : index
    %c0_13 = arith.constant 0 : index
    %16 = vector.load %arg13[%c0_12, %c145, %c0_13] : memref<1x152x32xbf16, #tpu.memory_space<vmem>>, vector<1x7x32xbf16>
    tpu.vector_store %arg13[%c0_12, %c145, %c0_13], %15 {strides = array<i32>} : memref<1x152x32xbf16, #tpu.memory_space<vmem>>, vector<1x7x32xbf16>,
    %c0_14 = arith.constant 0 : index
    %c0_15 = arith.constant 0 : index
    %c0_16 = arith.constant 0 : index
    %17 = vector.load %arg13[%c0_14, %c0_15, %c0_16] : memref<1x152x32xbf16, #tpu.memory_space<vmem>>, vector<1x144x32xbf16>
    %18 = vector.shape_cast %17 : vector<1x144x32xbf16> to vector<144x32xbf16>
    %c0_17 = arith.constant 0 : index
    %c0_18 = arith.constant 0 : index
    %c0_19 = arith.constant 0 : index
    %19 = vector.load %arg4[%c0_17, %c0_18, %c0_19] : memref<5x32x32xbf16, #tpu.memory_space<vmem>>, vector<1x32x32xbf16>
    %20 = vector.shape_cast %19 : vector<1x32x32xbf16> to vector<32x32xbf16>
    %cst_20 = arith.constant dense<0.000000e+00> : vector<144x32xf32>
    %21 = tpu.matmul %18, %20, %cst_20 {dimension_numbers = #tpu.dot_dimension_numbers<[1], [0], [0], [1], [0, 0, 1, 1], [], []>} : vector<144x32xbf16>, vector<32x32xbf16>, vector<144x32xf32> -> vector<144x32xf32>
    %c0_21 = arith.constant 0 : index
    %c1 = arith.constant 1 : index
    %c0_22 = arith.constant 0 : index
    %22 = vector.load %arg13[%c0_21, %c1, %c0_22] : memref<1x152x32xbf16, #tpu.memory_space<vmem>>, vector<1x144x32xbf16>
    %23 = vector.shape_cast %22 : vector<1x144x32xbf16> to vector<144x32xbf16>
    %c1_23 = arith.constant 1 : index
    %c0_24 = arith.constant 0 : index
    %c0_25 = arith.constant 0 : index
    %24 = vector.load %arg4[%c1_23, %c0_24, %c0_25] : memref<5x32x32xbf16, #tpu.memory_space<vmem>>, vector<1x32x32xbf16>
    %25 = vector.shape_cast %24 : vector<1x32x32xbf16> to vector<32x32xbf16>
    %cst_26 = arith.constant dense<0.000000e+00> : vector<144x32xf32>
    %26 = tpu.matmul %23, %25, %cst_26 {dimension_numbers = #tpu.dot_dimension_numbers<[1], [0], [0], [1], [0, 0, 1, 1], [], []>} : vector<144x32xbf16>, vector<32x32xbf16>, vector<144x32xf32> -> vector<144x32xf32>
    %27 = arith.addf %21, %26 : vector<144x32xf32>
    %c0_27 = arith.constant 0 : index
    %c2 = arith.constant 2 : index
    %c0_28 = arith.constant 0 : index
    %28 = vector.load %arg13[%c0_27, %c2, %c0_28] : memref<1x152x32xbf16, #tpu.memory_space<vmem>>, vector<1x144x32xbf16>
    %29 = vector.shape_cast %28 : vector<1x144x32xbf16> to vector<144x32xbf16>
    %c2_29 = arith.constant 2 : index
    %c0_30 = arith.constant 0 : index
    %c0_31 = arith.constant 0 : index
    %30 = vector.load %arg4[%c2_29, %c0_30, %c0_31] : memref<5x32x32xbf16, #tpu.memory_space<vmem>>, vector<1x32x32xbf16>
    %31 = vector.shape_cast %30 : vector<1x32x32xbf16> to vector<32x32xbf16>
    %cst_32 = arith.constant dense<0.000000e+00> : vector<144x32xf32>
    %32 = tpu.matmul %29, %31, %cst_32 {dimension_numbers = #tpu.dot_dimension_numbers<[1], [0], [0], [1], [0, 0, 1, 1], [], []>} : vector<144x32xbf16>, vector<32x32xbf16>, vector<144x32xf32> -> vector<144x32xf32>
    %33 = arith.addf %27, %32 : vector<144x32xf32>
    %c0_33 = arith.constant 0 : index
    %c3 = arith.constant 3 : index
    %c0_34 = arith.constant 0 : index
    %34 = vector.load %arg13[%c0_33, %c3, %c0_34] : memref<1x152x32xbf16, #tpu.memory_space<vmem>>, vector<1x144x32xbf16>
    %35 = vector.shape_cast %34 : vector<1x144x32xbf16> to vector<144x32xbf16>
    %c3_35 = arith.constant 3 : index
    %c0_36 = arith.constant 0 : index
    %c0_37 = arith.constant 0 : index
    %36 = vector.load %arg4[%c3_35, %c0_36, %c0_37] : memref<5x32x32xbf16, #tpu.memory_space<vmem>>, vector<1x32x32xbf16>
    %37 = vector.shape_cast %36 : vector<1x32x32xbf16> to vector<32x32xbf16>
    %cst_38 = arith.constant dense<0.000000e+00> : vector<144x32xf32>
    %38 = tpu.matmul %35, %37, %cst_38 {dimension_numbers = #tpu.dot_dimension_numbers<[1], [0], [0], [1], [0, 0, 1, 1], [], []>} : vector<144x32xbf16>, vector<32x32xbf16>, vector<144x32xf32> -> vector<144x32xf32>
    %39 = arith.addf %33, %38 : vector<144x32xf32>
    %c0_39 = arith.constant 0 : index
    %c4 = arith.constant 4 : index
    %c0_40 = arith.constant 0 : index
    %40 = vector.load %arg13[%c0_39, %c4, %c0_40] : memref<1x152x32xbf16, #tpu.memory_space<vmem>>, vector<1x144x32xbf16>
    %41 = vector.shape_cast %40 : vector<1x144x32xbf16> to vector<144x32xbf16>
    %c4_41 = arith.constant 4 : index
    %c0_42 = arith.constant 0 : index
    %c0_43 = arith.constant 0 : index
    %42 = vector.load %arg4[%c4_41, %c0_42, %c0_43] : memref<5x32x32xbf16, #tpu.memory_space<vmem>>, vector<1x32x32xbf16>
    %43 = vector.shape_cast %42 : vector<1x32x32xbf16> to vector<32x32xbf16>
    %cst_44 = arith.constant dense<0.000000e+00> : vector<144x32xf32>
    %44 = tpu.matmul %41, %43, %cst_44 {dimension_numbers = #tpu.dot_dimension_numbers<[1], [0], [0], [1], [0, 0, 1, 1], [], []>} : vector<144x32xbf16>, vector<32x32xbf16>, vector<144x32xf32> -> vector<144x32xf32>
    %45 = arith.addf %39, %44 : vector<144x32xf32>
    %c0_45 = arith.constant 0 : index
    %c0_46 = arith.constant 0 : index
    %46 = vector.load %arg5[%c0_45, %c0_46] : memref<1x32xf32, #tpu.memory_space<vmem>>, vector<1x32xf32>
    %47 = vector.broadcast %46 : vector<1x32xf32> to vector<144x32xf32>
    %48 = arith.addf %45, %47 : vector<144x32xf32>
    %cst_47 = arith.constant 0.000000e+00 : f32
    %49 = vector.broadcast %cst_47 : f32 to vector<144x32xf32>
    %50 = arith.maximumf %48, %49 : vector<144x32xf32>
    %51 = vector.shape_cast %50 : vector<144x32xf32> to vector<1x144x32xf32>
    %52 = vector.extract_strided_slice %51 {offsets = [0, 0, 0], sizes = [1, 140, 32], strides = [1, 1, 1]} : vector<1x144x32xf32> to vector<1x140x32xf32>
    %53 = vector.shape_cast %52 : vector<1x140x32xf32> to vector<1x35x4x32xf32>
    %cst_48 = arith.constant dense<0xFF800000> : vector<1x35x32xf32>
    %54 = vector.multi_reduction <maximumf>, %53, %cst_48 [2] : vector<1x35x4x32xf32> to vector<1x35x32xf32>
    %55 = arith.truncf %54 : vector<1x35x32xf32> to vector<1x35x32xbf16>
    %c0_49 = arith.constant 0 : index
    %c0_50 = arith.constant 0 : index
    %c0_51 = arith.constant 0 : index
    %56 = vector.load %arg14[%c0_49, %c0_50, %c0_51] : memref<1x40x32xbf16, #tpu.memory_space<vmem>>, vector<1x35x32xbf16>
    tpu.vector_store %arg14[%c0_49, %c0_50, %c0_51], %55 {strides = array<i32>} : memref<1x40x32xbf16, #tpu.memory_space<vmem>>, vector<1x35x32xbf16>,
    %cst_52 = arith.constant 0.000000e+00 : bf16
    %57 = vector.broadcast %cst_52 : bf16 to vector<1x5x32xbf16>
    %c0_53 = arith.constant 0 : index
    %c35 = arith.constant 35 : index
    %c0_54 = arith.constant 0 : index
    %58 = vector.load %arg14[%c0_53, %c35, %c0_54] : memref<1x40x32xbf16, #tpu.memory_space<vmem>>, vector<1x5x32xbf16>
    tpu.vector_store %arg14[%c0_53, %c35, %c0_54], %57 {strides = array<i32>} : memref<1x40x32xbf16, #tpu.memory_space<vmem>>, vector<1x5x32xbf16>,
    %c0_55 = arith.constant 0 : index
    %c0_56 = arith.constant 0 : index
    %c0_57 = arith.constant 0 : index
    %59 = vector.load %arg14[%c0_55, %c0_56, %c0_57] : memref<1x40x32xbf16, #tpu.memory_space<vmem>>, vector<1x32x32xbf16>
    %60 = vector.shape_cast %59 : vector<1x32x32xbf16> to vector<32x32xbf16>
    %c0_58 = arith.constant 0 : index
    %c0_59 = arith.constant 0 : index
    %c0_60 = arith.constant 0 : index
    %61 = vector.load %arg6[%c0_58, %c0_59, %c0_60] : memref<3x32x32xbf16, #tpu.memory_space<vmem>>, vector<1x32x32xbf16>
    %62 = vector.shape_cast %61 : vector<1x32x32xbf16> to vector<32x32xbf16>
    %cst_61 = arith.constant dense<0.000000e+00> : vector<32x32xf32>
    %63 = tpu.matmul %60, %62, %cst_61 {dimension_numbers = #tpu.dot_dimension_numbers<[1], [0], [0], [1], [0, 0, 1, 1], [], []>} : vector<32x32xbf16>, vector<32x32xbf16>, vector<32x32xf32> -> vector<32x32xf32>
    %c0_62 = arith.constant 0 : index
    %c1_63 = arith.constant 1 : index
    %c0_64 = arith.constant 0 : index
    %64 = vector.load %arg14[%c0_62, %c1_63, %c0_64] : memref<1x40x32xbf16, #tpu.memory_space<vmem>>, vector<1x32x32xbf16>
    %65 = vector.shape_cast %64 : vector<1x32x32xbf16> to vector<32x32xbf16>
    %c1_65 = arith.constant 1 : index
    %c0_66 = arith.constant 0 : index
    %c0_67 = arith.constant 0 : index
    %66 = vector.load %arg6[%c1_65, %c0_66, %c0_67] : memref<3x32x32xbf16, #tpu.memory_space<vmem>>, vector<1x32x32xbf16>
    %67 = vector.shape_cast %66 : vector<1x32x32xbf16> to vector<32x32xbf16>
    %cst_68 = arith.constant dense<0.000000e+00> : vector<32x32xf32>
    %68 = tpu.matmul %65, %67, %cst_68 {dimension_numbers = #tpu.dot_dimension_numbers<[1], [0], [0], [1], [0, 0, 1, 1], [], []>} : vector<32x32xbf16>, vector<32x32xbf16>, vector<32x32xf32> -> vector<32x32xf32>
    %69 = arith.addf %63, %68 : vector<32x32xf32>
    %c0_69 = arith.constant 0 : index
    %c2_70 = arith.constant 2 : index
    %c0_71 = arith.constant 0 : index
    %70 = vector.load %arg14[%c0_69, %c2_70, %c0_71] : memref<1x40x32xbf16, #tpu.memory_space<vmem>>, vector<1x32x32xbf16>
    %71 = vector.shape_cast %70 : vector<1x32x32xbf16> to vector<32x32xbf16>
    %c2_72 = arith.constant 2 : index
    %c0_73 = arith.constant 0 : index
    %c0_74 = arith.constant 0 : index
    %72 = vector.load %arg6[%c2_72, %c0_73, %c0_74] : memref<3x32x32xbf16, #tpu.memory_space<vmem>>, vector<1x32x32xbf16>
    %73 = vector.shape_cast %72 : vector<1x32x32xbf16> to vector<32x32xbf16>
    %cst_75 = arith.constant dense<0.000000e+00> : vector<32x32xf32>
    %74 = tpu.matmul %71, %73, %cst_75 {dimension_numbers = #tpu.dot_dimension_numbers<[1], [0], [0], [1], [0, 0, 1, 1], [], []>} : vector<32x32xbf16>, vector<32x32xbf16>, vector<32x32xf32> -> vector<32x32xf32>
    %75 = arith.addf %69, %74 : vector<32x32xf32>
    %c0_76 = arith.constant 0 : index
    %c0_77 = arith.constant 0 : index
    %76 = vector.load %arg7[%c0_76, %c0_77] : memref<1x32xf32, #tpu.memory_space<vmem>>, vector<1x32xf32>
    %77 = vector.broadcast %76 : vector<1x32xf32> to vector<32x32xf32>
    %78 = arith.addf %75, %77 : vector<32x32xf32>
    %cst_78 = arith.constant 0.000000e+00 : f32
    %79 = vector.broadcast %cst_78 : f32 to vector<32x32xf32>
    %80 = arith.maximumf %78, %79 : vector<32x32xf32>
    %81 = vector.shape_cast %80 : vector<32x32xf32> to vector<1x32x32xf32>
    %82 = vector.extract_strided_slice %81 {offsets = [0, 0, 0], sizes = [1, 1, 32], strides = [1, 1, 1]} : vector<1x32x32xf32> to vector<1x1x32xf32>
    %83 = vector.shape_cast %82 : vector<1x1x32xf32> to vector<1x32xf32>
    %84 = vector.extract_strided_slice %81 {offsets = [0, 1, 0], sizes = [1, 1, 32], strides = [1, 1, 1]} : vector<1x32x32xf32> to vector<1x1x32xf32>
    %85 = vector.shape_cast %84 : vector<1x1x32xf32> to vector<1x32xf32>
    %86 = arith.maximumf %83, %85 : vector<1x32xf32>
    %87 = arith.truncf %86 : vector<1x32xf32> to vector<1x32xbf16>
    %c0_79 = arith.constant 0 : index
    %c0_80 = arith.constant 0 : index
    %88 = vector.load %arg15[%c0_79, %c0_80] : memref<1x512xbf16, #tpu.memory_space<vmem>>, vector<1x32xbf16>
    tpu.vector_store %arg15[%c0_79, %c0_80], %87 {strides = array<i32>} : memref<1x512xbf16, #tpu.memory_space<vmem>>, vector<1x32xbf16>,
    %89 = vector.extract_strided_slice %81 {offsets = [0, 2, 0], sizes = [1, 1, 32], strides = [1, 1, 1]} : vector<1x32x32xf32> to vector<1x1x32xf32>
    %90 = vector.shape_cast %89 : vector<1x1x32xf32> to vector<1x32xf32>
    %91 = vector.extract_strided_slice %81 {offsets = [0, 3, 0], sizes = [1, 1, 32], strides = [1, 1, 1]} : vector<1x32x32xf32> to vector<1x1x32xf32>
    %92 = vector.shape_cast %91 : vector<1x1x32xf32> to vector<1x32xf32>
    %93 = arith.maximumf %90, %92 : vector<1x32xf32>
    %94 = arith.truncf %93 : vector<1x32xf32> to vector<1x32xbf16>
    %c0_81 = arith.constant 0 : index
    %c32 = arith.constant 32 : index
    %95 = vector.load %arg15[%c0_81, %c32] : memref<1x512xbf16, #tpu.memory_space<vmem>>, vector<1x32xbf16>
    tpu.vector_store %arg15[%c0_81, %c32], %94 {strides = array<i32>} : memref<1x512xbf16, #tpu.memory_space<vmem>>, vector<1x32xbf16>,
    %96 = vector.extract_strided_slice %81 {offsets = [0, 4, 0], sizes = [1, 1, 32], strides = [1, 1, 1]} : vector<1x32x32xf32> to vector<1x1x32xf32>
    %97 = vector.shape_cast %96 : vector<1x1x32xf32> to vector<1x32xf32>
    %98 = vector.extract_strided_slice %81 {offsets = [0, 5, 0], sizes = [1, 1, 32], strides = [1, 1, 1]} : vector<1x32x32xf32> to vector<1x1x32xf32>
    %99 = vector.shape_cast %98 : vector<1x1x32xf32> to vector<1x32xf32>
    %100 = arith.maximumf %97, %99 : vector<1x32xf32>
    %101 = arith.truncf %100 : vector<1x32xf32> to vector<1x32xbf16>
    %c0_82 = arith.constant 0 : index
    %c64 = arith.constant 64 : index
    %102 = vector.load %arg15[%c0_82, %c64] : memref<1x512xbf16, #tpu.memory_space<vmem>>, vector<1x32xbf16>
    tpu.vector_store %arg15[%c0_82, %c64], %101 {strides = array<i32>} : memref<1x512xbf16, #tpu.memory_space<vmem>>, vector<1x32xbf16>,
    %103 = vector.extract_strided_slice %81 {offsets = [0, 6, 0], sizes = [1, 1, 32], strides = [1, 1, 1]} : vector<1x32x32xf32> to vector<1x1x32xf32>
    %104 = vector.shape_cast %103 : vector<1x1x32xf32> to vector<1x32xf32>
    %105 = vector.extract_strided_slice %81 {offsets = [0, 7, 0], sizes = [1, 1, 32], strides = [1, 1, 1]} : vector<1x32x32xf32> to vector<1x1x32xf32>
    %106 = vector.shape_cast %105 : vector<1x1x32xf32> to vector<1x32xf32>
    %107 = arith.maximumf %104, %106 : vector<1x32xf32>
    %108 = arith.truncf %107 : vector<1x32xf32> to vector<1x32xbf16>
    %c0_83 = arith.constant 0 : index
    %c96 = arith.constant 96 : index
    %109 = vector.load %arg15[%c0_83, %c96] : memref<1x512xbf16, #tpu.memory_space<vmem>>, vector<1x32xbf16>
    tpu.vector_store %arg15[%c0_83, %c96], %108 {strides = array<i32>} : memref<1x512xbf16, #tpu.memory_space<vmem>>, vector<1x32xbf16>,
    %110 = vector.extract_strided_slice %81 {offsets = [0, 8, 0], sizes = [1, 1, 32], strides = [1, 1, 1]} : vector<1x32x32xf32> to vector<1x1x32xf32>
    %111 = vector.shape_cast %110 : vector<1x1x32xf32> to vector<1x32xf32>
    %112 = vector.extract_strided_slice %81 {offsets = [0, 9, 0], sizes = [1, 1, 32], strides = [1, 1, 1]} : vector<1x32x32xf32> to vector<1x1x32xf32>
    %113 = vector.shape_cast %112 : vector<1x1x32xf32> to vector<1x32xf32>
    %114 = arith.maximumf %111, %113 : vector<1x32xf32>
    %115 = arith.truncf %114 : vector<1x32xf32> to vector<1x32xbf16>
    %c0_84 = arith.constant 0 : index
    %c128 = arith.constant 128 : index
    %116 = vector.load %arg15[%c0_84, %c128] : memref<1x512xbf16, #tpu.memory_space<vmem>>, vector<1x32xbf16>
    tpu.vector_store %arg15[%c0_84, %c128], %115 {strides = array<i32>} : memref<1x512xbf16, #tpu.memory_space<vmem>>, vector<1x32xbf16>,
    %117 = vector.extract_strided_slice %81 {offsets = [0, 10, 0], sizes = [1, 1, 32], strides = [1, 1, 1]} : vector<1x32x32xf32> to vector<1x1x32xf32>
    %118 = vector.shape_cast %117 : vector<1x1x32xf32> to vector<1x32xf32>
    %119 = vector.extract_strided_slice %81 {offsets = [0, 11, 0], sizes = [1, 1, 32], strides = [1, 1, 1]} : vector<1x32x32xf32> to vector<1x1x32xf32>
    %120 = vector.shape_cast %119 : vector<1x1x32xf32> to vector<1x32xf32>
    %121 = arith.maximumf %118, %120 : vector<1x32xf32>
    %122 = arith.truncf %121 : vector<1x32xf32> to vector<1x32xbf16>
    %c0_85 = arith.constant 0 : index
    %c160 = arith.constant 160 : index
    %123 = vector.load %arg15[%c0_85, %c160] : memref<1x512xbf16, #tpu.memory_space<vmem>>, vector<1x32xbf16>
    tpu.vector_store %arg15[%c0_85, %c160], %122 {strides = array<i32>} : memref<1x512xbf16, #tpu.memory_space<vmem>>, vector<1x32xbf16>,
    %124 = vector.extract_strided_slice %81 {offsets = [0, 12, 0], sizes = [1, 1, 32], strides = [1, 1, 1]} : vector<1x32x32xf32> to vector<1x1x32xf32>
    %125 = vector.shape_cast %124 : vector<1x1x32xf32> to vector<1x32xf32>
    %126 = vector.extract_strided_slice %81 {offsets = [0, 13, 0], sizes = [1, 1, 32], strides = [1, 1, 1]} : vector<1x32x32xf32> to vector<1x1x32xf32>
    %127 = vector.shape_cast %126 : vector<1x1x32xf32> to vector<1x32xf32>
    %128 = arith.maximumf %125, %127 : vector<1x32xf32>
    %129 = arith.truncf %128 : vector<1x32xf32> to vector<1x32xbf16>
    %c0_86 = arith.constant 0 : index
    %c192 = arith.constant 192 : index
    %130 = vector.load %arg15[%c0_86, %c192] : memref<1x512xbf16, #tpu.memory_space<vmem>>, vector<1x32xbf16>
    tpu.vector_store %arg15[%c0_86, %c192], %129 {strides = array<i32>} : memref<1x512xbf16, #tpu.memory_space<vmem>>, vector<1x32xbf16>,
    %131 = vector.extract_strided_slice %81 {offsets = [0, 14, 0], sizes = [1, 1, 32], strides = [1, 1, 1]} : vector<1x32x32xf32> to vector<1x1x32xf32>
    %132 = vector.shape_cast %131 : vector<1x1x32xf32> to vector<1x32xf32>
    %133 = vector.extract_strided_slice %81 {offsets = [0, 15, 0], sizes = [1, 1, 32], strides = [1, 1, 1]} : vector<1x32x32xf32> to vector<1x1x32xf32>
    %134 = vector.shape_cast %133 : vector<1x1x32xf32> to vector<1x32xf32>
    %135 = arith.maximumf %132, %134 : vector<1x32xf32>
    %136 = arith.truncf %135 : vector<1x32xf32> to vector<1x32xbf16>
    %c0_87 = arith.constant 0 : index
    %c224 = arith.constant 224 : index
    %137 = vector.load %arg15[%c0_87, %c224] : memref<1x512xbf16, #tpu.memory_space<vmem>>, vector<1x32xbf16>
    tpu.vector_store %arg15[%c0_87, %c224], %136 {strides = array<i32>} : memref<1x512xbf16, #tpu.memory_space<vmem>>, vector<1x32xbf16>,
    %138 = vector.extract_strided_slice %81 {offsets = [0, 16, 0], sizes = [1, 1, 32], strides = [1, 1, 1]} : vector<1x32x32xf32> to vector<1x1x32xf32>
    %139 = vector.shape_cast %138 : vector<1x1x32xf32> to vector<1x32xf32>
    %140 = vector.extract_strided_slice %81 {offsets = [0, 17, 0], sizes = [1, 1, 32], strides = [1, 1, 1]} : vector<1x32x32xf32> to vector<1x1x32xf32>
    %141 = vector.shape_cast %140 : vector<1x1x32xf32> to vector<1x32xf32>
    %142 = arith.maximumf %139, %141 : vector<1x32xf32>
    %143 = arith.truncf %142 : vector<1x32xf32> to vector<1x32xbf16>
    %c0_88 = arith.constant 0 : index
    %c256 = arith.constant 256 : index
    %144 = vector.load %arg15[%c0_88, %c256] : memref<1x512xbf16, #tpu.memory_space<vmem>>, vector<1x32xbf16>
    tpu.vector_store %arg15[%c0_88, %c256], %143 {strides = array<i32>} : memref<1x512xbf16, #tpu.memory_space<vmem>>, vector<1x32xbf16>,
    %145 = vector.extract_strided_slice %81 {offsets = [0, 18, 0], sizes = [1, 1, 32], strides = [1, 1, 1]} : vector<1x32x32xf32> to vector<1x1x32xf32>
    %146 = vector.shape_cast %145 : vector<1x1x32xf32> to vector<1x32xf32>
    %147 = vector.extract_strided_slice %81 {offsets = [0, 19, 0], sizes = [1, 1, 32], strides = [1, 1, 1]} : vector<1x32x32xf32> to vector<1x1x32xf32>
    %148 = vector.shape_cast %147 : vector<1x1x32xf32> to vector<1x32xf32>
    %149 = arith.maximumf %146, %148 : vector<1x32xf32>
    %150 = arith.truncf %149 : vector<1x32xf32> to vector<1x32xbf16>
    %c0_89 = arith.constant 0 : index
    %c288 = arith.constant 288 : index
    %151 = vector.load %arg15[%c0_89, %c288] : memref<1x512xbf16, #tpu.memory_space<vmem>>, vector<1x32xbf16>
    tpu.vector_store %arg15[%c0_89, %c288], %150 {strides = array<i32>} : memref<1x512xbf16, #tpu.memory_space<vmem>>, vector<1x32xbf16>,
    %152 = vector.extract_strided_slice %81 {offsets = [0, 20, 0], sizes = [1, 1, 32], strides = [1, 1, 1]} : vector<1x32x32xf32> to vector<1x1x32xf32>
    %153 = vector.shape_cast %152 : vector<1x1x32xf32> to vector<1x32xf32>
    %154 = vector.extract_strided_slice %81 {offsets = [0, 21, 0], sizes = [1, 1, 32], strides = [1, 1, 1]} : vector<1x32x32xf32> to vector<1x1x32xf32>
    %155 = vector.shape_cast %154 : vector<1x1x32xf32> to vector<1x32xf32>
    %156 = arith.maximumf %153, %155 : vector<1x32xf32>
    %157 = arith.truncf %156 : vector<1x32xf32> to vector<1x32xbf16>
    %c0_90 = arith.constant 0 : index
    %c320 = arith.constant 320 : index
    %158 = vector.load %arg15[%c0_90, %c320] : memref<1x512xbf16, #tpu.memory_space<vmem>>, vector<1x32xbf16>
    tpu.vector_store %arg15[%c0_90, %c320], %157 {strides = array<i32>} : memref<1x512xbf16, #tpu.memory_space<vmem>>, vector<1x32xbf16>,
    %159 = vector.extract_strided_slice %81 {offsets = [0, 22, 0], sizes = [1, 1, 32], strides = [1, 1, 1]} : vector<1x32x32xf32> to vector<1x1x32xf32>
    %160 = vector.shape_cast %159 : vector<1x1x32xf32> to vector<1x32xf32>
    %161 = vector.extract_strided_slice %81 {offsets = [0, 23, 0], sizes = [1, 1, 32], strides = [1, 1, 1]} : vector<1x32x32xf32> to vector<1x1x32xf32>
    %162 = vector.shape_cast %161 : vector<1x1x32xf32> to vector<1x32xf32>
    %163 = arith.maximumf %160, %162 : vector<1x32xf32>
    %164 = arith.truncf %163 : vector<1x32xf32> to vector<1x32xbf16>
    %c0_91 = arith.constant 0 : index
    %c352 = arith.constant 352 : index
    %165 = vector.load %arg15[%c0_91, %c352] : memref<1x512xbf16, #tpu.memory_space<vmem>>, vector<1x32xbf16>
    tpu.vector_store %arg15[%c0_91, %c352], %164 {strides = array<i32>} : memref<1x512xbf16, #tpu.memory_space<vmem>>, vector<1x32xbf16>,
    %166 = vector.extract_strided_slice %81 {offsets = [0, 24, 0], sizes = [1, 1, 32], strides = [1, 1, 1]} : vector<1x32x32xf32> to vector<1x1x32xf32>
    %167 = vector.shape_cast %166 : vector<1x1x32xf32> to vector<1x32xf32>
    %168 = vector.extract_strided_slice %81 {offsets = [0, 25, 0], sizes = [1, 1, 32], strides = [1, 1, 1]} : vector<1x32x32xf32> to vector<1x1x32xf32>
    %169 = vector.shape_cast %168 : vector<1x1x32xf32> to vector<1x32xf32>
    %170 = arith.maximumf %167, %169 : vector<1x32xf32>
    %171 = arith.truncf %170 : vector<1x32xf32> to vector<1x32xbf16>
    %c0_92 = arith.constant 0 : index
    %c384 = arith.constant 384 : index
    %172 = vector.load %arg15[%c0_92, %c384] : memref<1x512xbf16, #tpu.memory_space<vmem>>, vector<1x32xbf16>
    tpu.vector_store %arg15[%c0_92, %c384], %171 {strides = array<i32>} : memref<1x512xbf16, #tpu.memory_space<vmem>>, vector<1x32xbf16>,
    %173 = vector.extract_strided_slice %81 {offsets = [0, 26, 0], sizes = [1, 1, 32], strides = [1, 1, 1]} : vector<1x32x32xf32> to vector<1x1x32xf32>
    %174 = vector.shape_cast %173 : vector<1x1x32xf32> to vector<1x32xf32>
    %175 = vector.extract_strided_slice %81 {offsets = [0, 27, 0], sizes = [1, 1, 32], strides = [1, 1, 1]} : vector<1x32x32xf32> to vector<1x1x32xf32>
    %176 = vector.shape_cast %175 : vector<1x1x32xf32> to vector<1x32xf32>
    %177 = arith.maximumf %174, %176 : vector<1x32xf32>
    %178 = arith.truncf %177 : vector<1x32xf32> to vector<1x32xbf16>
    %c0_93 = arith.constant 0 : index
    %c416 = arith.constant 416 : index
    %179 = vector.load %arg15[%c0_93, %c416] : memref<1x512xbf16, #tpu.memory_space<vmem>>, vector<1x32xbf16>
    tpu.vector_store %arg15[%c0_93, %c416], %178 {strides = array<i32>} : memref<1x512xbf16, #tpu.memory_space<vmem>>, vector<1x32xbf16>,
    %180 = vector.extract_strided_slice %81 {offsets = [0, 28, 0], sizes = [1, 1, 32], strides = [1, 1, 1]} : vector<1x32x32xf32> to vector<1x1x32xf32>
    %181 = vector.shape_cast %180 : vector<1x1x32xf32> to vector<1x32xf32>
    %182 = vector.extract_strided_slice %81 {offsets = [0, 29, 0], sizes = [1, 1, 32], strides = [1, 1, 1]} : vector<1x32x32xf32> to vector<1x1x32xf32>
    %183 = vector.shape_cast %182 : vector<1x1x32xf32> to vector<1x32xf32>
    %184 = arith.maximumf %181, %183 : vector<1x32xf32>
    %185 = arith.truncf %184 : vector<1x32xf32> to vector<1x32xbf16>
    %c0_94 = arith.constant 0 : index
    %c448 = arith.constant 448 : index
    %186 = vector.load %arg15[%c0_94, %c448] : memref<1x512xbf16, #tpu.memory_space<vmem>>, vector<1x32xbf16>
    tpu.vector_store %arg15[%c0_94, %c448], %185 {strides = array<i32>} : memref<1x512xbf16, #tpu.memory_space<vmem>>, vector<1x32xbf16>,
    %187 = vector.extract_strided_slice %81 {offsets = [0, 30, 0], sizes = [1, 1, 32], strides = [1, 1, 1]} : vector<1x32x32xf32> to vector<1x1x32xf32>
    %188 = vector.shape_cast %187 : vector<1x1x32xf32> to vector<1x32xf32>
    %189 = vector.extract_strided_slice %81 {offsets = [0, 31, 0], sizes = [1, 1, 32], strides = [1, 1, 1]} : vector<1x32x32xf32> to vector<1x1x32xf32>
    %190 = vector.shape_cast %189 : vector<1x1x32xf32> to vector<1x32xf32>
    %191 = arith.maximumf %188, %190 : vector<1x32xf32>
    %192 = arith.truncf %191 : vector<1x32xf32> to vector<1x32xbf16>
    %c0_95 = arith.constant 0 : index
    %c480 = arith.constant 480 : index
    %193 = vector.load %arg15[%c0_95, %c480] : memref<1x512xbf16, #tpu.memory_space<vmem>>, vector<1x32xbf16>
    tpu.vector_store %arg15[%c0_95, %c480], %192 {strides = array<i32>} : memref<1x512xbf16, #tpu.memory_space<vmem>>, vector<1x32xbf16>,
    %c0_96 = arith.constant 0 : index
    %c0_97 = arith.constant 0 : index
    %194 = vector.load %arg15[%c0_96, %c0_97] : memref<1x512xbf16, #tpu.memory_space<vmem>>, vector<1x512xbf16>
    %c0_98 = arith.constant 0 : index
    %c0_99 = arith.constant 0 : index
    %195 = vector.load %arg8[%c0_98, %c0_99] : memref<512x32xbf16, #tpu.memory_space<vmem>>, vector<512x32xbf16>
    %cst_100 = arith.constant dense<0.000000e+00> : vector<1x32xf32>
    %196 = tpu.matmul %194, %195, %cst_100 {dimension_numbers = #tpu.dot_dimension_numbers<[1], [0], [0], [1], [0, 0, 1, 1], [], []>} : vector<1x512xbf16>, vector<512x32xbf16>, vector<1x32xf32> -> vector<1x32xf32>
    %c0_101 = arith.constant 0 : index
    %c0_102 = arith.constant 0 : index
    %197 = vector.load %arg9[%c0_101, %c0_102] : memref<1x32xf32, #tpu.memory_space<vmem>>, vector<1x32xf32>
    %198 = arith.addf %196, %197 : vector<1x32xf32>
    %cst_103 = arith.constant 0.000000e+00 : f32
    %199 = vector.broadcast %cst_103 : f32 to vector<1x32xf32>
    %200 = arith.maximumf %198, %199 : vector<1x32xf32>
    %c0_104 = arith.constant 0 : index
    %c0_105 = arith.constant 0 : index
    %201 = vector.load %arg10[%c0_104, %c0_105] : memref<1x32xf32, #tpu.memory_space<vmem>>, vector<1x32xf32>
    %202 = arith.mulf %200, %201 : vector<1x32xf32>
    %cst_106 = arith.constant dense<0.000000e+00> : vector<1xf32>
    %203 = vector.multi_reduction <add>, %202, %cst_106 [1] : vector<1x32xf32> to vector<1xf32>
    %204 = vector.shape_cast %203 : vector<1xf32> to vector<1x1xf32>
    %c0_107 = arith.constant 0 : index
    %c0_108 = arith.constant 0 : index
    %205 = vector.load %arg11[%c0_107, %c0_108] : memref<1x1xf32, #tpu.memory_space<vmem>>, vector<1x1xf32>
    %206 = arith.addf %204, %205 : vector<1x1xf32>
    %207 = arith.negf %206 : vector<1x1xf32>
    %208 = math.exp %207 : vector<1x1xf32>
    %cst_109 = arith.constant 1.000000e+00 : f32
    %209 = vector.broadcast %cst_109 : f32 to vector<1x1xf32>
    %210 = arith.addf %209, %208 : vector<1x1xf32>
    %211 = arith.divf %209, %210 : vector<1x1xf32>
    %c0_110 = arith.constant 0 : index
    %c0_111 = arith.constant 0 : index
    %c0_112 = arith.constant 0 : index
    %212 = vector.load %arg12[%c0_110, %c0_111, %c0_112] : memref<1x1x1xf32, #tpu.memory_space<vmem>>, vector<1x1x1xf32>
    %213 = vector.shape_cast %212 : vector<1x1x1xf32> to vector<1x1xf32>
    %214 = vector.shape_cast %211 : vector<1x1xf32> to vector<1x1x1xf32>
    tpu.vector_store %arg12[%c0_110, %c0_111, %c0_112], %214 {strides = array<i32>} : memref<1x1x1xf32, #tpu.memory_space<vmem>>, vector<1x1x1xf32>,
    return
  }
  func.func @transform_0(%arg0: i32) -> (i32, i32, i32) {
    %c0_i32 = arith.constant 0 : i32
    %c0_i32_0 = arith.constant 0 : i32
    %c0_i32_1 = arith.constant 0 : i32
    return %arg0, %c0_i32, %c0_i32_0 : i32, i32, i32
  }
  func.func @transform_1(%arg0: i32) -> (i32, i32) {
    %c0_i32 = arith.constant 0 : i32
    %c0_i32_0 = arith.constant 0 : i32
    %c0_i32_1 = arith.constant 0 : i32
    return %c0_i32, %c0_i32_0 : i32, i32
  }
  func.func @transform_2(%arg0: i32) -> (i32, i32) {
    %c0_i32 = arith.constant 0 : i32
    %c0_i32_0 = arith.constant 0 : i32
    %c0_i32_1 = arith.constant 0 : i32
    return %c0_i32, %c0_i32_0 : i32, i32
  }
  func.func @transform_3(%arg0: i32) -> (i32, i32, i32) {
    %c0_i32 = arith.constant 0 : i32
    %c0_i32_0 = arith.constant 0 : i32
    %c0_i32_1 = arith.constant 0 : i32
    %c0_i32_2 = arith.constant 0 : i32
    return %c0_i32, %c0_i32_0, %c0_i32_1 : i32, i32, i32
  }
  func.func @transform_4(%arg0: i32) -> (i32, i32) {
    %c0_i32 = arith.constant 0 : i32
    %c0_i32_0 = arith.constant 0 : i32
    %c0_i32_1 = arith.constant 0 : i32
    return %c0_i32, %c0_i32_0 : i32, i32
  }
  func.func @transform_5(%arg0: i32) -> (i32, i32, i32) {
    %c0_i32 = arith.constant 0 : i32
    %c0_i32_0 = arith.constant 0 : i32
    %c0_i32_1 = arith.constant 0 : i32
    %c0_i32_2 = arith.constant 0 : i32
    return %c0_i32, %c0_i32_0, %c0_i32_1 : i32, i32, i32
  }
  func.func @transform_6(%arg0: i32) -> (i32, i32) {
    %c0_i32 = arith.constant 0 : i32
    %c0_i32_0 = arith.constant 0 : i32
    %c0_i32_1 = arith.constant 0 : i32
    return %c0_i32, %c0_i32_0 : i32, i32
  }
  func.func @transform_7(%arg0: i32) -> (i32, i32) {
    %c0_i32 = arith.constant 0 : i32
    %c0_i32_0 = arith.constant 0 : i32
    %c0_i32_1 = arith.constant 0 : i32
    return %c0_i32, %c0_i32_0 : i32, i32
  }
  func.func @transform_8(%arg0: i32) -> (i32, i32) {
    %c0_i32 = arith.constant 0 : i32
    %c0_i32_0 = arith.constant 0 : i32
    %c0_i32_1 = arith.constant 0 : i32
    return %c0_i32, %c0_i32_0 : i32, i32
  }
  func.func @transform_9(%arg0: i32) -> (i32, i32) {
    %c0_i32 = arith.constant 0 : i32
    %c0_i32_0 = arith.constant 0 : i32
    %c0_i32_1 = arith.constant 0 : i32
    return %c0_i32, %c0_i32_0 : i32, i32
  }
  func.func @transform_10(%arg0: i32) -> (i32, i32) {
    %c0_i32 = arith.constant 0 : i32
    %c0_i32_0 = arith.constant 0 : i32
    %c0_i32_1 = arith.constant 0 : i32
    return %c0_i32, %c0_i32_0 : i32, i32
  }
  func.func @transform_11(%arg0: i32) -> (i32, i32, i32) {
    %c0_i32 = arith.constant 0 : i32
    %c0_i32_0 = arith.constant 0 : i32
    %c0_i32_1 = arith.constant 0 : i32
    return %arg0, %c0_i32, %c0_i32_0 : i32, i32, i32
  }
}

</mosaic_0001>

<llo_original>
// kernel: forward.1
$region0: #{forward.1}
  #allocation0 [shape = 'u32[]', space=smem, size = 0x4, offset = 0x4, fixed_abs, tag = 'smem constant byte address 0x4 - core index']
  #allocation1 [shape = 'u32[144,128]{1,0:T(1,128)}', space=vmem, size = 0x12000, scoped, tag = 'internal scratch']
  #allocation2 [shape = 'bf16[1,152,32]{2,1,0:T(8,128)(2,1)}', space=vmem, size = 0x9800, scoped, tag = 'scratch operand']
  #allocation3 [shape = 'bf16[1,40,32]{2,1,0:T(8,128)(2,1)}', space=vmem, size = 0x2800, scoped, tag = 'scratch operand']
  #allocation4 [shape = 'bf16[1,512]{1,0:T(2,128)(2,1)}', space=vmem, size = 0x800, scoped, tag = 'scratch operand']
  #allocation5 [shape = 'f32[1,1]{1,0:T(1,128)S(1)}', space=vmem, size = 0x200, scoped, tag = 'scoped memory for forward.1']
  %s0 = inlined_call_operand.vmem [shape: bf16[2,584,80], index: 0, kind: input, shape index: {}]
  %s1 = inlined_call_operand.vmem [shape: bf16[80,32], index: 1, kind: input, shape index: {}]
  %s2 = inlined_call_operand.vmem [shape: f32[1,32], index: 2, kind: input, shape index: {}]
  %s3 = inlined_call_operand.vmem [shape: bf16[5,32,32], index: 3, kind: input, shape index: {}]
  %s4 = inlined_call_operand.vmem [shape: f32[1,32], index: 4, kind: input, shape index: {}]
  %s5 = inlined_call_operand.vmem [shape: bf16[3,32,32], index: 5, kind: input, shape index: {}]
  %s6 = inlined_call_operand.vmem [shape: f32[1,32], index: 6, kind: input, shape index: {}]
  %s7 = inlined_call_operand.vmem [shape: bf16[512,32], index: 7, kind: input, shape index: {}]
  %s8 = inlined_call_operand.vmem [shape: f32[1,32], index: 8, kind: input, shape index: {}]
  %s9 = inlined_call_operand.vmem [shape: f32[1,32], index: 9, kind: input, shape index: {}]
  %s10 = inlined_call_operand.<no memory space> [shape: f32[1,1], index: 10, kind: input, shape index: {}]
  %s11 = inlined_call_operand.vmem [shape: f32[2,1,1], index: 11, kind: output, shape index: {}]
  %s12 = sld [smem:[#allocation0]]
  $region77: #{forward.1} parent=0
    _
  %s14 = ssub.s32 1, %s12
  %s15 = scalar_select 0, %s14, %s12
  %v16 = vstv %s10
  %17 = vst [vmem:[#allocation5] sm:$0x1] %v16
  loop: start=0, step=1, limit=4
  $region2: #{forward.1} parent=0 // loop_pre_header
    _
  $region3: #{forward.1} parent=0 // loop_header
    %s19 = sphi 0, %s23
    %p20 = scmp.ge.s32.totalorder %s19, 4
    %s29 = sphi 0, %s31
    %s32 = sphi 0, %s29
    %s33 = sphi 0, %s32
    %s49 = sphi 0, %s33
    %s53 = sphi 0, %s53
    %s55 = sphi 0, %s53
    %s56 = sphi 0, %s55
    %s70 = sphi 0, %s56
    %s74 = sphi 0, %s74
    %s76 = sphi 0, %s74
    %s77 = sphi 0, %s76
    %s91 = sphi 0, %s77
    %s95 = sphi 0, %s95
    %s97 = sphi 0, %s95
    %s98 = sphi 0, %s97
    %s112 = sphi 0, %s98
    %s116 = sphi 0, %s116
    %s118 = sphi 0, %s116
    %s119 = sphi 0, %s118
    %s133 = sphi 0, %s119
    %s137 = sphi 0, %s137
    %s139 = sphi 0, %s137
    %s140 = sphi 0, %s139
    %s154 = sphi 0, %s140
    %s158 = sphi 0, %s158
    %s160 = sphi 0, %s158
    %s161 = sphi 0, %s160
    %s175 = sphi 0, %s161
    %s179 = sphi 0, %s179
    %s181 = sphi 0, %s179
    %s182 = sphi 0, %s181
    %s196 = sphi 0, %s182
    %s200 = sphi 0, %s200
    %s202 = sphi 0, %s200
    %s203 = sphi 0, %s202
    %s217 = sphi 0, %s203
    %s221 = sphi 0, %s221
    %s223 = sphi 0, %s221
    %s224 = sphi 0, %s223
    %s238 = sphi 0, %s224
    %s242 = sphi 0, %s242
    %s244 = sphi 0, %s242
    %s245 = sphi 0, %s244
    %s259 = sphi 0, %s245
    %s265 = sphi 0, %s267
    %s268 = sphi 0, %s265
    %s269 = sphi 0, %s268
    %s285 = sphi 0, %s269
  $region4: #{forward.1} parent=0 // loop_header_branch
    %22 = sbr.rel (%p20) target = $region8
  $region5: #{forward.1} parent=0 // loop_body
    %s24 = ssub.s32 %s19, 1
    %s25 = ssub.s32 %s19, 2
    %s26 = sadd.s32 %s19, 1
    %s27 = ssub.s32 %s19, %s26
    %p28 = scmp.eq.s32.totalorder %s27, 0
    %s30 = sadd.s32 %s29, 1
    %s31 = scalar_select %p28, %s29, %s30
    %p34 = pneg %p28
    %p35 = scmp.eq.s32.totalorder %s19, 1
    %p36 = por %p34, %p35
    %p37 = scmp.ne.s32.totalorder %s29, %s32
    %p38 = scmp.eq.s32.totalorder %s19, 0
    %p39 = por %p37, %p38
    %p40 = scmp.ne.s32.totalorder %s29, %s32
    %p41 = scmp.eq.s32.totalorder %s24, 1
    %p42 = por %p40, %p41
    %p43 = scmp.ne.s32.totalorder %s32, %s33
    %p44 = scmp.eq.s32.totalorder %s24, 0
    %p45 = por %p43, %p44
    %p46 = scmp.ne.s32.totalorder %s32, %s33
    %p47 = scmp.eq.s32.totalorder %s25, 1
    %p48 = por %p46, %p47
    %p50 = scmp.ne.s32.totalorder %s33, %s49
    %p51 = scmp.eq.s32.totalorder %s25, 0
    %p52 = por %p50, %p51
    %s54 = sadd.s32 %s53, 1
    %p57 = scmp.eq.s32.totalorder %s19, 1
    %p58 = scmp.ne.s32.totalorder %s53, %s55
    %p59 = scmp.eq.s32.totalorder %s19, 0
    %p60 = por %p58, %p59
    %p61 = scmp.ne.s32.totalorder %s53, %s55
    %p62 = scmp.eq.s32.totalorder %s24, 1
    %p63 = por %p61, %p62
    %p64 = scmp.ne.s32.totalorder %s55, %s56
    %p65 = scmp.eq.s32.totalorder %s24, 0
    %p66 = por %p64, %p65
    %p67 = scmp.ne.s32.totalorder %s55, %s56
    %p68 = scmp.eq.s32.totalorder %s25, 1
    %p69 = por %p67, %p68
    %p71 = scmp.ne.s32.totalorder %s56, %s70
    %p72 = scmp.eq.s32.totalorder %s25, 0
    %p73 = por %p71, %p72
    %s75 = sadd.s32 %s74, 1
    %p78 = scmp.eq.s32.totalorder %s19, 1
    %p79 = scmp.ne.s32.totalorder %s74, %s76
    %p80 = scmp.eq.s32.totalorder %s19, 0
    %p81 = por %p79, %p80
    %p82 = scmp.ne.s32.totalorder %s74, %s76
    %p83 = scmp.eq.s32.totalorder %s24, 1
    %p84 = por %p82, %p83
    %p85 = scmp.ne.s32.totalorder %s76, %s77
    %p86 = scmp.eq.s32.totalorder %s24, 0
    %p87 = por %p85, %p86
    %p88 = scmp.ne.s32.totalorder %s76, %s77
    %p89 = scmp.eq.s32.totalorder %s25, 1
    %p90 = por %p88, %p89
    %p92 = scmp.ne.s32.totalorder %s77, %s91
    %p93 = scmp.eq.s32.totalorder %s25, 0
    %p94 = por %p92, %p93
    %s96 = sadd.s32 %s95, 1
    %p99 = scmp.eq.s32.totalorder %s19, 1
    %p100 = scmp.ne.s32.totalorder %s95, %s97
    %p101 = scmp.eq.s32.totalorder %s19, 0
    %p102 = por %p100, %p101
    %p103 = scmp.ne.s32.totalorder %s95, %s97
    %p104 = scmp.eq.s32.totalorder %s24, 1
    %p105 = por %p103, %p104
    %p106 = scmp.ne.s32.totalorder %s97, %s98
    %p107 = scmp.eq.s32.totalorder %s24, 0
    %p108 = por %p106, %p107
    %p109 = scmp.ne.s32.totalorder %s97, %s98
    %p110 = scmp.eq.s32.totalorder %s25, 1
    %p111 = por %p109, %p110
    %p113 = scmp.ne.s32.totalorder %s98, %s112
    %p114 = scmp.eq.s32.totalorder %s25, 0
    %p115 = por %p113, %p114
    %s117 = sadd.s32 %s116, 1
    %p120 = scmp.eq.s32.totalorder %s19, 1
    %p121 = scmp.ne.s32.totalorder %s116, %s118
    %p122 = scmp.eq.s32.totalorder %s19, 0
    %p123 = por %p121, %p122
    %p124 = scmp.ne.s32.totalorder %s116, %s118
    %p125 = scmp.eq.s32.totalorder %s24, 1
    %p126 = por %p124, %p125
    %p127 = scmp.ne.s32.totalorder %s118, %s119
    %p128 = scmp.eq.s32.totalorder %s24, 0
    %p129 = por %p127, %p128
    %p130 = scmp.ne.s32.totalorder %s118, %s119
    %p131 = scmp.eq.s32.totalorder %s25, 1
    %p132 = por %p130, %p131
    %p134 = scmp.ne.s32.totalorder %s119, %s133
    %p135 = scmp.eq.s32.totalorder %s25, 0
    %p136 = por %p134, %p135
    %s138 = sadd.s32 %s137, 1
    %p141 = scmp.eq.s32.totalorder %s19, 1
    %p142 = scmp.ne.s32.totalorder %s137, %s139
    %p143 = scmp.eq.s32.totalorder %s19, 0
    %p144 = por %p142, %p143
    %p145 = scmp.ne.s32.totalorder %s137, %s139
    %p146 = scmp.eq.s32.totalorder %s24, 1
    %p147 = por %p145, %p146
    %p148 = scmp.ne.s32.totalorder %s139, %s140
    %p149 = scmp.eq.s32.totalorder %s24, 0
    %p150 = por %p148, %p149
    %p151 = scmp.ne.s32.totalorder %s139, %s140
    %p152 = scmp.eq.s32.totalorder %s25, 1
    %p153 = por %p151, %p152
    %p155 = scmp.ne.s32.totalorder %s140, %s154
    %p156 = scmp.eq.s32.totalorder %s25, 0
    %p157 = por %p155, %p156
    %s159 = sadd.s32 %s158, 1
    %p162 = scmp.eq.s32.totalorder %s19, 1
    %p163 = scmp.ne.s32.totalorder %s158, %s160
    %p164 = scmp.eq.s32.totalorder %s19, 0
    %p165 = por %p163, %p164
    %p166 = scmp.ne.s32.totalorder %s158, %s160
    %p167 = scmp.eq.s32.totalorder %s24, 1
    %p168 = por %p166, %p167
    %p169 = scmp.ne.s32.totalorder %s160, %s161
    %p170 = scmp.eq.s32.totalorder %s24, 0
    %p171 = por %p169, %p170
    %p172 = scmp.ne.s32.totalorder %s160, %s161
    %p173 = scmp.eq.s32.totalorder %s25, 1
    %p174 = por %p172, %p173
    %p176 = scmp.ne.s32.totalorder %s161, %s175
    %p177 = scmp.eq.s32.totalorder %s25, 0
    %p178 = por %p176, %p177
    %s180 = sadd.s32 %s179, 1
    %p183 = scmp.eq.s32.totalorder %s19, 1
    %p184 = scmp.ne.s32.totalorder %s179, %s181
    %p185 = scmp.eq.s32.totalorder %s19, 0
    %p186 = por %p184, %p185
    %p187 = scmp.ne.s32.totalorder %s179, %s181
    %p188 = scmp.eq.s32.totalorder %s24, 1
    %p189 = por %p187, %p188
    %p190 = scmp.ne.s32.totalorder %s181, %s182
    %p191 = scmp.eq.s32.totalorder %s24, 0
    %p192 = por %p190, %p191
    %p193 = scmp.ne.s32.totalorder %s181, %s182
    %p194 = scmp.eq.s32.totalorder %s25, 1
    %p195 = por %p193, %p194
    %p197 = scmp.ne.s32.totalorder %s182, %s196
    %p198 = scmp.eq.s32.totalorder %s25, 0
    %p199 = por %p197, %p198
    %s201 = sadd.s32 %s200, 1
    %p204 = scmp.eq.s32.totalorder %s19, 1
    %p205 = scmp.ne.s32.totalorder %s200, %s202
    %p206 = scmp.eq.s32.totalorder %s19, 0
    %p207 = por %p205, %p206
    %p208 = scmp.ne.s32.totalorder %s200, %s202
    %p209 = scmp.eq.s32.totalorder %s24, 1
    %p210 = por %p208, %p209
    %p211 = scmp.ne.s32.totalorder %s202, %s203
    %p212 = scmp.eq.s32.totalorder %s24, 0
    %p213 = por %p211, %p212
    %p214 = scmp.ne.s32.totalorder %s202, %s203
    %p215 = scmp.eq.s32.totalorder %s25, 1
    %p216 = por %p214, %p215
    %p218 = scmp.ne.s32.totalorder %s203, %s217
    %p219 = scmp.eq.s32.totalorder %s25, 0
    %p220 = por %p218, %p219
    %s222 = sadd.s32 %s221, 1
    %p225 = scmp.eq.s32.totalorder %s19, 1
    %p226 = scmp.ne.s32.totalorder %s221, %s223
    %p227 = scmp.eq.s32.totalorder %s19, 0
    %p228 = por %p226, %p227
    %p229 = scmp.ne.s32.totalorder %s221, %s223
    %p230 = scmp.eq.s32.totalorder %s24, 1
    %p231 = por %p229, %p230
    %p232 = scmp.ne.s32.totalorder %s223, %s224
    %p233 = scmp.eq.s32.totalorder %s24, 0
    %p234 = por %p232, %p233
    %p235 = scmp.ne.s32.totalorder %s223, %s224
    %p236 = scmp.eq.s32.totalorder %s25, 1
    %p237 = por %p235, %p236
    %p239 = scmp.ne.s32.totalorder %s224, %s238
    %p240 = scmp.eq.s32.totalorder %s25, 0
    %p241 = por %p239, %p240
    %s243 = sadd.s32 %s242, 1
    %p246 = scmp.eq.s32.totalorder %s19, 1
    %p247 = scmp.ne.s32.totalorder %s242, %s244
    %p248 = scmp.eq.s32.totalorder %s19, 0
    %p249 = por %p247, %p248
    %p250 = scmp.ne.s32.totalorder %s242, %s244
    %p251 = scmp.eq.s32.totalorder %s24, 1
    %p252 = por %p250, %p251
    %p253 = scmp.ne.s32.totalorder %s244, %s245
    %p254 = scmp.eq.s32.totalorder %s24, 0
    %p255 = por %p253, %p254
    %p256 = scmp.ne.s32.totalorder %s244, %s245
    %p257 = scmp.eq.s32.totalorder %s25, 1
    %p258 = por %p256, %p257
    %p260 = scmp.ne.s32.totalorder %s245, %s259
    %p261 = scmp.eq.s32.totalorder %s25, 0
    %p262 = por %p260, %p261
    %s263 = ssub.s32 %s19, %s26
    %p264 = scmp.eq.s32.totalorder %s263, 0
    %s266 = sadd.s32 %s265, 1
    %s267 = scalar_select %p264, %s265, %s266
    %p270 = pneg %p264
    %p271 = scmp.eq.s32.totalorder %s19, 1
    %p272 = por %p270, %p271
    %p273 = scmp.ne.s32.totalorder %s265, %s268
    %p274 = scmp.eq.s32.totalorder %s19, 0
    %p275 = por %p273, %p274
    %p276 = scmp.ne.s32.totalorder %s265, %s268
    %p277 = scmp.eq.s32.totalorder %s24, 1
    %p278 = por %p276, %p277
    %p279 = scmp.ne.s32.totalorder %s268, %s269
    %p280 = scmp.eq.s32.totalorder %s24, 0
    %p281 = por %p279, %p280
    %p282 = scmp.ne.s32.totalorder %s268, %s269
    %p283 = scmp.eq.s32.totalorder %s25, 1
    %p284 = por %p282, %p283
    %p286 = scmp.ne.s32.totalorder %s269, %s285
    %p287 = scmp.eq.s32.totalorder %s25, 0
    %p288 = por %p286, %p287
    %p289 = scmp.le.s32.totalorder 1, %s19
    %p290 = scmp.lt.s32.totalorder %s19, 3
    %p291 = pnand %p289, %p290
    %p292 = pneg %p291
    // Predicated region
    $region9: #{forward.1} parent=5 // pred_check
      _
    $region10: #{forward.1} parent=5 // pred_check_branch
      %294 = sbr.rel (%p291) target = $region12
    $region11: #{forward.1} parent=5 // pred_region
      %s295 = ssub.s32 %s19, 1
      // Predicated region
      $region13: #{forward.1} parent=11 // pred_check
        %p296 = pneg %p66
      $region14: #{forward.1} parent=11 // pred_check_branch
        %298 = sbr.rel (%p296) target = $region16
      $region15: #{forward.1} parent=11 // pred_region
        _
      $region16: #{forward.1} parent=11 // pred_fallthru
        _
      // Predicated region
      $region17: #{forward.1} parent=11 // pred_check
        %p299 = pneg %p87
      $region18: #{forward.1} parent=11 // pred_check_branch
        %301 = sbr.rel (%p299) target = $region20
      $region19: #{forward.1} parent=11 // pred_region
        _
      $region20: #{forward.1} parent=11 // pred_fallthru
        _
      // Predicated region
      $region21: #{forward.1} parent=11 // pred_check
        %p302 = pneg %p108
      $region22: #{forward.1} parent=11 // pred_check_branch
        %304 = sbr.rel (%p302) target = $region24
      $region23: #{forward.1} parent=11 // pred_region
        _
      $region24: #{forward.1} parent=11 // pred_fallthru
        _
      // Predicated region
      $region25: #{forward.1} parent=11 // pred_check
        %p305 = pneg %p129
      $region26: #{forward.1} parent=11 // pred_check_branch
        %307 = sbr.rel (%p305) target = $region28
      $region27: #{forward.1} parent=11 // pred_region
        _
      $region28: #{forward.1} parent=11 // pred_fallthru
        _
      // Predicated region
      $region29: #{forward.1} parent=11 // pred_check
        %p308 = pneg %p150
      $region30: #{forward.1} parent=11 // pred_check_branch
        %310 = sbr.rel (%p308) target = $region32
      $region31: #{forward.1} parent=11 // pred_region
        _
      $region32: #{forward.1} parent=11 // pred_fallthru
        _
      // Predicated region
      $region33: #{forward.1} parent=11 // pred_check
        %p311 = pneg %p171
      $region34: #{forward.1} parent=11 // pred_check_branch
        %313 = sbr.rel (%p311) target = $region36
      $region35: #{forward.1} parent=11 // pred_region
        _
      $region36: #{forward.1} parent=11 // pred_fallthru
        _
      // Predicated region
      $region37: #{forward.1} parent=11 // pred_check
        %p314 = pneg %p192
      $region38: #{forward.1} parent=11 // pred_check_branch
        %316 = sbr.rel (%p314) target = $region40
      $region39: #{forward.1} parent=11 // pred_region
        _
      $region40: #{forward.1} parent=11 // pred_fallthru
        _
      // Predicated region
      $region41: #{forward.1} parent=11 // pred_check
        %p317 = pneg %p213
      $region42: #{forward.1} parent=11 // pred_check_branch
        %319 = sbr.rel (%p317) target = $region44
      $region43: #{forward.1} parent=11 // pred_region
        _
      $region44: #{forward.1} parent=11 // pred_fallthru
        _
      // Predicated region
      $region45: #{forward.1} parent=11 // pred_check
        %p320 = pneg %p234
      $region46: #{forward.1} parent=11 // pred_check_branch
        %322 = sbr.rel (%p320) target = $region48
      $region47: #{forward.1} parent=11 // pred_region
        _
      $region48: #{forward.1} parent=11 // pred_fallthru
        _
      // Predicated region
      $region49: #{forward.1} parent=11 // pred_check
        %p323 = pneg %p255
      $region50: #{forward.1} parent=11 // pred_check_branch
        %325 = sbr.rel (%p323) target = $region52
      $region51: #{forward.1} parent=11 // pred_region
        _
      $region52: #{forward.1} parent=11 // pred_fallthru
        _
    $region12: #{forward.1} parent=5 // pred_fallthru
      _
    %p326 = scmp.lt.s32.totalorder %s19, 2
    // Predicated region
    $region53: #{forward.1} parent=5 // pred_check
      %p327 = pneg %p326
    $region54: #{forward.1} parent=5 // pred_check_branch
      %329 = sbr.rel (%p327) target = $region56
    $region55: #{forward.1} parent=5 // pred_region
      // Predicated region
      $region57: #{forward.1} parent=55 // pred_check
        %p330 = pneg %p39
      $region58: #{forward.1} parent=55 // pred_check_branch
        %332 = sbr.rel (%p330) target = $region60
      $region59: #{forward.1} parent=55 // pred_region
        %p333 = scmp.lt.s32.totalorder %s19, 1
        %s334 = scalar_select %p333, %s19, 1
        %s335 = smul.addr %s334, 73
        %s336 = smul.addr %s335, 4
        %s337 = scalar_lea.vmem %s0, %s336
      $region60: #{forward.1} parent=55 // pred_fallthru
        _
    $region56: #{forward.1} parent=5 // pred_fallthru
      _
    %p338 = scmp.le.s32.totalorder 1, %s19
    %p339 = scmp.lt.s32.totalorder %s19, 3
    %p340 = pnand %p338, %p339
    %p341 = pneg %p340
    // Predicated region
    $region61: #{forward.1} parent=5 // pred_check
      _
    $region62: #{forward.1} parent=5 // pred_check_branch
      %343 = sbr.rel (%p340) target = $region64
    $region63: #{forward.1} parent=5 // pred_region
      %s344 = ssub.s32 %s19, 1
      %p345 = scmp.lt.s32.totalorder %s24, 1
      %s346 = scalar_select %p345, %s24, 1
      %s347 = smul.addr %s346, 73
      %s348 = smul.addr %s347, 4
      %s349 = scalar_lea.vmem %s0, %s348
      %p350 = pneg %p45
      %p351 = pneg %p42
      %p352 = pneg %p66
      %p353 = pneg %p63
      %p354 = pneg %p87
      %p355 = pneg %p84
      %p356 = pneg %p108
      %p357 = pneg %p105
      %p358 = pneg %p129
      %p359 = pneg %p126
      %p360 = pneg %p150
      %p361 = pneg %p147
      %p362 = pneg %p171
      %p363 = pneg %p168
      %p364 = pneg %p192
      %p365 = pneg %p189
      %p366 = pneg %p213
      %p367 = pneg %p210
      %p368 = pneg %p234
      %p369 = pneg %p231
      %p370 = pneg %p255
      %p371 = pneg %p252
      %p372 = pneg %p281
      %p373 = pneg %p278
      %p374 = scmp.lt.s32.totalorder %s24, 1
      %s375 = scalar_select %p374, %s24, 1
      %s376 = scalar_lea.vmem %s11, %s375
      %p377 = scmp.lt.s32.totalorder %s24, 1
      %s378 = scalar_select %p377, %s24, 1
      %s379 = smul.addr %s378, 73
      %s380 = smul.addr %s379, 4
      %s381 = scalar_lea.vmem %s0, %s380
      %p382 = scmp.lt.s32.totalorder %s24, 1
      %s383 = scalar_select %p382, %s24, 1
      %s384 = scalar_lea.vmem %s11, %s383
      %v386 = vld [vmem:[%s381] sm:$0xf]
      %v387 = vld [vmem:[%s381 + $0x4] sm:$0xf]
      %v388 = vld [vmem:[%s381 + $0x8] sm:$0xf]
      %v389 = vld [vmem:[%s381 + $0xc] sm:$0xf]
      %v390 = vld [vmem:[%s381 + $0x10] sm:$0xf]
      %v391 = vld [vmem:[%s381 + $0x14] sm:$0xf]
      %v392 = vld [vmem:[%s381 + $0x18] sm:$0xf]
      %v393 = vld [vmem:[%s381 + $0x1c] sm:$0xf]
      %v394 = vld [vmem:[%s381 + $0x20] sm:$0xf]
      %v395 = vld [vmem:[%s381 + $0x24] sm:$0xf]
      %v396 = vld [vmem:[%s381 + $0x28] sm:$0xf]
      %v397 = vld [vmem:[%s381 + $0x2c] sm:$0xf]
      %v398 = vld [vmem:[%s381 + $0x30] sm:$0xf]
      %v399 = vld [vmem:[%s381 + $0x34] sm:$0xf]
      %v400 = vld [vmem:[%s381 + $0x38] sm:$0xf]
      %v401 = vld [vmem:[%s381 + $0x3c] sm:$0xf]
      %v402 = vld [vmem:[%s381 + $0x40] sm:$0xf]
      %v403 = vld [vmem:[%s381 + $0x44] sm:$0xf]
      %v404 = vld [vmem:[%s381 + $0x48] sm:$0xf]
      %v405 = vld [vmem:[%s381 + $0x4c] sm:$0xf]
      %v406 = vld [vmem:[%s381 + $0x50] sm:$0xf]
      %v407 = vld [vmem:[%s381 + $0x54] sm:$0xf]
      %v408 = vld [vmem:[%s381 + $0x58] sm:$0xf]
      %v409 = vld [vmem:[%s381 + $0x5c] sm:$0xf]
      %v410 = vld [vmem:[%s381 + $0x60] sm:$0xf]
      %v411 = vld [vmem:[%s381 + $0x64] sm:$0xf]
      %v412 = vld [vmem:[%s381 + $0x68] sm:$0xf]
      %v413 = vld [vmem:[%s381 + $0x6c] sm:$0xf]
      %v414 = vld [vmem:[%s381 + $0x70] sm:$0xf]
      %v415 = vld [vmem:[%s381 + $0x74] sm:$0xf]
      %v416 = vld [vmem:[%s381 + $0x78] sm:$0xf]
      %v417 = vld [vmem:[%s381 + $0x7c] sm:$0xf]
      %v418 = vld [vmem:[%s381 + $0x80] sm:$0xf]
      %v419 = vld [vmem:[%s381 + $0x84] sm:$0xf]
      %v420 = vld [vmem:[%s381 + $0x88] sm:$0xf]
      %v421 = vld [vmem:[%s381 + $0x8c] sm:$0xf]
      %v422 = vld [vmem:[%s381 + $0x90] sm:$0xf]
      %v423 = vld [vmem:[%s381 + $0x94] sm:$0xf]
      %v424 = vld [vmem:[%s381 + $0x98] sm:$0xf]
      %v425 = vld [vmem:[%s381 + $0x9c] sm:$0xf]
      %v426 = vld [vmem:[%s381 + $0xa0] sm:$0xf]
      %v427 = vld [vmem:[%s381 + $0xa4] sm:$0xf]
      %v428 = vld [vmem:[%s381 + $0xa8] sm:$0xf]
      %v429 = vld [vmem:[%s381 + $0xac] sm:$0xf]
      %v430 = vld [vmem:[%s381 + $0xb0] sm:$0xf]
      %v431 = vld [vmem:[%s381 + $0xb4] sm:$0xf]
      %v432 = vld [vmem:[%s381 + $0xb8] sm:$0xf]
      %v433 = vld [vmem:[%s381 + $0xbc] sm:$0xf]
      %v434 = vld [vmem:[%s381 + $0xc0] sm:$0xf]
      %v435 = vld [vmem:[%s381 + $0xc4] sm:$0xf]
      %v436 = vld [vmem:[%s381 + $0xc8] sm:$0xf]
      %v437 = vld [vmem:[%s381 + $0xcc] sm:$0xf]
      %v438 = vld [vmem:[%s381 + $0xd0] sm:$0xf]
      %v439 = vld [vmem:[%s381 + $0xd4] sm:$0xf]
      %v440 = vld [vmem:[%s381 + $0xd8] sm:$0xf]
      %v441 = vld [vmem:[%s381 + $0xdc] sm:$0xf]
      %v442 = vld [vmem:[%s381 + $0xe0] sm:$0xf]
      %v443 = vld [vmem:[%s381 + $0xe4] sm:$0xf]
      %v444 = vld [vmem:[%s381 + $0xe8] sm:$0xf]
      %v445 = vld [vmem:[%s381 + $0xec] sm:$0xf]
      %v446 = vld [vmem:[%s381 + $0xf0] sm:$0xf]
      %v447 = vld [vmem:[%s381 + $0xf4] sm:$0xf]
      %v448 = vld [vmem:[%s381 + $0xf8] sm:$0xf]
      %v449 = vld [vmem:[%s381 + $0xfc] sm:$0xf]
      %v450 = vld [vmem:[%s381 + $0x100] sm:$0xf]
      %v451 = vld [vmem:[%s381 + $0x104] sm:$0xf]
      %v452 = vld [vmem:[%s381 + $0x108] sm:$0xf]
      %v453 = vld [vmem:[%s381 + $0x10c] sm:$0xf]
      %v454 = vld [vmem:[%s381 + $0x110] sm:$0xf]
      %v455 = vld [vmem:[%s381 + $0x114] sm:$0xf]
      %v456 = vld [vmem:[%s381 + $0x118] sm:$0xf]
      %v457 = vld [vmem:[%s381 + $0x11c] sm:$0xf]
      %v458 = vld [vmem:[%s381 + $0x120] sm:$0xf]
      %v459 = vld [vmem:[%s1] sm:$0xf]
      %v460 = vld [vmem:[%s1 + $0x4] sm:$0xf]
      %v461 = vld [vmem:[%s1 + $0x8] sm:$0xf]
      %v462 = vld [vmem:[%s1 + $0xc] sm:$0xf]
      %v463 = vld [vmem:[%s1 + $0x10] sm:$0xf]
      %v464 = vld [vmem:[%s1 + $0x14] sm:$0xf]
      %v465 = vld [vmem:[%s1 + $0x18] sm:$0xf]
      %v466 = vld [vmem:[%s1 + $0x1c] sm:$0xf]
      %v467 = vld [vmem:[%s1 + $0x20] sm:$0xf]
      %v468 = vld [vmem:[%s1 + $0x24] sm:$0xf]
      %v469 = vld [vmem:[%s2] sm:$0x1]
      %v471 = vlaneseq
      %v472 = vshrl.u32 %v471, 7
      %v473 = vsub.s32 0, %v472
      %v474 = vrot.slane %v469, %v473
      %v549 = vunpack.c.l.b16 %v386
      %v550 = vunpack.c.l.b16 %v387
      %v551 = vunpack.c.l.b16 %v388
      %v552 = vunpack.c.l.b16 %v389
      %v553 = vunpack.c.l.b16 %v390
      %v554 = vunpack.c.l.b16 %v391
      %v555 = vunpack.c.l.b16 %v392
      %v556 = vunpack.c.l.b16 %v393
      %v557 = vunpack.c.l.b16 %v394
      %v558 = vunpack.c.l.b16 %v395
      %v559 = vunpack.c.l.b16 %v396
      %v560 = vunpack.c.l.b16 %v397
      %v561 = vunpack.c.l.b16 %v398
      %v562 = vunpack.c.l.b16 %v399
      %v563 = vunpack.c.l.b16 %v400
      %v564 = vunpack.c.l.b16 %v401
      %v565 = vunpack.c.l.b16 %v402
      %v566 = vunpack.c.l.b16 %v403
      %v567 = vunpack.c.l.b16 %v404
      %v568 = vunpack.c.l.b16 %v405
      %v569 = vunpack.c.l.b16 %v406
      %v570 = vunpack.c.l.b16 %v407
      %v571 = vunpack.c.l.b16 %v408
      %v572 = vunpack.c.l.b16 %v409
      %v573 = vunpack.c.l.b16 %v410
      %v574 = vunpack.c.l.b16 %v411
      %v575 = vunpack.c.l.b16 %v412
      %v576 = vunpack.c.l.b16 %v413
      %v577 = vunpack.c.l.b16 %v414
      %v578 = vunpack.c.l.b16 %v415
      %v579 = vunpack.c.l.b16 %v416
      %v580 = vunpack.c.l.b16 %v417
      %v581 = vunpack.c.l.b16 %v418
      %v582 = vunpack.c.l.b16 %v419
      %v583 = vunpack.c.l.b16 %v420
      %v584 = vunpack.c.l.b16 %v421
      %v585 = vunpack.c.l.b16 %v422
      %v586 = vunpack.c.l.b16 %v423
      %v587 = vunpack.c.l.b16 %v424
      %v588 = vunpack.c.l.b16 %v425
      %v589 = vunpack.c.l.b16 %v426
      %v590 = vunpack.c.l.b16 %v427
      %v591 = vunpack.c.l.b16 %v428
      %v592 = vunpack.c.l.b16 %v429
      %v593 = vunpack.c.l.b16 %v430
      %v594 = vunpack.c.l.b16 %v431
      %v595 = vunpack.c.l.b16 %v432
      %v596 = vunpack.c.l.b16 %v433
      %v597 = vunpack.c.l.b16 %v434
      %v598 = vunpack.c.l.b16 %v435
      %v599 = vunpack.c.l.b16 %v436
      %v600 = vunpack.c.l.b16 %v437
      %v601 = vunpack.c.l.b16 %v438
      %v602 = vunpack.c.l.b16 %v439
      %v603 = vunpack.c.l.b16 %v440
      %v604 = vunpack.c.l.b16 %v441
      %v605 = vunpack.c.l.b16 %v442
      %v606 = vunpack.c.l.b16 %v443
      %v607 = vunpack.c.l.b16 %v444
      %v608 = vunpack.c.l.b16 %v445
      %v609 = vunpack.c.l.b16 %v446
      %v610 = vunpack.c.l.b16 %v447
      %v611 = vunpack.c.l.b16 %v448
      %v612 = vunpack.c.l.b16 %v449
      %v613 = vunpack.c.l.b16 %v450
      %v614 = vunpack.c.l.b16 %v451
      %v615 = vunpack.c.l.b16 %v452
      %v616 = vunpack.c.l.b16 %v453
      %v617 = vunpack.c.l.b16 %v454
      %v618 = vunpack.c.l.b16 %v455
      %v619 = vunpack.c.l.b16 %v456
      %v620 = vunpack.c.l.b16 %v457
      %v621 = vunpack.c.l.b16 %v458
      %v622 = vpack.c.b16 %v550, %v549
      %v623 = vpack.c.b16 %v552, %v551
      %v624 = vpack.c.b16 %v554, %v553
      %v625 = vpack.c.b16 %v556, %v555
      %v626 = vpack.c.b16 %v558, %v557
      %v627 = vpack.c.b16 %v560, %v559
      %v628 = vpack.c.b16 %v562, %v561
      %v629 = vpack.c.b16 %v564, %v563
      %v630 = vpack.c.b16 %v566, %v565
      %v631 = vpack.c.b16 %v568, %v567
      %v632 = vpack.c.b16 %v570, %v569
      %v633 = vpack.c.b16 %v572, %v571
      %v634 = vpack.c.b16 %v574, %v573
      %v635 = vpack.c.b16 %v576, %v575
      %v636 = vpack.c.b16 %v578, %v577
      %v637 = vpack.c.b16 %v580, %v579
      %v638 = vpack.c.b16 %v582, %v581
      %v639 = vpack.c.b16 %v584, %v583
      %v640 = vpack.c.b16 %v586, %v585
      %v641 = vpack.c.b16 %v588, %v587
      %v642 = vpack.c.b16 %v590, %v589
      %v643 = vpack.c.b16 %v592, %v591
      %v644 = vpack.c.b16 %v594, %v593
      %v645 = vpack.c.b16 %v596, %v595
      %v646 = vpack.c.b16 %v598, %v597
      %v647 = vpack.c.b16 %v600, %v599
      %v648 = vpack.c.b16 %v602, %v601
      %v649 = vpack.c.b16 %v604, %v603
      %v650 = vpack.c.b16 %v606, %v605
      %v651 = vpack.c.b16 %v608, %v607
      %v652 = vpack.c.b16 %v610, %v609
      %v653 = vpack.c.b16 %v612, %v611
      %v654 = vpack.c.b16 %v614, %v613
      %v655 = vpack.c.b16 %v616, %v615
      %v656 = vpack.c.b16 %v618, %v617
      %v657 = vpack.c.b16 %v620, %v619
      %v658 = vpack.c.b16 %v621, %v621
      %v669 = vunpack.c.l.b16 %v459
      %v670 = vunpack.c.l.b16 %v460
      %v671 = vunpack.c.l.b16 %v461
      %v672 = vunpack.c.l.b16 %v462
      %v673 = vunpack.c.l.b16 %v463
      %v674 = vunpack.c.l.b16 %v464
      %v675 = vunpack.c.l.b16 %v465
      %v676 = vunpack.c.l.b16 %v466
      %v677 = vunpack.c.l.b16 %v467
      %v678 = vunpack.c.l.b16 %v468
      %v679 = vpack.c.b16 %v670, %v669
      %v680 = vpack.c.b16 %v672, %v671
      %v681 = vpack.c.b16 %v674, %v673
      %v682 = vpack.c.b16 %v676, %v675
      %v683 = vpack.c.b16 %v678, %v677
      %vm689 = vcmask 654336
      %v691 = vsel %vm689, %v622, 0
      %v694 = vsel %vm689, %v623, 0
      %v697 = vsel %vm689, %v624, 0
      %v700 = vsel %vm689, %v625, 0
      %v703 = vsel %vm689, %v626, 0
      %v706 = vsel %vm689, %v627, 0
      %v709 = vsel %vm689, %v628, 0
      %v712 = vsel %vm689, %v629, 0
      %v715 = vsel %vm689, %v630, 0
      %v718 = vsel %vm689, %v631, 0
      %v721 = vsel %vm689, %v632, 0
      %v724 = vsel %vm689, %v633, 0
      %v727 = vsel %vm689, %v634, 0
      %v730 = vsel %vm689, %v635, 0
      %v733 = vsel %vm689, %v636, 0
      %v736 = vsel %vm689, %v637, 0
      %v739 = vsel %vm689, %v638, 0
      %v742 = vsel %vm689, %v639, 0
      %v745 = vsel %vm689, %v640, 0
      %v748 = vsel %vm689, %v641, 0
      %v751 = vsel %vm689, %v642, 0
      %v754 = vsel %vm689, %v643, 0
      %v757 = vsel %vm689, %v644, 0
      %v760 = vsel %vm689, %v645, 0
      %v763 = vsel %vm689, %v646, 0
      %v766 = vsel %vm689, %v647, 0
      %v769 = vsel %vm689, %v648, 0
      %v772 = vsel %vm689, %v649, 0
      %v775 = vsel %vm689, %v650, 0
      %v778 = vsel %vm689, %v651, 0
      %v781 = vsel %vm689, %v652, 0
      %v784 = vsel %vm689, %v653, 0
      %v787 = vsel %vm689, %v654, 0
      %v790 = vsel %vm689, %v655, 0
      %v793 = vsel %vm689, %v656, 0
      %v796 = vsel %vm689, %v657, 0
      %v799 = vsel %vm689, %v658, 0
      %801 = vmatprep.subr.bf16.mxu0 0
      %802 = vmatpush1.bf16.msra.mxu0 %v679
      %803 = vmatprep.subr.bf16.mxu0 0
      %804 = vmatpush1.bf16.msra.mxu0 %v680
      %805 = vmatprep.subr.bf16.mxu0 0
      %806 = vmatpush1.bf16.msra.mxu0 %v681
      %807 = vmatprep.subr.bf16.mxu0 0
      %808 = vmatpush1.bf16.msra.mxu0 %v682
      %809 = vmatprep.subr.bf16.mxu0 0
      %810 = vmatpush1.bf16.msra.mxu0 %v683
      %811 = vmatprep.subr.bf16.mxu0 0
      %812 = vmatpush1.bf16.msra.mxu0 0
      %813 = vmatprep.subr.bf16.mxu0 0
      %814 = vmatpush1.bf16.msra.mxu0 0
      %815 = vmatprep.subr.bf16.mxu0 0
      %816 = vmatpush1.bf16.msra.mxu0 0
      %817 = vmatprep.subr.bf16.mxu0 0
      %818 = vmatpush1.bf16.msra.mxu0 0
      %819 = vmatprep.subr.bf16.mxu0 0
      %820 = vmatpush1.bf16.msra.mxu0 0
      %821 = vmatprep.subr.bf16.mxu0 0
      %822 = vmatpush1.bf16.msra.mxu0 0
      %823 = vmatprep.subr.bf16.mxu0 0
      %824 = vmatpush1.bf16.msra.mxu0 0
      %825 = vmatprep.subr.bf16.mxu0 0
      %826 = vmatpush1.bf16.msra.mxu0 0
      %827 = vmatprep.subr.bf16.mxu0 0
      %828 = vmatpush1.bf16.msra.mxu0 0
      %829 = vmatprep.subr.bf16.mxu0 0
      %830 = vmatpush1.bf16.msra.mxu0 0
      %831 = vmatprep.subr.bf16.mxu0 0
      %832 = vmatpush1.bf16.msra.mxu0 0
      %833 = vmatprep.mubr.bf16.mxu0 0
      %834 = vmatmul.mubr.bf16.gmra.mrb[0].mxu0 %v691
      %v835 = vpop.f32.mrb[0].mxu0
      %v836 = vadd.f32 %v474, %v835
      %v837 = vpop.f32.mrb[0].mxu0
      %v838 = vpop.f32.mrb[0].mxu0
      %v839 = vadd.f32 %v474, %v838
      %v840 = vpop.f32.mrb[0].mxu0
      %841 = vmatprep.mubr.bf16.mxu0 0
      %842 = vmatmul.mubr.bf16.gmra.mrb[0].mxu0 %v694
      %v843 = vpop.f32.mrb[0].mxu0
      %v844 = vadd.f32 %v474, %v843
      %v845 = vpop.f32.mrb[0].mxu0
      %v846 = vpop.f32.mrb[0].mxu0
      %v847 = vadd.f32 %v474, %v846
      %v848 = vpop.f32.mrb[0].mxu0
      %849 = vmatprep.mubr.bf16.mxu0 0
      %850 = vmatmul.mubr.bf16.gmra.mrb[0].mxu0 %v697
      %v851 = vpop.f32.mrb[0].mxu0
      %v852 = vadd.f32 %v474, %v851
      %v853 = vpop.f32.mrb[0].mxu0
      %v854 = vpop.f32.mrb[0].mxu0
      %v855 = vadd.f32 %v474, %v854
      %v856 = vpop.f32.mrb[0].mxu0
      %857 = vmatprep.mubr.bf16.mxu0 0
      %858 = vmatmul.mubr.bf16.gmra.mrb[0].mxu0 %v700
      %v859 = vpop.f32.mrb[0].mxu0
      %v860 = vadd.f32 %v474, %v859
      %v861 = vpop.f32.mrb[0].mxu0
      %v862 = vpop.f32.mrb[0].mxu0
      %v863 = vadd.f32 %v474, %v862
      %v864 = vpop.f32.mrb[0].mxu0
      %865 = vmatprep.mubr.bf16.mxu0 0
      %866 = vmatmul.mubr.bf16.gmra.mrb[0].mxu0 %v703
      %v867 = vpop.f32.mrb[0].mxu0
      %v868 = vadd.f32 %v474, %v867
      %v869 = vpop.f32.mrb[0].mxu0
      %v870 = vpop.f32.mrb[0].mxu0
      %v871 = vadd.f32 %v474, %v870
      %v872 = vpop.f32.mrb[0].mxu0
      %873 = vmatprep.mubr.bf16.mxu0 0
      %874 = vmatmul.mubr.bf16.gmra.mrb[0].mxu0 %v706
      %v875 = vpop.f32.mrb[0].mxu0
      %v876 = vadd.f32 %v474, %v875
      %v877 = vpop.f32.mrb[0].mxu0
      %v878 = vpop.f32.mrb[0].mxu0
      %v879 = vadd.f32 %v474, %v878
      %v880 = vpop.f32.mrb[0].mxu0
      %881 = vmatprep.mubr.bf16.mxu0 0
      %882 = vmatmul.mubr.bf16.gmra.mrb[0].mxu0 %v709
      %v883 = vpop.f32.mrb[0].mxu0
      %v884 = vadd.f32 %v474, %v883
      %v885 = vpop.f32.mrb[0].mxu0
      %v886 = vpop.f32.mrb[0].mxu0
      %v887 = vadd.f32 %v474, %v886
      %v888 = vpop.f32.mrb[0].mxu0
      %889 = vmatprep.mubr.bf16.mxu0 0
      %890 = vmatmul.mubr.bf16.gmra.mrb[0].mxu0 %v712
      %v891 = vpop.f32.mrb[0].mxu0
      %v892 = vadd.f32 %v474, %v891
      %v893 = vpop.f32.mrb[0].mxu0
      %v894 = vpop.f32.mrb[0].mxu0
      %v895 = vadd.f32 %v474, %v894
      %v896 = vpop.f32.mrb[0].mxu0
      %897 = vmatprep.mubr.bf16.mxu0 0
      %898 = vmatmul.mubr.bf16.gmra.mrb[0].mxu0 %v715
      %v899 = vpop.f32.mrb[0].mxu0
      %v900 = vadd.f32 %v474, %v899
      %v901 = vpop.f32.mrb[0].mxu0
      %v902 = vpop.f32.mrb[0].mxu0
      %v903 = vadd.f32 %v474, %v902
      %v904 = vpop.f32.mrb[0].mxu0
      %905 = vmatprep.mubr.bf16.mxu0 0
      %906 = vmatmul.mubr.bf16.gmra.mrb[0].mxu0 %v718
      %v907 = vpop.f32.mrb[0].mxu0
      %v908 = vadd.f32 %v474, %v907
      %v909 = vpop.f32.mrb[0].mxu0
      %v910 = vpop.f32.mrb[0].mxu0
      %v911 = vadd.f32 %v474, %v910
      %v912 = vpop.f32.mrb[0].mxu0
      %913 = vmatprep.mubr.bf16.mxu0 0
      %914 = vmatmul.mubr.bf16.gmra.mrb[0].mxu0 %v721
      %v915 = vpop.f32.mrb[0].mxu0
      %v916 = vadd.f32 %v474, %v915
      %v917 = vpop.f32.mrb[0].mxu0
      %v918 = vpop.f32.mrb[0].mxu0
      %v919 = vadd.f32 %v474, %v918
      %v920 = vpop.f32.mrb[0].mxu0
      %921 = vmatprep.mubr.bf16.mxu0 0
      %922 = vmatmul.mubr.bf16.gmra.mrb[0].mxu0 %v724
      %v923 = vpop.f32.mrb[0].mxu0
      %v924 = vadd.f32 %v474, %v923
      %v925 = vpop.f32.mrb[0].mxu0
      %v926 = vpop.f32.mrb[0].mxu0
      %v927 = vadd.f32 %v474, %v926
      %v928 = vpop.f32.mrb[0].mxu0
      %929 = vmatprep.mubr.bf16.mxu0 0
      %930 = vmatmul.mubr.bf16.gmra.mrb[0].mxu0 %v727
      %v931 = vpop.f32.mrb[0].mxu0
      %v932 = vadd.f32 %v474, %v931
      %v933 = vpop.f32.mrb[0].mxu0
      %v934 = vpop.f32.mrb[0].mxu0
      %v935 = vadd.f32 %v474, %v934
      %v936 = vpop.f32.mrb[0].mxu0
      %937 = vmatprep.mubr.bf16.mxu0 0
      %938 = vmatmul.mubr.bf16.gmra.mrb[0].mxu0 %v730
      %v939 = vpop.f32.mrb[0].mxu0
      %v940 = vadd.f32 %v474, %v939
      %v941 = vpop.f32.mrb[0].mxu0
      %v942 = vpop.f32.mrb[0].mxu0
      %v943 = vadd.f32 %v474, %v942
      %v944 = vpop.f32.mrb[0].mxu0
      %945 = vmatprep.mubr.bf16.mxu0 0
      %946 = vmatmul.mubr.bf16.gmra.mrb[0].mxu0 %v733
      %v947 = vpop.f32.mrb[0].mxu0
      %v948 = vadd.f32 %v474, %v947
      %v949 = vpop.f32.mrb[0].mxu0
      %v950 = vpop.f32.mrb[0].mxu0
      %v951 = vadd.f32 %v474, %v950
      %v952 = vpop.f32.mrb[0].mxu0
      %953 = vmatprep.mubr.bf16.mxu0 0
      %954 = vmatmul.mubr.bf16.gmra.mrb[0].mxu0 %v736
      %v955 = vpop.f32.mrb[0].mxu0
      %v956 = vadd.f32 %v474, %v955
      %v957 = vpop.f32.mrb[0].mxu0
      %v958 = vpop.f32.mrb[0].mxu0
      %v959 = vadd.f32 %v474, %v958
      %v960 = vpop.f32.mrb[0].mxu0
      %961 = vmatprep.mubr.bf16.mxu0 0
      %962 = vmatmul.mubr.bf16.gmra.mrb[0].mxu0 %v739
      %v963 = vpop.f32.mrb[0].mxu0
      %v964 = vadd.f32 %v474, %v963
      %v965 = vpop.f32.mrb[0].mxu0
      %v966 = vpop.f32.mrb[0].mxu0
      %v967 = vadd.f32 %v474, %v966
      %v968 = vpop.f32.mrb[0].mxu0
      %969 = vmatprep.mubr.bf16.mxu0 0
      %970 = vmatmul.mubr.bf16.gmra.mrb[0].mxu0 %v742
      %v971 = vpop.f32.mrb[0].mxu0
      %v972 = vadd.f32 %v474, %v971
      %v973 = vpop.f32.mrb[0].mxu0
      %v974 = vpop.f32.mrb[0].mxu0
      %v975 = vadd.f32 %v474, %v974
      %v976 = vpop.f32.mrb[0].mxu0
      %977 = vmatprep.mubr.bf16.mxu0 0
      %978 = vmatmul.mubr.bf16.gmra.mrb[0].mxu0 %v745
      %v979 = vpop.f32.mrb[0].mxu0
      %v980 = vadd.f32 %v474, %v979
      %v981 = vpop.f32.mrb[0].mxu0
      %v982 = vpop.f32.mrb[0].mxu0
      %v983 = vadd.f32 %v474, %v982
      %v984 = vpop.f32.mrb[0].mxu0
      %985 = vmatprep.mubr.bf16.mxu0 0
      %986 = vmatmul.mubr.bf16.gmra.mrb[0].mxu0 %v748
      %v987 = vpop.f32.mrb[0].mxu0
      %v988 = vadd.f32 %v474, %v987
      %v989 = vpop.f32.mrb[0].mxu0
      %v990 = vpop.f32.mrb[0].mxu0
      %v991 = vadd.f32 %v474, %v990
      %v992 = vpop.f32.mrb[0].mxu0
      %993 = vmatprep.mubr.bf16.mxu0 0
      %994 = vmatmul.mubr.bf16.gmra.mrb[0].mxu0 %v751
      %v995 = vpop.f32.mrb[0].mxu0
      %v996 = vadd.f32 %v474, %v995
      %v997 = vpop.f32.mrb[0].mxu0
      %v998 = vpop.f32.mrb[0].mxu0
      %v999 = vadd.f32 %v474, %v998
      %v1000 = vpop.f32.mrb[0].mxu0
      %1001 = vmatprep.mubr.bf16.mxu0 0
      %1002 = vmatmul.mubr.bf16.gmra.mrb[0].mxu0 %v754
      %v1003 = vpop.f32.mrb[0].mxu0
      %v1004 = vadd.f32 %v474, %v1003
      %v1005 = vpop.f32.mrb[0].mxu0
      %v1006 = vpop.f32.mrb[0].mxu0
      %v1007 = vadd.f32 %v474, %v1006
      %v1008 = vpop.f32.mrb[0].mxu0
      %1009 = vmatprep.mubr.bf16.mxu0 0
      %1010 = vmatmul.mubr.bf16.gmra.mrb[0].mxu0 %v757
      %v1011 = vpop.f32.mrb[0].mxu0
      %v1012 = vadd.f32 %v474, %v1011
      %v1013 = vpop.f32.mrb[0].mxu0
      %v1014 = vpop.f32.mrb[0].mxu0
      %v1015 = vadd.f32 %v474, %v1014
      %v1016 = vpop.f32.mrb[0].mxu0
      %1017 = vmatprep.mubr.bf16.mxu0 0
      %1018 = vmatmul.mubr.bf16.gmra.mrb[0].mxu0 %v760
      %v1019 = vpop.f32.mrb[0].mxu0
      %v1020 = vadd.f32 %v474, %v1019
      %v1021 = vpop.f32.mrb[0].mxu0
      %v1022 = vpop.f32.mrb[0].mxu0
      %v1023 = vadd.f32 %v474, %v1022
      %v1024 = vpop.f32.mrb[0].mxu0
      %1025 = vmatprep.mubr.bf16.mxu0 0
      %1026 = vmatmul.mubr.bf16.gmra.mrb[0].mxu0 %v763
      %v1027 = vpop.f32.mrb[0].mxu0
      %v1028 = vadd.f32 %v474, %v1027
      %v1029 = vpop.f32.mrb[0].mxu0
      %v1030 = vpop.f32.mrb[0].mxu0
      %v1031 = vadd.f32 %v474, %v1030
      %v1032 = vpop.f32.mrb[0].mxu0
      %1033 = vmatprep.mubr.bf16.mxu0 0
      %1034 = vmatmul.mubr.bf16.gmra.mrb[0].mxu0 %v766
      %v1035 = vpop.f32.mrb[0].mxu0
      %v1036 = vadd.f32 %v474, %v1035
      %v1037 = vpop.f32.mrb[0].mxu0
      %v1038 = vpop.f32.mrb[0].mxu0
      %v1039 = vadd.f32 %v474, %v1038
      %v1040 = vpop.f32.mrb[0].mxu0
      %1041 = vmatprep.mubr.bf16.mxu0 0
      %1042 = vmatmul.mubr.bf16.gmra.mrb[0].mxu0 %v769
      %v1043 = vpop.f32.mrb[0].mxu0
      %v1044 = vadd.f32 %v474, %v1043
      %v1045 = vpop.f32.mrb[0].mxu0
      %v1046 = vpop.f32.mrb[0].mxu0
      %v1047 = vadd.f32 %v474, %v1046
      %v1048 = vpop.f32.mrb[0].mxu0
      %1049 = vmatprep.mubr.bf16.mxu0 0
      %1050 = vmatmul.mubr.bf16.gmra.mrb[0].mxu0 %v772
      %v1051 = vpop.f32.mrb[0].mxu0
      %v1052 = vadd.f32 %v474, %v1051
      %v1053 = vpop.f32.mrb[0].mxu0
      %v1054 = vpop.f32.mrb[0].mxu0
      %v1055 = vadd.f32 %v474, %v1054
      %v1056 = vpop.f32.mrb[0].mxu0
      %1057 = vmatprep.mubr.bf16.mxu0 0
      %1058 = vmatmul.mubr.bf16.gmra.mrb[0].mxu0 %v775
      %v1059 = vpop.f32.mrb[0].mxu0
      %v1060 = vadd.f32 %v474, %v1059
      %v1061 = vpop.f32.mrb[0].mxu0
      %v1062 = vpop.f32.mrb[0].mxu0
      %v1063 = vadd.f32 %v474, %v1062
      %v1064 = vpop.f32.mrb[0].mxu0
      %1065 = vmatprep.mubr.bf16.mxu0 0
      %1066 = vmatmul.mubr.bf16.gmra.mrb[0].mxu0 %v778
      %v1067 = vpop.f32.mrb[0].mxu0
      %v1068 = vadd.f32 %v474, %v1067
      %v1069 = vpop.f32.mrb[0].mxu0
      %v1070 = vpop.f32.mrb[0].mxu0
      %v1071 = vadd.f32 %v474, %v1070
      %v1072 = vpop.f32.mrb[0].mxu0
      %1073 = vmatprep.mubr.bf16.mxu0 0
      %1074 = vmatmul.mubr.bf16.gmra.mrb[0].mxu0 %v781
      %v1075 = vpop.f32.mrb[0].mxu0
      %v1076 = vadd.f32 %v474, %v1075
      %v1077 = vpop.f32.mrb[0].mxu0
      %v1078 = vpop.f32.mrb[0].mxu0
      %v1079 = vadd.f32 %v474, %v1078
      %v1080 = vpop.f32.mrb[0].mxu0
      %1081 = vmatprep.mubr.bf16.mxu0 0
      %1082 = vmatmul.mubr.bf16.gmra.mrb[0].mxu0 %v784
      %v1083 = vpop.f32.mrb[0].mxu0
      %v1084 = vadd.f32 %v474, %v1083
      %v1085 = vpop.f32.mrb[0].mxu0
      %v1086 = vpop.f32.mrb[0].mxu0
      %v1087 = vadd.f32 %v474, %v1086
      %v1088 = vpop.f32.mrb[0].mxu0
      %1089 = vmatprep.mubr.bf16.mxu0 0
      %1090 = vmatmul.mubr.bf16.gmra.mrb[0].mxu0 %v787
      %v1091 = vpop.f32.mrb[0].mxu0
      %v1092 = vadd.f32 %v474, %v1091
      %v1093 = vpop.f32.mrb[0].mxu0
      %v1094 = vpop.f32.mrb[0].mxu0
      %v1095 = vadd.f32 %v474, %v1094
      %v1096 = vpop.f32.mrb[0].mxu0
      %1097 = vmatprep.mubr.bf16.mxu0 0
      %1098 = vmatmul.mubr.bf16.gmra.mrb[0].mxu0 %v790
      %v1099 = vpop.f32.mrb[0].mxu0
      %v1100 = vadd.f32 %v474, %v1099
      %v1101 = vpop.f32.mrb[0].mxu0
      %v1102 = vpop.f32.mrb[0].mxu0
      %v1103 = vadd.f32 %v474, %v1102
      %v1104 = vpop.f32.mrb[0].mxu0
      %1105 = vmatprep.mubr.bf16.mxu0 0
      %1106 = vmatmul.mubr.bf16.gmra.mrb[0].mxu0 %v793
      %v1107 = vpop.f32.mrb[0].mxu0
      %v1108 = vadd.f32 %v474, %v1107
      %v1109 = vpop.f32.mrb[0].mxu0
      %v1110 = vpop.f32.mrb[0].mxu0
      %v1111 = vadd.f32 %v474, %v1110
      %v1112 = vpop.f32.mrb[0].mxu0
      %1113 = vmatprep.mubr.bf16.mxu0 0
      %1114 = vmatmul.mubr.bf16.gmra.mrb[0].mxu0 %v796
      %v1115 = vpop.f32.mrb[0].mxu0
      %v1116 = vadd.f32 %v474, %v1115
      %v1117 = vpop.f32.mrb[0].mxu0
      %v1118 = vpop.f32.mrb[0].mxu0
      %v1119 = vadd.f32 %v474, %v1118
      %v1120 = vpop.f32.mrb[0].mxu0
      %1121 = vmatprep.mubr.bf16.mxu0 0
      %1122 = vmatmul.mubr.bf16.gmra.mrb[0].mxu0 %v799
      %v1123 = vpop.f32.mrb[0].mxu0
      %v1124 = vadd.f32 %v474, %v1123
      %v1125 = vpop.f32.mrb[0].mxu0
      %v1126 = vpop.f32.mrb[0].mxu0
      %v1127 = vpop.f32.mrb[0].mxu0
      %1128 = vdwg.mxu0
      %v1129 = vmax.f32 %v836, 0.0
      %v1130 = vmax.f32 %v839, 0.0
      %v1131 = vmax.f32 %v844, 0.0
      %v1132 = vmax.f32 %v847, 0.0
      %v1133 = vmax.f32 %v852, 0.0
      %v1134 = vmax.f32 %v855, 0.0
      %v1135 = vmax.f32 %v860, 0.0
      %v1136 = vmax.f32 %v863, 0.0
      %v1137 = vmax.f32 %v868, 0.0
      %v1138 = vmax.f32 %v871, 0.0
      %v1139 = vmax.f32 %v876, 0.0
      %v1140 = vmax.f32 %v879, 0.0
      %v1141 = vmax.f32 %v884, 0.0
      %v1142 = vmax.f32 %v887, 0.0
      %v1143 = vmax.f32 %v892, 0.0
      %v1144 = vmax.f32 %v895, 0.0
      %v1145 = vmax.f32 %v900, 0.0
      %v1146 = vmax.f32 %v903, 0.0
      %v1147 = vmax.f32 %v908, 0.0
      %v1148 = vmax.f32 %v911, 0.0
      %v1149 = vmax.f32 %v916, 0.0
      %v1150 = vmax.f32 %v919, 0.0
      %v1151 = vmax.f32 %v924, 0.0
      %v1152 = vmax.f32 %v927, 0.0
      %v1153 = vmax.f32 %v932, 0.0
      %v1154 = vmax.f32 %v935, 0.0
      %v1155 = vmax.f32 %v940, 0.0
      %v1156 = vmax.f32 %v943, 0.0
      %v1157 = vmax.f32 %v948, 0.0
      %v1158 = vmax.f32 %v951, 0.0
      %v1159 = vmax.f32 %v956, 0.0
      %v1160 = vmax.f32 %v959, 0.0
      %v1161 = vmax.f32 %v964, 0.0
      %v1162 = vmax.f32 %v967, 0.0
      %v1163 = vmax.f32 %v972, 0.0
      %v1164 = vmax.f32 %v975, 0.0
      %v1165 = vmax.f32 %v980, 0.0
      %v1166 = vmax.f32 %v983, 0.0
      %v1167 = vmax.f32 %v988, 0.0
      %v1168 = vmax.f32 %v991, 0.0
      %v1169 = vmax.f32 %v996, 0.0
      %v1170 = vmax.f32 %v999, 0.0
      %v1171 = vmax.f32 %v1004, 0.0
      %v1172 = vmax.f32 %v1007, 0.0
      %v1173 = vmax.f32 %v1012, 0.0
      %v1174 = vmax.f32 %v1015, 0.0
      %v1175 = vmax.f32 %v1020, 0.0
      %v1176 = vmax.f32 %v1023, 0.0
      %v1177 = vmax.f32 %v1028, 0.0
      %v1178 = vmax.f32 %v1031, 0.0
      %v1179 = vmax.f32 %v1036, 0.0
      %v1180 = vmax.f32 %v1039, 0.0
      %v1181 = vmax.f32 %v1044, 0.0
      %v1182 = vmax.f32 %v1047, 0.0
      %v1183 = vmax.f32 %v1052, 0.0
      %v1184 = vmax.f32 %v1055, 0.0
      %v1185 = vmax.f32 %v1060, 0.0
      %v1186 = vmax.f32 %v1063, 0.0
      %v1187 = vmax.f32 %v1068, 0.0
      %v1188 = vmax.f32 %v1071, 0.0
      %v1189 = vmax.f32 %v1076, 0.0
      %v1190 = vmax.f32 %v1079, 0.0
      %v1191 = vmax.f32 %v1084, 0.0
      %v1192 = vmax.f32 %v1087, 0.0
      %v1193 = vmax.f32 %v1092, 0.0
      %v1194 = vmax.f32 %v1095, 0.0
      %v1195 = vmax.f32 %v1100, 0.0
      %v1196 = vmax.f32 %v1103, 0.0
      %v1197 = vmax.f32 %v1108, 0.0
      %v1198 = vmax.f32 %v1111, 0.0
      %v1199 = vmax.f32 %v1116, 0.0
      %v1200 = vmax.f32 %v1119, 0.0
      %v1201 = vmax.f32 %v1124, 0.0
      %v1274 = vcombine.high %v1129, %v1129
      %v1275 = vcombine.high %v1130, %v1130
      %v1276 = vcombine.high %v1131, %v1131
      %v1277 = vcombine.high %v1132, %v1132
      %v1278 = vcombine.high %v1133, %v1133
      %v1279 = vcombine.high %v1134, %v1134
      %v1280 = vcombine.high %v1135, %v1135
      %v1281 = vcombine.high %v1136, %v1136
      %v1282 = vcombine.high %v1137, %v1137
      %v1283 = vcombine.high %v1138, %v1138
      %v1284 = vcombine.high %v1139, %v1139
      %v1285 = vcombine.high %v1140, %v1140
      %v1286 = vcombine.high %v1141, %v1141
      %v1287 = vcombine.high %v1142, %v1142
      %v1288 = vcombine.high %v1143, %v1143
      %v1289 = vcombine.high %v1144, %v1144
      %v1290 = vcombine.high %v1145, %v1145
      %v1291 = vcombine.high %v1146, %v1146
      %v1292 = vcombine.high %v1147, %v1147
      %v1293 = vcombine.high %v1148, %v1148
      %v1294 = vcombine.high %v1149, %v1149
      %v1295 = vcombine.high %v1150, %v1150
      %v1296 = vcombine.high %v1151, %v1151
      %v1297 = vcombine.high %v1152, %v1152
      %v1298 = vcombine.high %v1153, %v1153
      %v1299 = vcombine.high %v1154, %v1154
      %v1300 = vcombine.high %v1155, %v1155
      %v1301 = vcombine.high %v1156, %v1156
      %v1302 = vcombine.high %v1157, %v1157
      %v1303 = vcombine.high %v1158, %v1158
      %v1304 = vcombine.high %v1159, %v1159
      %v1305 = vcombine.high %v1160, %v1160
      %v1306 = vcombine.high %v1161, %v1161
      %v1307 = vcombine.high %v1162, %v1162
      %v1308 = vcombine.high %v1163, %v1163
      %v1309 = vcombine.high %v1164, %v1164
      %v1310 = vcombine.high %v1165, %v1165
      %v1311 = vcombine.high %v1166, %v1166
      %v1312 = vcombine.high %v1167, %v1167
      %v1313 = vcombine.high %v1168, %v1168
      %v1314 = vcombine.high %v1169, %v1169
      %v1315 = vcombine.high %v1170, %v1170
      %v1316 = vcombine.high %v1171, %v1171
      %v1317 = vcombine.high %v1172, %v1172
      %v1318 = vcombine.high %v1173, %v1173
      %v1319 = vcombine.high %v1174, %v1174
      %v1320 = vcombine.high %v1175, %v1175
      %v1321 = vcombine.high %v1176, %v1176
      %v1322 = vcombine.high %v1177, %v1177
      %v1323 = vcombine.high %v1178, %v1178
      %v1324 = vcombine.high %v1179, %v1179
      %v1325 = vcombine.high %v1180, %v1180
      %v1326 = vcombine.high %v1181, %v1181
      %v1327 = vcombine.high %v1182, %v1182
      %v1328 = vcombine.high %v1183, %v1183
      %v1329 = vcombine.high %v1184, %v1184
      %v1330 = vcombine.high %v1185, %v1185
      %v1331 = vcombine.high %v1186, %v1186
      %v1332 = vcombine.high %v1187, %v1187
      %v1333 = vcombine.high %v1188, %v1188
      %v1334 = vcombine.high %v1189, %v1189
      %v1335 = vcombine.high %v1190, %v1190
      %v1336 = vcombine.high %v1191, %v1191
      %v1337 = vcombine.high %v1192, %v1192
      %v1338 = vcombine.high %v1193, %v1193
      %v1339 = vcombine.high %v1194, %v1194
      %v1340 = vcombine.high %v1195, %v1195
      %v1341 = vcombine.high %v1196, %v1196
      %v1342 = vcombine.high %v1197, %v1197
      %v1343 = vcombine.high %v1198, %v1198
      %v1344 = vcombine.high %v1199, %v1199
      %v1345 = vcombine.high %v1200, %v1200
      %vm1418 = vcmask 257024
      %v1419 = vsel %vm1418, %v1129, -inf
      %v1420 = vrot.slane %v1419, 4
      %v1421 = vmax.f32 %v1419, %v1420
      %v1422 = vrot.slane %v1421, 2
      %v1423 = vmax.f32 %v1421, %v1422
      %v1424 = vrot.slane %v1423, 1
      %v1425 = vmax.f32 %v1423, %v1424
      %v1426 = vsel %vm1418, %v1274, -inf
      %v1427 = vrot.slane %v1426, 4
      %v1428 = vmax.f32 %v1426, %v1427
      %v1429 = vrot.slane %v1428, 2
      %v1430 = vmax.f32 %v1428, %v1429
      %v1431 = vrot.slane %v1430, 1
      %v1432 = vmax.f32 %v1430, %v1431
      %v1433 = vsel %vm1418, %v1130, -inf
      %v1434 = vrot.slane %v1433, 4
      %v1435 = vmax.f32 %v1433, %v1434
      %v1436 = vrot.slane %v1435, 2
      %v1437 = vmax.f32 %v1435, %v1436
      %v1438 = vrot.slane %v1437, 1
      %v1439 = vmax.f32 %v1437, %v1438
      %v1440 = vsel %vm1418, %v1275, -inf
      %v1441 = vrot.slane %v1440, 4
      %v1442 = vmax.f32 %v1440, %v1441
      %v1443 = vrot.slane %v1442, 2
      %v1444 = vmax.f32 %v1442, %v1443
      %v1445 = vrot.slane %v1444, 1
      %v1446 = vmax.f32 %v1444, %v1445
      %v1447 = vsel %vm1418, %v1131, -inf
      %v1448 = vrot.slane %v1447, 4
      %v1449 = vmax.f32 %v1447, %v1448
      %v1450 = vrot.slane %v1449, 2
      %v1451 = vmax.f32 %v1449, %v1450
      %v1452 = vrot.slane %v1451, 1
      %v1453 = vmax.f32 %v1451, %v1452
      %v1454 = vsel %vm1418, %v1276, -inf
      %v1455 = vrot.slane %v1454, 4
      %v1456 = vmax.f32 %v1454, %v1455
      %v1457 = vrot.slane %v1456, 2
      %v1458 = vmax.f32 %v1456, %v1457
      %v1459 = vrot.slane %v1458, 1
      %v1460 = vmax.f32 %v1458, %v1459
      %v1461 = vsel %vm1418, %v1132, -inf
      %v1462 = vrot.slane %v1461, 4
      %v1463 = vmax.f32 %v1461, %v1462
      %v1464 = vrot.slane %v1463, 2
      %v1465 = vmax.f32 %v1463, %v1464
      %v1466 = vrot.slane %v1465, 1
      %v1467 = vmax.f32 %v1465, %v1466
      %v1468 = vsel %vm1418, %v1277, -inf
      %v1469 = vrot.slane %v1468, 4
      %v1470 = vmax.f32 %v1468, %v1469
      %v1471 = vrot.slane %v1470, 2
      %v1472 = vmax.f32 %v1470, %v1471
      %v1473 = vrot.slane %v1472, 1
      %v1474 = vmax.f32 %v1472, %v1473
      %v1475 = vsel %vm1418, %v1133, -inf
      %v1476 = vrot.slane %v1475, 4
      %v1477 = vmax.f32 %v1475, %v1476
      %v1478 = vrot.slane %v1477, 2
      %v1479 = vmax.f32 %v1477, %v1478
      %v1480 = vrot.slane %v1479, 1
      %v1481 = vmax.f32 %v1479, %v1480
      %v1482 = vsel %vm1418, %v1278, -inf
      %v1483 = vrot.slane %v1482, 4
      %v1484 = vmax.f32 %v1482, %v1483
      %v1485 = vrot.slane %v1484, 2
      %v1486 = vmax.f32 %v1484, %v1485
      %v1487 = vrot.slane %v1486, 1
      %v1488 = vmax.f32 %v1486, %v1487
      %v1489 = vsel %vm1418, %v1134, -inf
      %v1490 = vrot.slane %v1489, 4
      %v1491 = vmax.f32 %v1489, %v1490
      %v1492 = vrot.slane %v1491, 2
      %v1493 = vmax.f32 %v1491, %v1492
      %v1494 = vrot.slane %v1493, 1
      %v1495 = vmax.f32 %v1493, %v1494
      %v1496 = vsel %vm1418, %v1279, -inf
      %v1497 = vrot.slane %v1496, 4
      %v1498 = vmax.f32 %v1496, %v1497
      %v1499 = vrot.slane %v1498, 2
      %v1500 = vmax.f32 %v1498, %v1499
      %v1501 = vrot.slane %v1500, 1
      %v1502 = vmax.f32 %v1500, %v1501
      %v1503 = vsel %vm1418, %v1135, -inf
      %v1504 = vrot.slane %v1503, 4
      %v1505 = vmax.f32 %v1503, %v1504
      %v1506 = vrot.slane %v1505, 2
      %v1507 = vmax.f32 %v1505, %v1506
      %v1508 = vrot.slane %v1507, 1
      %v1509 = vmax.f32 %v1507, %v1508
      %v1510 = vsel %vm1418, %v1280, -inf
      %v1511 = vrot.slane %v1510, 4
      %v1512 = vmax.f32 %v1510, %v1511
      %v1513 = vrot.slane %v1512, 2
      %v1514 = vmax.f32 %v1512, %v1513
      %v1515 = vrot.slane %v1514, 1
      %v1516 = vmax.f32 %v1514, %v1515
      %v1517 = vsel %vm1418, %v1136, -inf
      %v1518 = vrot.slane %v1517, 4
      %v1519 = vmax.f32 %v1517, %v1518
      %v1520 = vrot.slane %v1519, 2
      %v1521 = vmax.f32 %v1519, %v1520
      %v1522 = vrot.slane %v1521, 1
      %v1523 = vmax.f32 %v1521, %v1522
      %v1524 = vsel %vm1418, %v1281, -inf
      %v1525 = vrot.slane %v1524, 4
      %v1526 = vmax.f32 %v1524, %v1525
      %v1527 = vrot.slane %v1526, 2
      %v1528 = vmax.f32 %v1526, %v1527
      %v1529 = vrot.slane %v1528, 1
      %v1530 = vmax.f32 %v1528, %v1529
      %v1531 = vsel %vm1418, %v1137, -inf
      %v1532 = vrot.slane %v1531, 4
      %v1533 = vmax.f32 %v1531, %v1532
      %v1534 = vrot.slane %v1533, 2
      %v1535 = vmax.f32 %v1533, %v1534
      %v1536 = vrot.slane %v1535, 1
      %v1537 = vmax.f32 %v1535, %v1536
      %v1538 = vsel %vm1418, %v1282, -inf
      %v1539 = vrot.slane %v1538, 4
      %v1540 = vmax.f32 %v1538, %v1539
      %v1541 = vrot.slane %v1540, 2
      %v1542 = vmax.f32 %v1540, %v1541
      %v1543 = vrot.slane %v1542, 1
      %v1544 = vmax.f32 %v1542, %v1543
      %v1545 = vsel %vm1418, %v1138, -inf
      %v1546 = vrot.slane %v1545, 4
      %v1547 = vmax.f32 %v1545, %v1546
      %v1548 = vrot.slane %v1547, 2
      %v1549 = vmax.f32 %v1547, %v1548
      %v1550 = vrot.slane %v1549, 1
      %v1551 = vmax.f32 %v1549, %v1550
      %v1552 = vsel %vm1418, %v1283, -inf
      %v1553 = vrot.slane %v1552, 4
      %v1554 = vmax.f32 %v1552, %v1553
      %v1555 = vrot.slane %v1554, 2
      %v1556 = vmax.f32 %v1554, %v1555
      %v1557 = vrot.slane %v1556, 1
      %v1558 = vmax.f32 %v1556, %v1557
      %v1559 = vsel %vm1418, %v1139, -inf
      %v1560 = vrot.slane %v1559, 4
      %v1561 = vmax.f32 %v1559, %v1560
      %v1562 = vrot.slane %v1561, 2
      %v1563 = vmax.f32 %v1561, %v1562
      %v1564 = vrot.slane %v1563, 1
      %v1565 = vmax.f32 %v1563, %v1564
      %v1566 = vsel %vm1418, %v1284, -inf
      %v1567 = vrot.slane %v1566, 4
      %v1568 = vmax.f32 %v1566, %v1567
      %v1569 = vrot.slane %v1568, 2
      %v1570 = vmax.f32 %v1568, %v1569
      %v1571 = vrot.slane %v1570, 1
      %v1572 = vmax.f32 %v1570, %v1571
      %v1573 = vsel %vm1418, %v1140, -inf
      %v1574 = vrot.slane %v1573, 4
      %v1575 = vmax.f32 %v1573, %v1574
      %v1576 = vrot.slane %v1575, 2
      %v1577 = vmax.f32 %v1575, %v1576
      %v1578 = vrot.slane %v1577, 1
      %v1579 = vmax.f32 %v1577, %v1578
      %v1580 = vsel %vm1418, %v1285, -inf
      %v1581 = vrot.slane %v1580, 4
      %v1582 = vmax.f32 %v1580, %v1581
      %v1583 = vrot.slane %v1582, 2
      %v1584 = vmax.f32 %v1582, %v1583
      %v1585 = vrot.slane %v1584, 1
      %v1586 = vmax.f32 %v1584, %v1585
      %v1587 = vsel %vm1418, %v1141, -inf
      %v1588 = vrot.slane %v1587, 4
      %v1589 = vmax.f32 %v1587, %v1588
      %v1590 = vrot.slane %v1589, 2
      %v1591 = vmax.f32 %v1589, %v1590
      %v1592 = vrot.slane %v1591, 1
      %v1593 = vmax.f32 %v1591, %v1592
      %v1594 = vsel %vm1418, %v1286, -inf
      %v1595 = vrot.slane %v1594, 4
      %v1596 = vmax.f32 %v1594, %v1595
      %v1597 = vrot.slane %v1596, 2
      %v1598 = vmax.f32 %v1596, %v1597
      %v1599 = vrot.slane %v1598, 1
      %v1600 = vmax.f32 %v1598, %v1599
      %v1601 = vsel %vm1418, %v1142, -inf
      %v1602 = vrot.slane %v1601, 4
      %v1603 = vmax.f32 %v1601, %v1602
      %v1604 = vrot.slane %v1603, 2
      %v1605 = vmax.f32 %v1603, %v1604
      %v1606 = vrot.slane %v1605, 1
      %v1607 = vmax.f32 %v1605, %v1606
      %v1608 = vsel %vm1418, %v1287, -inf
      %v1609 = vrot.slane %v1608, 4
      %v1610 = vmax.f32 %v1608, %v1609
      %v1611 = vrot.slane %v1610, 2
      %v1612 = vmax.f32 %v1610, %v1611
      %v1613 = vrot.slane %v1612, 1
      %v1614 = vmax.f32 %v1612, %v1613
      %v1615 = vsel %vm1418, %v1143, -inf
      %v1616 = vrot.slane %v1615, 4
      %v1617 = vmax.f32 %v1615, %v1616
      %v1618 = vrot.slane %v1617, 2
      %v1619 = vmax.f32 %v1617, %v1618
      %v1620 = vrot.slane %v1619, 1
      %v1621 = vmax.f32 %v1619, %v1620
      %v1622 = vsel %vm1418, %v1288, -inf
      %v1623 = vrot.slane %v1622, 4
      %v1624 = vmax.f32 %v1622, %v1623
      %v1625 = vrot.slane %v1624, 2
      %v1626 = vmax.f32 %v1624, %v1625
      %v1627 = vrot.slane %v1626, 1
      %v1628 = vmax.f32 %v1626, %v1627
      %v1629 = vsel %vm1418, %v1144, -inf
      %v1630 = vrot.slane %v1629, 4
      %v1631 = vmax.f32 %v1629, %v1630
      %v1632 = vrot.slane %v1631, 2
      %v1633 = vmax.f32 %v1631, %v1632
      %v1634 = vrot.slane %v1633, 1
      %v1635 = vmax.f32 %v1633, %v1634
      %v1636 = vsel %vm1418, %v1289, -inf
      %v1637 = vrot.slane %v1636, 4
      %v1638 = vmax.f32 %v1636, %v1637
      %v1639 = vrot.slane %v1638, 2
      %v1640 = vmax.f32 %v1638, %v1639
      %v1641 = vrot.slane %v1640, 1
      %v1642 = vmax.f32 %v1640, %v1641
      %v1643 = vsel %vm1418, %v1145, -inf
      %v1644 = vrot.slane %v1643, 4
      %v1645 = vmax.f32 %v1643, %v1644
      %v1646 = vrot.slane %v1645, 2
      %v1647 = vmax.f32 %v1645, %v1646
      %v1648 = vrot.slane %v1647, 1
      %v1649 = vmax.f32 %v1647, %v1648
      %v1650 = vsel %vm1418, %v1290, -inf
      %v1651 = vrot.slane %v1650, 4
      %v1652 = vmax.f32 %v1650, %v1651
      %v1653 = vrot.slane %v1652, 2
      %v1654 = vmax.f32 %v1652, %v1653
      %v1655 = vrot.slane %v1654, 1
      %v1656 = vmax.f32 %v1654, %v1655
      %v1657 = vsel %vm1418, %v1146, -inf
      %v1658 = vrot.slane %v1657, 4
      %v1659 = vmax.f32 %v1657, %v1658
      %v1660 = vrot.slane %v1659, 2
      %v1661 = vmax.f32 %v1659, %v1660
      %v1662 = vrot.slane %v1661, 1
      %v1663 = vmax.f32 %v1661, %v1662
      %v1664 = vsel %vm1418, %v1291, -inf
      %v1665 = vrot.slane %v1664, 4
      %v1666 = vmax.f32 %v1664, %v1665
      %v1667 = vrot.slane %v1666, 2
      %v1668 = vmax.f32 %v1666, %v1667
      %v1669 = vrot.slane %v1668, 1
      %v1670 = vmax.f32 %v1668, %v1669
      %v1671 = vsel %vm1418, %v1147, -inf
      %v1672 = vrot.slane %v1671, 4
      %v1673 = vmax.f32 %v1671, %v1672
      %v1674 = vrot.slane %v1673, 2
      %v1675 = vmax.f32 %v1673, %v1674
      %v1676 = vrot.slane %v1675, 1
      %v1677 = vmax.f32 %v1675, %v1676
      %v1678 = vsel %vm1418, %v1292, -inf
      %v1679 = vrot.slane %v1678, 4
      %v1680 = vmax.f32 %v1678, %v1679
      %v1681 = vrot.slane %v1680, 2
      %v1682 = vmax.f32 %v1680, %v1681
      %v1683 = vrot.slane %v1682, 1
      %v1684 = vmax.f32 %v1682, %v1683
      %v1685 = vsel %vm1418, %v1148, -inf
      %v1686 = vrot.slane %v1685, 4
      %v1687 = vmax.f32 %v1685, %v1686
      %v1688 = vrot.slane %v1687, 2
      %v1689 = vmax.f32 %v1687, %v1688
      %v1690 = vrot.slane %v1689, 1
      %v1691 = vmax.f32 %v1689, %v1690
      %v1692 = vsel %vm1418, %v1293, -inf
      %v1693 = vrot.slane %v1692, 4
      %v1694 = vmax.f32 %v1692, %v1693
      %v1695 = vrot.slane %v1694, 2
      %v1696 = vmax.f32 %v1694, %v1695
      %v1697 = vrot.slane %v1696, 1
      %v1698 = vmax.f32 %v1696, %v1697
      %v1699 = vsel %vm1418, %v1149, -inf
      %v1700 = vrot.slane %v1699, 4
      %v1701 = vmax.f32 %v1699, %v1700
      %v1702 = vrot.slane %v1701, 2
      %v1703 = vmax.f32 %v1701, %v1702
      %v1704 = vrot.slane %v1703, 1
      %v1705 = vmax.f32 %v1703, %v1704
      %v1706 = vsel %vm1418, %v1294, -inf
      %v1707 = vrot.slane %v1706, 4
      %v1708 = vmax.f32 %v1706, %v1707
      %v1709 = vrot.slane %v1708, 2
      %v1710 = vmax.f32 %v1708, %v1709
      %v1711 = vrot.slane %v1710, 1
      %v1712 = vmax.f32 %v1710, %v1711
      %v1713 = vsel %vm1418, %v1150, -inf
      %v1714 = vrot.slane %v1713, 4
      %v1715 = vmax.f32 %v1713, %v1714
      %v1716 = vrot.slane %v1715, 2
      %v1717 = vmax.f32 %v1715, %v1716
      %v1718 = vrot.slane %v1717, 1
      %v1719 = vmax.f32 %v1717, %v1718
      %v1720 = vsel %vm1418, %v1295, -inf
      %v1721 = vrot.slane %v1720, 4
      %v1722 = vmax.f32 %v1720, %v1721
      %v1723 = vrot.slane %v1722, 2
      %v1724 = vmax.f32 %v1722, %v1723
      %v1725 = vrot.slane %v1724, 1
      %v1726 = vmax.f32 %v1724, %v1725
      %v1727 = vsel %vm1418, %v1151, -inf
      %v1728 = vrot.slane %v1727, 4
      %v1729 = vmax.f32 %v1727, %v1728
      %v1730 = vrot.slane %v1729, 2
      %v1731 = vmax.f32 %v1729, %v1730
      %v1732 = vrot.slane %v1731, 1
      %v1733 = vmax.f32 %v1731, %v1732
      %v1734 = vsel %vm1418, %v1296, -inf
      %v1735 = vrot.slane %v1734, 4
      %v1736 = vmax.f32 %v1734, %v1735
      %v1737 = vrot.slane %v1736, 2
      %v1738 = vmax.f32 %v1736, %v1737
      %v1739 = vrot.slane %v1738, 1
      %v1740 = vmax.f32 %v1738, %v1739
      %v1741 = vsel %vm1418, %v1152, -inf
      %v1742 = vrot.slane %v1741, 4
      %v1743 = vmax.f32 %v1741, %v1742
      %v1744 = vrot.slane %v1743, 2
      %v1745 = vmax.f32 %v1743, %v1744
      %v1746 = vrot.slane %v1745, 1
      %v1747 = vmax.f32 %v1745, %v1746
      %v1748 = vsel %vm1418, %v1297, -inf
      %v1749 = vrot.slane %v1748, 4
      %v1750 = vmax.f32 %v1748, %v1749
      %v1751 = vrot.slane %v1750, 2
      %v1752 = vmax.f32 %v1750, %v1751
      %v1753 = vrot.slane %v1752, 1
      %v1754 = vmax.f32 %v1752, %v1753
      %v1755 = vsel %vm1418, %v1153, -inf
      %v1756 = vrot.slane %v1755, 4
      %v1757 = vmax.f32 %v1755, %v1756
      %v1758 = vrot.slane %v1757, 2
      %v1759 = vmax.f32 %v1757, %v1758
      %v1760 = vrot.slane %v1759, 1
      %v1761 = vmax.f32 %v1759, %v1760
      %v1762 = vsel %vm1418, %v1298, -inf
      %v1763 = vrot.slane %v1762, 4
      %v1764 = vmax.f32 %v1762, %v1763
      %v1765 = vrot.slane %v1764, 2
      %v1766 = vmax.f32 %v1764, %v1765
      %v1767 = vrot.slane %v1766, 1
      %v1768 = vmax.f32 %v1766, %v1767
      %v1769 = vsel %vm1418, %v1154, -inf
      %v1770 = vrot.slane %v1769, 4
      %v1771 = vmax.f32 %v1769, %v1770
      %v1772 = vrot.slane %v1771, 2
      %v1773 = vmax.f32 %v1771, %v1772
      %v1774 = vrot.slane %v1773, 1
      %v1775 = vmax.f32 %v1773, %v1774
      %v1776 = vsel %vm1418, %v1299, -inf
      %v1777 = vrot.slane %v1776, 4
      %v1778 = vmax.f32 %v1776, %v1777
      %v1779 = vrot.slane %v1778, 2
      %v1780 = vmax.f32 %v1778, %v1779
      %v1781 = vrot.slane %v1780, 1
      %v1782 = vmax.f32 %v1780, %v1781
      %v1783 = vsel %vm1418, %v1155, -inf
      %v1784 = vrot.slane %v1783, 4
      %v1785 = vmax.f32 %v1783, %v1784
      %v1786 = vrot.slane %v1785, 2
      %v1787 = vmax.f32 %v1785, %v1786
      %v1788 = vrot.slane %v1787, 1
      %v1789 = vmax.f32 %v1787, %v1788
      %v1790 = vsel %vm1418, %v1300, -inf
      %v1791 = vrot.slane %v1790, 4
      %v1792 = vmax.f32 %v1790, %v1791
      %v1793 = vrot.slane %v1792, 2
      %v1794 = vmax.f32 %v1792, %v1793
      %v1795 = vrot.slane %v1794, 1
      %v1796 = vmax.f32 %v1794, %v1795
      %v1797 = vsel %vm1418, %v1156, -inf
      %v1798 = vrot.slane %v1797, 4
      %v1799 = vmax.f32 %v1797, %v1798
      %v1800 = vrot.slane %v1799, 2
      %v1801 = vmax.f32 %v1799, %v1800
      %v1802 = vrot.slane %v1801, 1
      %v1803 = vmax.f32 %v1801, %v1802
      %v1804 = vsel %vm1418, %v1301, -inf
      %v1805 = vrot.slane %v1804, 4
      %v1806 = vmax.f32 %v1804, %v1805
      %v1807 = vrot.slane %v1806, 2
      %v1808 = vmax.f32 %v1806, %v1807
      %v1809 = vrot.slane %v1808, 1
      %v1810 = vmax.f32 %v1808, %v1809
      %v1811 = vsel %vm1418, %v1157, -inf
      %v1812 = vrot.slane %v1811, 4
      %v1813 = vmax.f32 %v1811, %v1812
      %v1814 = vrot.slane %v1813, 2
      %v1815 = vmax.f32 %v1813, %v1814
      %v1816 = vrot.slane %v1815, 1
      %v1817 = vmax.f32 %v1815, %v1816
      %v1818 = vsel %vm1418, %v1302, -inf
      %v1819 = vrot.slane %v1818, 4
      %v1820 = vmax.f32 %v1818, %v1819
      %v1821 = vrot.slane %v1820, 2
      %v1822 = vmax.f32 %v1820, %v1821
      %v1823 = vrot.slane %v1822, 1
      %v1824 = vmax.f32 %v1822, %v1823
      %v1825 = vsel %vm1418, %v1158, -inf
      %v1826 = vrot.slane %v1825, 4
      %v1827 = vmax.f32 %v1825, %v1826
      %v1828 = vrot.slane %v1827, 2
      %v1829 = vmax.f32 %v1827, %v1828
      %v1830 = vrot.slane %v1829, 1
      %v1831 = vmax.f32 %v1829, %v1830
      %v1832 = vsel %vm1418, %v1303, -inf
      %v1833 = vrot.slane %v1832, 4
      %v1834 = vmax.f32 %v1832, %v1833
      %v1835 = vrot.slane %v1834, 2
      %v1836 = vmax.f32 %v1834, %v1835
      %v1837 = vrot.slane %v1836, 1
      %v1838 = vmax.f32 %v1836, %v1837
      %v1839 = vsel %vm1418, %v1159, -inf
      %v1840 = vrot.slane %v1839, 4
      %v1841 = vmax.f32 %v1839, %v1840
      %v1842 = vrot.slane %v1841, 2
      %v1843 = vmax.f32 %v1841, %v1842
      %v1844 = vrot.slane %v1843, 1
      %v1845 = vmax.f32 %v1843, %v1844
      %v1846 = vsel %vm1418, %v1304, -inf
      %v1847 = vrot.slane %v1846, 4
      %v1848 = vmax.f32 %v1846, %v1847
      %v1849 = vrot.slane %v1848, 2
      %v1850 = vmax.f32 %v1848, %v1849
      %v1851 = vrot.slane %v1850, 1
      %v1852 = vmax.f32 %v1850, %v1851
      %v1853 = vsel %vm1418, %v1160, -inf
      %v1854 = vrot.slane %v1853, 4
      %v1855 = vmax.f32 %v1853, %v1854
      %v1856 = vrot.slane %v1855, 2
      %v1857 = vmax.f32 %v1855, %v1856
      %v1858 = vrot.slane %v1857, 1
      %v1859 = vmax.f32 %v1857, %v1858
      %v1860 = vsel %vm1418, %v1305, -inf
      %v1861 = vrot.slane %v1860, 4
      %v1862 = vmax.f32 %v1860, %v1861
      %v1863 = vrot.slane %v1862, 2
      %v1864 = vmax.f32 %v1862, %v1863
      %v1865 = vrot.slane %v1864, 1
      %v1866 = vmax.f32 %v1864, %v1865
      %v1867 = vsel %vm1418, %v1161, -inf
      %v1868 = vrot.slane %v1867, 4
      %v1869 = vmax.f32 %v1867, %v1868
      %v1870 = vrot.slane %v1869, 2
      %v1871 = vmax.f32 %v1869, %v1870
      %v1872 = vrot.slane %v1871, 1
      %v1873 = vmax.f32 %v1871, %v1872
      %v1874 = vsel %vm1418, %v1306, -inf
      %v1875 = vrot.slane %v1874, 4
      %v1876 = vmax.f32 %v1874, %v1875
      %v1877 = vrot.slane %v1876, 2
      %v1878 = vmax.f32 %v1876, %v1877
      %v1879 = vrot.slane %v1878, 1
      %v1880 = vmax.f32 %v1878, %v1879
      %v1881 = vsel %vm1418, %v1162, -inf
      %v1882 = vrot.slane %v1881, 4
      %v1883 = vmax.f32 %v1881, %v1882
      %v1884 = vrot.slane %v1883, 2
      %v1885 = vmax.f32 %v1883, %v1884
      %v1886 = vrot.slane %v1885, 1
      %v1887 = vmax.f32 %v1885, %v1886
      %v1888 = vsel %vm1418, %v1307, -inf
      %v1889 = vrot.slane %v1888, 4
      %v1890 = vmax.f32 %v1888, %v1889
      %v1891 = vrot.slane %v1890, 2
      %v1892 = vmax.f32 %v1890, %v1891
      %v1893 = vrot.slane %v1892, 1
      %v1894 = vmax.f32 %v1892, %v1893
      %v1895 = vsel %vm1418, %v1163, -inf
      %v1896 = vrot.slane %v1895, 4
      %v1897 = vmax.f32 %v1895, %v1896
      %v1898 = vrot.slane %v1897, 2
      %v1899 = vmax.f32 %v1897, %v1898
      %v1900 = vrot.slane %v1899, 1
      %v1901 = vmax.f32 %v1899, %v1900
      %v1902 = vsel %vm1418, %v1308, -inf
      %v1903 = vrot.slane %v1902, 4
      %v1904 = vmax.f32 %v1902, %v1903
      %v1905 = vrot.slane %v1904, 2
      %v1906 = vmax.f32 %v1904, %v1905
      %v1907 = vrot.slane %v1906, 1
      %v1908 = vmax.f32 %v1906, %v1907
      %v1909 = vsel %vm1418, %v1164, -inf
      %v1910 = vrot.slane %v1909, 4
      %v1911 = vmax.f32 %v1909, %v1910
      %v1912 = vrot.slane %v1911, 2
      %v1913 = vmax.f32 %v1911, %v1912
      %v1914 = vrot.slane %v1913, 1
      %v1915 = vmax.f32 %v1913, %v1914
      %v1916 = vsel %vm1418, %v1309, -inf
      %v1917 = vrot.slane %v1916, 4
      %v1918 = vmax.f32 %v1916, %v1917
      %v1919 = vrot.slane %v1918, 2
      %v1920 = vmax.f32 %v1918, %v1919
      %v1921 = vrot.slane %v1920, 1
      %v1922 = vmax.f32 %v1920, %v1921
      %v1923 = vsel %vm1418, %v1165, -inf
      %v1924 = vrot.slane %v1923, 4
      %v1925 = vmax.f32 %v1923, %v1924
      %v1926 = vrot.slane %v1925, 2
      %v1927 = vmax.f32 %v1925, %v1926
      %v1928 = vrot.slane %v1927, 1
      %v1929 = vmax.f32 %v1927, %v1928
      %v1930 = vsel %vm1418, %v1310, -inf
      %v1931 = vrot.slane %v1930, 4
      %v1932 = vmax.f32 %v1930, %v1931
      %v1933 = vrot.slane %v1932, 2
      %v1934 = vmax.f32 %v1932, %v1933
      %v1935 = vrot.slane %v1934, 1
      %v1936 = vmax.f32 %v1934, %v1935
      %v1937 = vsel %vm1418, %v1166, -inf
      %v1938 = vrot.slane %v1937, 4
      %v1939 = vmax.f32 %v1937, %v1938
      %v1940 = vrot.slane %v1939, 2
      %v1941 = vmax.f32 %v1939, %v1940
      %v1942 = vrot.slane %v1941, 1
      %v1943 = vmax.f32 %v1941, %v1942
      %v1944 = vsel %vm1418, %v1311, -inf
      %v1945 = vrot.slane %v1944, 4
      %v1946 = vmax.f32 %v1944, %v1945
      %v1947 = vrot.slane %v1946, 2
      %v1948 = vmax.f32 %v1946, %v1947
      %v1949 = vrot.slane %v1948, 1
      %v1950 = vmax.f32 %v1948, %v1949
      %v1951 = vsel %vm1418, %v1167, -inf
      %v1952 = vrot.slane %v1951, 4
      %v1953 = vmax.f32 %v1951, %v1952
      %v1954 = vrot.slane %v1953, 2
      %v1955 = vmax.f32 %v1953, %v1954
      %v1956 = vrot.slane %v1955, 1
      %v1957 = vmax.f32 %v1955, %v1956
      %v1958 = vsel %vm1418, %v1312, -inf
      %v1959 = vrot.slane %v1958, 4
      %v1960 = vmax.f32 %v1958, %v1959
      %v1961 = vrot.slane %v1960, 2
      %v1962 = vmax.f32 %v1960, %v1961
      %v1963 = vrot.slane %v1962, 1
      %v1964 = vmax.f32 %v1962, %v1963
      %v1965 = vsel %vm1418, %v1168, -inf
      %v1966 = vrot.slane %v1965, 4
      %v1967 = vmax.f32 %v1965, %v1966
      %v1968 = vrot.slane %v1967, 2
      %v1969 = vmax.f32 %v1967, %v1968
      %v1970 = vrot.slane %v1969, 1
      %v1971 = vmax.f32 %v1969, %v1970
      %v1972 = vsel %vm1418, %v1313, -inf
      %v1973 = vrot.slane %v1972, 4
      %v1974 = vmax.f32 %v1972, %v1973
      %v1975 = vrot.slane %v1974, 2
      %v1976 = vmax.f32 %v1974, %v1975
      %v1977 = vrot.slane %v1976, 1
      %v1978 = vmax.f32 %v1976, %v1977
      %v1979 = vsel %vm1418, %v1169, -inf
      %v1980 = vrot.slane %v1979, 4
      %v1981 = vmax.f32 %v1979, %v1980
      %v1982 = vrot.slane %v1981, 2
      %v1983 = vmax.f32 %v1981, %v1982
      %v1984 = vrot.slane %v1983, 1
      %v1985 = vmax.f32 %v1983, %v1984
      %v1986 = vsel %vm1418, %v1314, -inf
      %v1987 = vrot.slane %v1986, 4
      %v1988 = vmax.f32 %v1986, %v1987
      %v1989 = vrot.slane %v1988, 2
      %v1990 = vmax.f32 %v1988, %v1989
      %v1991 = vrot.slane %v1990, 1
      %v1992 = vmax.f32 %v1990, %v1991
      %v1993 = vsel %vm1418, %v1170, -inf
      %v1994 = vrot.slane %v1993, 4
      %v1995 = vmax.f32 %v1993, %v1994
      %v1996 = vrot.slane %v1995, 2
      %v1997 = vmax.f32 %v1995, %v1996
      %v1998 = vrot.slane %v1997, 1
      %v1999 = vmax.f32 %v1997, %v1998
      %v2000 = vsel %vm1418, %v1315, -inf
      %v2001 = vrot.slane %v2000, 4
      %v2002 = vmax.f32 %v2000, %v2001
      %v2003 = vrot.slane %v2002, 2
      %v2004 = vmax.f32 %v2002, %v2003
      %v2005 = vrot.slane %v2004, 1
      %v2006 = vmax.f32 %v2004, %v2005
      %v2007 = vsel %vm1418, %v1171, -inf
      %v2008 = vrot.slane %v2007, 4
      %v2009 = vmax.f32 %v2007, %v2008
      %v2010 = vrot.slane %v2009, 2
      %v2011 = vmax.f32 %v2009, %v2010
      %v2012 = vrot.slane %v2011, 1
      %v2013 = vmax.f32 %v2011, %v2012
      %v2014 = vsel %vm1418, %v1316, -inf
      %v2015 = vrot.slane %v2014, 4
      %v2016 = vmax.f32 %v2014, %v2015
      %v2017 = vrot.slane %v2016, 2
      %v2018 = vmax.f32 %v2016, %v2017
      %v2019 = vrot.slane %v2018, 1
      %v2020 = vmax.f32 %v2018, %v2019
      %v2021 = vsel %vm1418, %v1172, -inf
      %v2022 = vrot.slane %v2021, 4
      %v2023 = vmax.f32 %v2021, %v2022
      %v2024 = vrot.slane %v2023, 2
      %v2025 = vmax.f32 %v2023, %v2024
      %v2026 = vrot.slane %v2025, 1
      %v2027 = vmax.f32 %v2025, %v2026
      %v2028 = vsel %vm1418, %v1317, -inf
      %v2029 = vrot.slane %v2028, 4
      %v2030 = vmax.f32 %v2028, %v2029
      %v2031 = vrot.slane %v2030, 2
      %v2032 = vmax.f32 %v2030, %v2031
      %v2033 = vrot.slane %v2032, 1
      %v2034 = vmax.f32 %v2032, %v2033
      %v2035 = vsel %vm1418, %v1173, -inf
      %v2036 = vrot.slane %v2035, 4
      %v2037 = vmax.f32 %v2035, %v2036
      %v2038 = vrot.slane %v2037, 2
      %v2039 = vmax.f32 %v2037, %v2038
      %v2040 = vrot.slane %v2039, 1
      %v2041 = vmax.f32 %v2039, %v2040
      %v2042 = vsel %vm1418, %v1318, -inf
      %v2043 = vrot.slane %v2042, 4
      %v2044 = vmax.f32 %v2042, %v2043
      %v2045 = vrot.slane %v2044, 2
      %v2046 = vmax.f32 %v2044, %v2045
      %v2047 = vrot.slane %v2046, 1
      %v2048 = vmax.f32 %v2046, %v2047
      %v2049 = vsel %vm1418, %v1174, -inf
      %v2050 = vrot.slane %v2049, 4
      %v2051 = vmax.f32 %v2049, %v2050
      %v2052 = vrot.slane %v2051, 2
      %v2053 = vmax.f32 %v2051, %v2052
      %v2054 = vrot.slane %v2053, 1
      %v2055 = vmax.f32 %v2053, %v2054
      %v2056 = vsel %vm1418, %v1319, -inf
      %v2057 = vrot.slane %v2056, 4
      %v2058 = vmax.f32 %v2056, %v2057
      %v2059 = vrot.slane %v2058, 2
      %v2060 = vmax.f32 %v2058, %v2059
      %v2061 = vrot.slane %v2060, 1
      %v2062 = vmax.f32 %v2060, %v2061
      %v2063 = vsel %vm1418, %v1175, -inf
      %v2064 = vrot.slane %v2063, 4
      %v2065 = vmax.f32 %v2063, %v2064
      %v2066 = vrot.slane %v2065, 2
      %v2067 = vmax.f32 %v2065, %v2066
      %v2068 = vrot.slane %v2067, 1
      %v2069 = vmax.f32 %v2067, %v2068
      %v2070 = vsel %vm1418, %v1320, -inf
      %v2071 = vrot.slane %v2070, 4
      %v2072 = vmax.f32 %v2070, %v2071
      %v2073 = vrot.slane %v2072, 2
      %v2074 = vmax.f32 %v2072, %v2073
      %v2075 = vrot.slane %v2074, 1
      %v2076 = vmax.f32 %v2074, %v2075
      %v2077 = vsel %vm1418, %v1176, -inf
      %v2078 = vrot.slane %v2077, 4
      %v2079 = vmax.f32 %v2077, %v2078
      %v2080 = vrot.slane %v2079, 2
      %v2081 = vmax.f32 %v2079, %v2080
      %v2082 = vrot.slane %v2081, 1
      %v2083 = vmax.f32 %v2081, %v2082
      %v2084 = vsel %vm1418, %v1321, -inf
      %v2085 = vrot.slane %v2084, 4
      %v2086 = vmax.f32 %v2084, %v2085
      %v2087 = vrot.slane %v2086, 2
      %v2088 = vmax.f32 %v2086, %v2087
      %v2089 = vrot.slane %v2088, 1
      %v2090 = vmax.f32 %v2088, %v2089
      %v2091 = vsel %vm1418, %v1177, -inf
      %v2092 = vrot.slane %v2091, 4
      %v2093 = vmax.f32 %v2091, %v2092
      %v2094 = vrot.slane %v2093, 2
      %v2095 = vmax.f32 %v2093, %v2094
      %v2096 = vrot.slane %v2095, 1
      %v2097 = vmax.f32 %v2095, %v2096
      %v2098 = vsel %vm1418, %v1322, -inf
      %v2099 = vrot.slane %v2098, 4
      %v2100 = vmax.f32 %v2098, %v2099
      %v2101 = vrot.slane %v2100, 2
      %v2102 = vmax.f32 %v2100, %v2101
      %v2103 = vrot.slane %v2102, 1
      %v2104 = vmax.f32 %v2102, %v2103
      %v2105 = vsel %vm1418, %v1178, -inf
      %v2106 = vrot.slane %v2105, 4
      %v2107 = vmax.f32 %v2105, %v2106
      %v2108 = vrot.slane %v2107, 2
      %v2109 = vmax.f32 %v2107, %v2108
      %v2110 = vrot.slane %v2109, 1
      %v2111 = vmax.f32 %v2109, %v2110
      %v2112 = vsel %vm1418, %v1323, -inf
      %v2113 = vrot.slane %v2112, 4
      %v2114 = vmax.f32 %v2112, %v2113
      %v2115 = vrot.slane %v2114, 2
      %v2116 = vmax.f32 %v2114, %v2115
      %v2117 = vrot.slane %v2116, 1
      %v2118 = vmax.f32 %v2116, %v2117
      %v2119 = vsel %vm1418, %v1179, -inf
      %v2120 = vrot.slane %v2119, 4
      %v2121 = vmax.f32 %v2119, %v2120
      %v2122 = vrot.slane %v2121, 2
      %v2123 = vmax.f32 %v2121, %v2122
      %v2124 = vrot.slane %v2123, 1
      %v2125 = vmax.f32 %v2123, %v2124
      %v2126 = vsel %vm1418, %v1324, -inf
      %v2127 = vrot.slane %v2126, 4
      %v2128 = vmax.f32 %v2126, %v2127
      %v2129 = vrot.slane %v2128, 2
      %v2130 = vmax.f32 %v2128, %v2129
      %v2131 = vrot.slane %v2130, 1
      %v2132 = vmax.f32 %v2130, %v2131
      %v2133 = vsel %vm1418, %v1180, -inf
      %v2134 = vrot.slane %v2133, 4
      %v2135 = vmax.f32 %v2133, %v2134
      %v2136 = vrot.slane %v2135, 2
      %v2137 = vmax.f32 %v2135, %v2136
      %v2138 = vrot.slane %v2137, 1
      %v2139 = vmax.f32 %v2137, %v2138
      %v2140 = vsel %vm1418, %v1325, -inf
      %v2141 = vrot.slane %v2140, 4
      %v2142 = vmax.f32 %v2140, %v2141
      %v2143 = vrot.slane %v2142, 2
      %v2144 = vmax.f32 %v2142, %v2143
      %v2145 = vrot.slane %v2144, 1
      %v2146 = vmax.f32 %v2144, %v2145
      %v2147 = vsel %vm1418, %v1181, -inf
      %v2148 = vrot.slane %v2147, 4
      %v2149 = vmax.f32 %v2147, %v2148
      %v2150 = vrot.slane %v2149, 2
      %v2151 = vmax.f32 %v2149, %v2150
      %v2152 = vrot.slane %v2151, 1
      %v2153 = vmax.f32 %v2151, %v2152
      %v2154 = vsel %vm1418, %v1326, -inf
      %v2155 = vrot.slane %v2154, 4
      %v2156 = vmax.f32 %v2154, %v2155
      %v2157 = vrot.slane %v2156, 2
      %v2158 = vmax.f32 %v2156, %v2157
      %v2159 = vrot.slane %v2158, 1
      %v2160 = vmax.f32 %v2158, %v2159
      %v2161 = vsel %vm1418, %v1182, -inf
      %v2162 = vrot.slane %v2161, 4
      %v2163 = vmax.f32 %v2161, %v2162
      %v2164 = vrot.slane %v2163, 2
      %v2165 = vmax.f32 %v2163, %v2164
      %v2166 = vrot.slane %v2165, 1
      %v2167 = vmax.f32 %v2165, %v2166
      %v2168 = vsel %vm1418, %v1327, -inf
      %v2169 = vrot.slane %v2168, 4
      %v2170 = vmax.f32 %v2168, %v2169
      %v2171 = vrot.slane %v2170, 2
      %v2172 = vmax.f32 %v2170, %v2171
      %v2173 = vrot.slane %v2172, 1
      %v2174 = vmax.f32 %v2172, %v2173
      %v2175 = vsel %vm1418, %v1183, -inf
      %v2176 = vrot.slane %v2175, 4
      %v2177 = vmax.f32 %v2175, %v2176
      %v2178 = vrot.slane %v2177, 2
      %v2179 = vmax.f32 %v2177, %v2178
      %v2180 = vrot.slane %v2179, 1
      %v2181 = vmax.f32 %v2179, %v2180
      %v2182 = vsel %vm1418, %v1328, -inf
      %v2183 = vrot.slane %v2182, 4
      %v2184 = vmax.f32 %v2182, %v2183
      %v2185 = vrot.slane %v2184, 2
      %v2186 = vmax.f32 %v2184, %v2185
      %v2187 = vrot.slane %v2186, 1
      %v2188 = vmax.f32 %v2186, %v2187
      %v2189 = vsel %vm1418, %v1184, -inf
      %v2190 = vrot.slane %v2189, 4
      %v2191 = vmax.f32 %v2189, %v2190
      %v2192 = vrot.slane %v2191, 2
      %v2193 = vmax.f32 %v2191, %v2192
      %v2194 = vrot.slane %v2193, 1
      %v2195 = vmax.f32 %v2193, %v2194
      %v2196 = vsel %vm1418, %v1329, -inf
      %v2197 = vrot.slane %v2196, 4
      %v2198 = vmax.f32 %v2196, %v2197
      %v2199 = vrot.slane %v2198, 2
      %v2200 = vmax.f32 %v2198, %v2199
      %v2201 = vrot.slane %v2200, 1
      %v2202 = vmax.f32 %v2200, %v2201
      %v2203 = vsel %vm1418, %v1185, -inf
      %v2204 = vrot.slane %v2203, 4
      %v2205 = vmax.f32 %v2203, %v2204
      %v2206 = vrot.slane %v2205, 2
      %v2207 = vmax.f32 %v2205, %v2206
      %v2208 = vrot.slane %v2207, 1
      %v2209 = vmax.f32 %v2207, %v2208
      %v2210 = vsel %vm1418, %v1330, -inf
      %v2211 = vrot.slane %v2210, 4
      %v2212 = vmax.f32 %v2210, %v2211
      %v2213 = vrot.slane %v2212, 2
      %v2214 = vmax.f32 %v2212, %v2213
      %v2215 = vrot.slane %v2214, 1
      %v2216 = vmax.f32 %v2214, %v2215
      %v2217 = vsel %vm1418, %v1186, -inf
      %v2218 = vrot.slane %v2217, 4
      %v2219 = vmax.f32 %v2217, %v2218
      %v2220 = vrot.slane %v2219, 2
      %v2221 = vmax.f32 %v2219, %v2220
      %v2222 = vrot.slane %v2221, 1
      %v2223 = vmax.f32 %v2221, %v2222
      %v2224 = vsel %vm1418, %v1331, -inf
      %v2225 = vrot.slane %v2224, 4
      %v2226 = vmax.f32 %v2224, %v2225
      %v2227 = vrot.slane %v2226, 2
      %v2228 = vmax.f32 %v2226, %v2227
      %v2229 = vrot.slane %v2228, 1
      %v2230 = vmax.f32 %v2228, %v2229
      %v2231 = vsel %vm1418, %v1187, -inf
      %v2232 = vrot.slane %v2231, 4
      %v2233 = vmax.f32 %v2231, %v2232
      %v2234 = vrot.slane %v2233, 2
      %v2235 = vmax.f32 %v2233, %v2234
      %v2236 = vrot.slane %v2235, 1
      %v2237 = vmax.f32 %v2235, %v2236
      %v2238 = vsel %vm1418, %v1332, -inf
      %v2239 = vrot.slane %v2238, 4
      %v2240 = vmax.f32 %v2238, %v2239
      %v2241 = vrot.slane %v2240, 2
      %v2242 = vmax.f32 %v2240, %v2241
      %v2243 = vrot.slane %v2242, 1
      %v2244 = vmax.f32 %v2242, %v2243
      %v2245 = vsel %vm1418, %v1188, -inf
      %v2246 = vrot.slane %v2245, 4
      %v2247 = vmax.f32 %v2245, %v2246
      %v2248 = vrot.slane %v2247, 2
      %v2249 = vmax.f32 %v2247, %v2248
      %v2250 = vrot.slane %v2249, 1
      %v2251 = vmax.f32 %v2249, %v2250
      %v2252 = vsel %vm1418, %v1333, -inf
      %v2253 = vrot.slane %v2252, 4
      %v2254 = vmax.f32 %v2252, %v2253
      %v2255 = vrot.slane %v2254, 2
      %v2256 = vmax.f32 %v2254, %v2255
      %v2257 = vrot.slane %v2256, 1
      %v2258 = vmax.f32 %v2256, %v2257
      %v2259 = vsel %vm1418, %v1189, -inf
      %v2260 = vrot.slane %v2259, 4
      %v2261 = vmax.f32 %v2259, %v2260
      %v2262 = vrot.slane %v2261, 2
      %v2263 = vmax.f32 %v2261, %v2262
      %v2264 = vrot.slane %v2263, 1
      %v2265 = vmax.f32 %v2263, %v2264
      %v2266 = vsel %vm1418, %v1334, -inf
      %v2267 = vrot.slane %v2266, 4
      %v2268 = vmax.f32 %v2266, %v2267
      %v2269 = vrot.slane %v2268, 2
      %v2270 = vmax.f32 %v2268, %v2269
      %v2271 = vrot.slane %v2270, 1
      %v2272 = vmax.f32 %v2270, %v2271
      %v2273 = vsel %vm1418, %v1190, -inf
      %v2274 = vrot.slane %v2273, 4
      %v2275 = vmax.f32 %v2273, %v2274
      %v2276 = vrot.slane %v2275, 2
      %v2277 = vmax.f32 %v2275, %v2276
      %v2278 = vrot.slane %v2277, 1
      %v2279 = vmax.f32 %v2277, %v2278
      %v2280 = vsel %vm1418, %v1335, -inf
      %v2281 = vrot.slane %v2280, 4
      %v2282 = vmax.f32 %v2280, %v2281
      %v2283 = vrot.slane %v2282, 2
      %v2284 = vmax.f32 %v2282, %v2283
      %v2285 = vrot.slane %v2284, 1
      %v2286 = vmax.f32 %v2284, %v2285
      %v2287 = vsel %vm1418, %v1191, -inf
      %v2288 = vrot.slane %v2287, 4
      %v2289 = vmax.f32 %v2287, %v2288
      %v2290 = vrot.slane %v2289, 2
      %v2291 = vmax.f32 %v2289, %v2290
      %v2292 = vrot.slane %v2291, 1
      %v2293 = vmax.f32 %v2291, %v2292
      %v2294 = vsel %vm1418, %v1336, -inf
      %v2295 = vrot.slane %v2294, 4
      %v2296 = vmax.f32 %v2294, %v2295
      %v2297 = vrot.slane %v2296, 2
      %v2298 = vmax.f32 %v2296, %v2297
      %v2299 = vrot.slane %v2298, 1
      %v2300 = vmax.f32 %v2298, %v2299
      %v2301 = vsel %vm1418, %v1192, -inf
      %v2302 = vrot.slane %v2301, 4
      %v2303 = vmax.f32 %v2301, %v2302
      %v2304 = vrot.slane %v2303, 2
      %v2305 = vmax.f32 %v2303, %v2304
      %v2306 = vrot.slane %v2305, 1
      %v2307 = vmax.f32 %v2305, %v2306
      %v2308 = vsel %vm1418, %v1337, -inf
      %v2309 = vrot.slane %v2308, 4
      %v2310 = vmax.f32 %v2308, %v2309
      %v2311 = vrot.slane %v2310, 2
      %v2312 = vmax.f32 %v2310, %v2311
      %v2313 = vrot.slane %v2312, 1
      %v2314 = vmax.f32 %v2312, %v2313
      %v2315 = vsel %vm1418, %v1193, -inf
      %v2316 = vrot.slane %v2315, 4
      %v2317 = vmax.f32 %v2315, %v2316
      %v2318 = vrot.slane %v2317, 2
      %v2319 = vmax.f32 %v2317, %v2318
      %v2320 = vrot.slane %v2319, 1
      %v2321 = vmax.f32 %v2319, %v2320
      %v2322 = vsel %vm1418, %v1338, -inf
      %v2323 = vrot.slane %v2322, 4
      %v2324 = vmax.f32 %v2322, %v2323
      %v2325 = vrot.slane %v2324, 2
      %v2326 = vmax.f32 %v2324, %v2325
      %v2327 = vrot.slane %v2326, 1
      %v2328 = vmax.f32 %v2326, %v2327
      %v2329 = vsel %vm1418, %v1194, -inf
      %v2330 = vrot.slane %v2329, 4
      %v2331 = vmax.f32 %v2329, %v2330
      %v2332 = vrot.slane %v2331, 2
      %v2333 = vmax.f32 %v2331, %v2332
      %v2334 = vrot.slane %v2333, 1
      %v2335 = vmax.f32 %v2333, %v2334
      %v2336 = vsel %vm1418, %v1339, -inf
      %v2337 = vrot.slane %v2336, 4
      %v2338 = vmax.f32 %v2336, %v2337
      %v2339 = vrot.slane %v2338, 2
      %v2340 = vmax.f32 %v2338, %v2339
      %v2341 = vrot.slane %v2340, 1
      %v2342 = vmax.f32 %v2340, %v2341
      %v2343 = vsel %vm1418, %v1195, -inf
      %v2344 = vrot.slane %v2343, 4
      %v2345 = vmax.f32 %v2343, %v2344
      %v2346 = vrot.slane %v2345, 2
      %v2347 = vmax.f32 %v2345, %v2346
      %v2348 = vrot.slane %v2347, 1
      %v2349 = vmax.f32 %v2347, %v2348
      %v2350 = vsel %vm1418, %v1340, -inf
      %v2351 = vrot.slane %v2350, 4
      %v2352 = vmax.f32 %v2350, %v2351
      %v2353 = vrot.slane %v2352, 2
      %v2354 = vmax.f32 %v2352, %v2353
      %v2355 = vrot.slane %v2354, 1
      %v2356 = vmax.f32 %v2354, %v2355
      %v2357 = vsel %vm1418, %v1196, -inf
      %v2358 = vrot.slane %v2357, 4
      %v2359 = vmax.f32 %v2357, %v2358
      %v2360 = vrot.slane %v2359, 2
      %v2361 = vmax.f32 %v2359, %v2360
      %v2362 = vrot.slane %v2361, 1
      %v2363 = vmax.f32 %v2361, %v2362
      %v2364 = vsel %vm1418, %v1341, -inf
      %v2365 = vrot.slane %v2364, 4
      %v2366 = vmax.f32 %v2364, %v2365
      %v2367 = vrot.slane %v2366, 2
      %v2368 = vmax.f32 %v2366, %v2367
      %v2369 = vrot.slane %v2368, 1
      %v2370 = vmax.f32 %v2368, %v2369
      %v2371 = vsel %vm1418, %v1197, -inf
      %v2372 = vrot.slane %v2371, 4
      %v2373 = vmax.f32 %v2371, %v2372
      %v2374 = vrot.slane %v2373, 2
      %v2375 = vmax.f32 %v2373, %v2374
      %v2376 = vrot.slane %v2375, 1
      %v2377 = vmax.f32 %v2375, %v2376
      %v2378 = vsel %vm1418, %v1342, -inf
      %v2379 = vrot.slane %v2378, 4
      %v2380 = vmax.f32 %v2378, %v2379
      %v2381 = vrot.slane %v2380, 2
      %v2382 = vmax.f32 %v2380, %v2381
      %v2383 = vrot.slane %v2382, 1
      %v2384 = vmax.f32 %v2382, %v2383
      %v2385 = vsel %vm1418, %v1198, -inf
      %v2386 = vrot.slane %v2385, 4
      %v2387 = vmax.f32 %v2385, %v2386
      %v2388 = vrot.slane %v2387, 2
      %v2389 = vmax.f32 %v2387, %v2388
      %v2390 = vrot.slane %v2389, 1
      %v2391 = vmax.f32 %v2389, %v2390
      %v2392 = vsel %vm1418, %v1343, -inf
      %v2393 = vrot.slane %v2392, 4
      %v2394 = vmax.f32 %v2392, %v2393
      %v2395 = vrot.slane %v2394, 2
      %v2396 = vmax.f32 %v2394, %v2395
      %v2397 = vrot.slane %v2396, 1
      %v2398 = vmax.f32 %v2396, %v2397
      %v2399 = vsel %vm1418, %v1199, -inf
      %v2400 = vrot.slane %v2399, 4
      %v2401 = vmax.f32 %v2399, %v2400
      %v2402 = vrot.slane %v2401, 2
      %v2403 = vmax.f32 %v2401, %v2402
      %v2404 = vrot.slane %v2403, 1
      %v2405 = vmax.f32 %v2403, %v2404
      %v2406 = vsel %vm1418, %v1344, -inf
      %v2407 = vrot.slane %v2406, 4
      %v2408 = vmax.f32 %v2406, %v2407
      %v2409 = vrot.slane %v2408, 2
      %v2410 = vmax.f32 %v2408, %v2409
      %v2411 = vrot.slane %v2410, 1
      %v2412 = vmax.f32 %v2410, %v2411
      %v2413 = vsel %vm1418, %v1200, -inf
      %v2414 = vrot.slane %v2413, 4
      %v2415 = vmax.f32 %v2413, %v2414
      %v2416 = vrot.slane %v2415, 2
      %v2417 = vmax.f32 %v2415, %v2416
      %v2418 = vrot.slane %v2417, 1
      %v2419 = vmax.f32 %v2417, %v2418
      %v2420 = vsel %vm1418, %v1345, -inf
      %v2421 = vrot.slane %v2420, 4
      %v2422 = vmax.f32 %v2420, %v2421
      %v2423 = vrot.slane %v2422, 2
      %v2424 = vmax.f32 %v2422, %v2423
      %v2425 = vrot.slane %v2424, 1
      %v2426 = vmax.f32 %v2424, %v2425
      %v2427 = vsel %vm1418, %v1201, -inf
      %v2428 = vrot.slane %v2427, 4
      %v2429 = vmax.f32 %v2427, %v2428
      %v2430 = vrot.slane %v2429, 2
      %v2431 = vmax.f32 %v2429, %v2430
      %v2432 = vrot.slane %v2431, 1
      %v2433 = vmax.f32 %v2431, %v2432
      %v2434 = vpack.c.bf16 %v1425, %v1425
      %v2435 = vpack.c.bf16 %v1432, %v1432
      %v2436 = vpack.c.bf16 %v1439, %v1439
      %v2437 = vpack.c.bf16 %v1446, %v1446
      %v2438 = vpack.c.bf16 %v1453, %v1453
      %v2439 = vpack.c.bf16 %v1460, %v1460
      %v2440 = vpack.c.bf16 %v1467, %v1467
      %v2441 = vpack.c.bf16 %v1474, %v1474
      %v2442 = vpack.c.bf16 %v1481, %v1481
      %v2443 = vpack.c.bf16 %v1488, %v1488
      %v2444 = vpack.c.bf16 %v1495, %v1495
      %v2445 = vpack.c.bf16 %v1502, %v1502
      %v2446 = vpack.c.bf16 %v1509, %v1509
      %v2447 = vpack.c.bf16 %v1516, %v1516
      %v2448 = vpack.c.bf16 %v1523, %v1523
      %v2449 = vpack.c.bf16 %v1530, %v1530
      %v2450 = vpack.c.bf16 %v1537, %v1537
      %v2451 = vpack.c.bf16 %v1544, %v1544
      %v2452 = vpack.c.bf16 %v1551, %v1551
      %v2453 = vpack.c.bf16 %v1558, %v1558
      %v2454 = vpack.c.bf16 %v1565, %v1565
      %v2455 = vpack.c.bf16 %v1572, %v1572
      %v2456 = vpack.c.bf16 %v1579, %v1579
      %v2457 = vpack.c.bf16 %v1586, %v1586
      %v2458 = vpack.c.bf16 %v1593, %v1593
      %v2459 = vpack.c.bf16 %v1600, %v1600
      %v2460 = vpack.c.bf16 %v1607, %v1607
      %v2461 = vpack.c.bf16 %v1614, %v1614
      %v2462 = vpack.c.bf16 %v1621, %v1621
      %v2463 = vpack.c.bf16 %v1628, %v1628
      %v2464 = vpack.c.bf16 %v1635, %v1635
      %v2465 = vpack.c.bf16 %v1642, %v1642
      %v2466 = vpack.c.bf16 %v1649, %v1649
      %v2467 = vpack.c.bf16 %v1656, %v1656
      %v2468 = vpack.c.bf16 %v1663, %v1663
      %v2469 = vpack.c.bf16 %v1670, %v1670
      %v2470 = vpack.c.bf16 %v1677, %v1677
      %v2471 = vpack.c.bf16 %v1684, %v1684
      %v2472 = vpack.c.bf16 %v1691, %v1691
      %v2473 = vpack.c.bf16 %v1698, %v1698
      %v2474 = vpack.c.bf16 %v1705, %v1705
      %v2475 = vpack.c.bf16 %v1712, %v1712
      %v2476 = vpack.c.bf16 %v1719, %v1719
      %v2477 = vpack.c.bf16 %v1726, %v1726
      %v2478 = vpack.c.bf16 %v1733, %v1733
      %v2479 = vpack.c.bf16 %v1740, %v1740
      %v2480 = vpack.c.bf16 %v1747, %v1747
      %v2481 = vpack.c.bf16 %v1754, %v1754
      %v2482 = vpack.c.bf16 %v1761, %v1761
      %v2483 = vpack.c.bf16 %v1768, %v1768
      %v2484 = vpack.c.bf16 %v1775, %v1775
      %v2485 = vpack.c.bf16 %v1782, %v1782
      %v2486 = vpack.c.bf16 %v1789, %v1789
      %v2487 = vpack.c.bf16 %v1796, %v1796
      %v2488 = vpack.c.bf16 %v1803, %v1803
      %v2489 = vpack.c.bf16 %v1810, %v1810
      %v2490 = vpack.c.bf16 %v1817, %v1817
      %v2491 = vpack.c.bf16 %v1824, %v1824
      %v2492 = vpack.c.bf16 %v1831, %v1831
      %v2493 = vpack.c.bf16 %v1838, %v1838
      %v2494 = vpack.c.bf16 %v1845, %v1845
      %v2495 = vpack.c.bf16 %v1852, %v1852
      %v2496 = vpack.c.bf16 %v1859, %v1859
      %v2497 = vpack.c.bf16 %v1866, %v1866
      %v2498 = vpack.c.bf16 %v1873, %v1873
      %v2499 = vpack.c.bf16 %v1880, %v1880
      %v2500 = vpack.c.bf16 %v1887, %v1887
      %v2501 = vpack.c.bf16 %v1894, %v1894
      %v2502 = vpack.c.bf16 %v1901, %v1901
      %v2503 = vpack.c.bf16 %v1908, %v1908
      %v2504 = vpack.c.bf16 %v1915, %v1915
      %v2505 = vpack.c.bf16 %v1922, %v1922
      %v2506 = vpack.c.bf16 %v1929, %v1929
      %v2507 = vpack.c.bf16 %v1936, %v1936
      %v2508 = vpack.c.bf16 %v1943, %v1943
      %v2509 = vpack.c.bf16 %v1950, %v1950
      %v2510 = vpack.c.bf16 %v1957, %v1957
      %v2511 = vpack.c.bf16 %v1964, %v1964
      %v2512 = vpack.c.bf16 %v1971, %v1971
      %v2513 = vpack.c.bf16 %v1978, %v1978
      %v2514 = vpack.c.bf16 %v1985, %v1985
      %v2515 = vpack.c.bf16 %v1992, %v1992
      %v2516 = vpack.c.bf16 %v1999, %v1999
      %v2517 = vpack.c.bf16 %v2006, %v2006
      %v2518 = vpack.c.bf16 %v2013, %v2013
      %v2519 = vpack.c.bf16 %v2020, %v2020
      %v2520 = vpack.c.bf16 %v2027, %v2027
      %v2521 = vpack.c.bf16 %v2034, %v2034
      %v2522 = vpack.c.bf16 %v2041, %v2041
      %v2523 = vpack.c.bf16 %v2048, %v2048
      %v2524 = vpack.c.bf16 %v2055, %v2055
      %v2525 = vpack.c.bf16 %v2062, %v2062
      %v2526 = vpack.c.bf16 %v2069, %v2069
      %v2527 = vpack.c.bf16 %v2076, %v2076
      %v2528 = vpack.c.bf16 %v2083, %v2083
      %v2529 = vpack.c.bf16 %v2090, %v2090
      %v2530 = vpack.c.bf16 %v2097, %v2097
      %v2531 = vpack.c.bf16 %v2104, %v2104
      %v2532 = vpack.c.bf16 %v2111, %v2111
      %v2533 = vpack.c.bf16 %v2118, %v2118
      %v2534 = vpack.c.bf16 %v2125, %v2125
      %v2535 = vpack.c.bf16 %v2132, %v2132
      %v2536 = vpack.c.bf16 %v2139, %v2139
      %v2537 = vpack.c.bf16 %v2146, %v2146
      %v2538 = vpack.c.bf16 %v2153, %v2153
      %v2539 = vpack.c.bf16 %v2160, %v2160
      %v2540 = vpack.c.bf16 %v2167, %v2167
      %v2541 = vpack.c.bf16 %v2174, %v2174
      %v2542 = vpack.c.bf16 %v2181, %v2181
      %v2543 = vpack.c.bf16 %v2188, %v2188
      %v2544 = vpack.c.bf16 %v2195, %v2195
      %v2545 = vpack.c.bf16 %v2202, %v2202
      %v2546 = vpack.c.bf16 %v2209, %v2209
      %v2547 = vpack.c.bf16 %v2216, %v2216
      %v2548 = vpack.c.bf16 %v2223, %v2223
      %v2549 = vpack.c.bf16 %v2230, %v2230
      %v2550 = vpack.c.bf16 %v2237, %v2237
      %v2551 = vpack.c.bf16 %v2244, %v2244
      %v2552 = vpack.c.bf16 %v2251, %v2251
      %v2553 = vpack.c.bf16 %v2258, %v2258
      %v2554 = vpack.c.bf16 %v2265, %v2265
      %v2555 = vpack.c.bf16 %v2272, %v2272
      %v2556 = vpack.c.bf16 %v2279, %v2279
      %v2557 = vpack.c.bf16 %v2286, %v2286
      %v2558 = vpack.c.bf16 %v2293, %v2293
      %v2559 = vpack.c.bf16 %v2300, %v2300
      %v2560 = vpack.c.bf16 %v2307, %v2307
      %v2561 = vpack.c.bf16 %v2314, %v2314
      %v2562 = vpack.c.bf16 %v2321, %v2321
      %v2563 = vpack.c.bf16 %v2328, %v2328
      %v2564 = vpack.c.bf16 %v2335, %v2335
      %v2565 = vpack.c.bf16 %v2342, %v2342
      %v2566 = vpack.c.bf16 %v2349, %v2349
      %v2567 = vpack.c.bf16 %v2356, %v2356
      %v2568 = vpack.c.bf16 %v2363, %v2363
      %v2569 = vpack.c.bf16 %v2370, %v2370
      %v2570 = vpack.c.bf16 %v2377, %v2377
      %v2571 = vpack.c.bf16 %v2384, %v2384
      %v2572 = vpack.c.bf16 %v2391, %v2391
      %v2573 = vpack.c.bf16 %v2398, %v2398
      %v2574 = vpack.c.bf16 %v2405, %v2405
      %v2575 = vpack.c.bf16 %v2412, %v2412
      %v2576 = vpack.c.bf16 %v2419, %v2419
      %v2577 = vpack.c.bf16 %v2426, %v2426
      %v2578 = vpack.c.bf16 %v2433, %v2433
      %v2724 = vunpack.c.l.b16 %v2434
      %v2725 = vunpack.c.l.b16 %v2435
      %v2726 = vunpack.c.l.b16 %v2436
      %v2727 = vunpack.c.l.b16 %v2437
      %v2728 = vunpack.c.l.b16 %v2438
      %v2729 = vunpack.c.l.b16 %v2439
      %v2730 = vunpack.c.l.b16 %v2440
      %v2731 = vunpack.c.l.b16 %v2441
      %v2732 = vunpack.c.l.b16 %v2442
      %v2733 = vunpack.c.l.b16 %v2443
      %v2734 = vunpack.c.l.b16 %v2444
      %v2735 = vunpack.c.l.b16 %v2445
      %v2736 = vunpack.c.l.b16 %v2446
      %v2737 = vunpack.c.l.b16 %v2447
      %v2738 = vunpack.c.l.b16 %v2448
      %v2739 = vunpack.c.l.b16 %v2449
      %v2740 = vunpack.c.l.b16 %v2450
      %v2741 = vunpack.c.l.b16 %v2451
      %v2742 = vunpack.c.l.b16 %v2452
      %v2743 = vunpack.c.l.b16 %v2453
      %v2744 = vunpack.c.l.b16 %v2454
      %v2745 = vunpack.c.l.b16 %v2455
      %v2746 = vunpack.c.l.b16 %v2456
      %v2747 = vunpack.c.l.b16 %v2457
      %v2748 = vunpack.c.l.b16 %v2458
      %v2749 = vunpack.c.l.b16 %v2459
      %v2750 = vunpack.c.l.b16 %v2460
      %v2751 = vunpack.c.l.b16 %v2461
      %v2752 = vunpack.c.l.b16 %v2462
      %v2753 = vunpack.c.l.b16 %v2463
      %v2754 = vunpack.c.l.b16 %v2464
      %v2755 = vunpack.c.l.b16 %v2465
      %v2756 = vunpack.c.l.b16 %v2466
      %v2757 = vunpack.c.l.b16 %v2467
      %v2758 = vunpack.c.l.b16 %v2468
      %v2759 = vunpack.c.l.b16 %v2469
      %v2760 = vunpack.c.l.b16 %v2470
      %v2761 = vunpack.c.l.b16 %v2471
      %v2762 = vunpack.c.l.b16 %v2472
      %v2763 = vunpack.c.l.b16 %v2473
      %v2764 = vunpack.c.l.b16 %v2474
      %v2765 = vunpack.c.l.b16 %v2475
      %v2766 = vunpack.c.l.b16 %v2476
      %v2767 = vunpack.c.l.b16 %v2477
      %v2768 = vunpack.c.l.b16 %v2478
      %v2769 = vunpack.c.l.b16 %v2479
      %v2770 = vunpack.c.l.b16 %v2480
      %v2771 = vunpack.c.l.b16 %v2481
      %v2772 = vunpack.c.l.b16 %v2482
      %v2773 = vunpack.c.l.b16 %v2483
      %v2774 = vunpack.c.l.b16 %v2484
      %v2775 = vunpack.c.l.b16 %v2485
      %v2776 = vunpack.c.l.b16 %v2486
      %v2777 = vunpack.c.l.b16 %v2487
      %v2778 = vunpack.c.l.b16 %v2488
      %v2779 = vunpack.c.l.b16 %v2489
      %v2780 = vunpack.c.l.b16 %v2490
      %v2781 = vunpack.c.l.b16 %v2491
      %v2782 = vunpack.c.l.b16 %v2492
      %v2783 = vunpack.c.l.b16 %v2493
      %v2784 = vunpack.c.l.b16 %v2494
      %v2785 = vunpack.c.l.b16 %v2495
      %v2786 = vunpack.c.l.b16 %v2496
      %v2787 = vunpack.c.l.b16 %v2497
      %v2788 = vunpack.c.l.b16 %v2498
      %v2789 = vunpack.c.l.b16 %v2499
      %v2790 = vunpack.c.l.b16 %v2500
      %v2791 = vunpack.c.l.b16 %v2501
      %v2792 = vunpack.c.l.b16 %v2502
      %v2793 = vunpack.c.l.b16 %v2503
      %v2794 = vunpack.c.l.b16 %v2504
      %v2795 = vunpack.c.l.b16 %v2505
      %v2796 = vunpack.c.l.b16 %v2506
      %v2797 = vunpack.c.l.b16 %v2507
      %v2798 = vunpack.c.l.b16 %v2508
      %v2799 = vunpack.c.l.b16 %v2509
      %v2800 = vunpack.c.l.b16 %v2510
      %v2801 = vunpack.c.l.b16 %v2511
      %v2802 = vunpack.c.l.b16 %v2512
      %v2803 = vunpack.c.l.b16 %v2513
      %v2804 = vunpack.c.l.b16 %v2514
      %v2805 = vunpack.c.l.b16 %v2515
      %v2806 = vunpack.c.l.b16 %v2516
      %v2807 = vunpack.c.l.b16 %v2517
      %v2808 = vunpack.c.l.b16 %v2518
      %v2809 = vunpack.c.l.b16 %v2519
      %v2810 = vunpack.c.l.b16 %v2520
      %v2811 = vunpack.c.l.b16 %v2521
      %v2812 = vunpack.c.l.b16 %v2522
      %v2813 = vunpack.c.l.b16 %v2523
      %v2814 = vunpack.c.l.b16 %v2524
      %v2815 = vunpack.c.l.b16 %v2525
      %v2816 = vunpack.c.l.b16 %v2526
      %v2817 = vunpack.c.l.b16 %v2527
      %v2818 = vunpack.c.l.b16 %v2528
      %v2819 = vunpack.c.l.b16 %v2529
      %v2820 = vunpack.c.l.b16 %v2530
      %v2821 = vunpack.c.l.b16 %v2531
      %v2822 = vunpack.c.l.b16 %v2532
      %v2823 = vunpack.c.l.b16 %v2533
      %v2824 = vunpack.c.l.b16 %v2534
      %v2825 = vunpack.c.l.b16 %v2535
      %v2826 = vunpack.c.l.b16 %v2536
      %v2827 = vunpack.c.l.b16 %v2537
      %v2828 = vunpack.c.l.b16 %v2538
      %v2829 = vunpack.c.l.b16 %v2539
      %v2830 = vunpack.c.l.b16 %v2540
      %v2831 = vunpack.c.l.b16 %v2541
      %v2832 = vunpack.c.l.b16 %v2542
      %v2833 = vunpack.c.l.b16 %v2543
      %v2834 = vunpack.c.l.b16 %v2544
      %v2835 = vunpack.c.l.b16 %v2545
      %v2836 = vunpack.c.l.b16 %v2546
      %v2837 = vunpack.c.l.b16 %v2547
      %v2838 = vunpack.c.l.b16 %v2548
      %v2839 = vunpack.c.l.b16 %v2549
      %v2840 = vunpack.c.l.b16 %v2550
      %v2841 = vunpack.c.l.b16 %v2551
      %v2842 = vunpack.c.l.b16 %v2552
      %v2843 = vunpack.c.l.b16 %v2553
      %v2844 = vunpack.c.l.b16 %v2554
      %v2845 = vunpack.c.l.b16 %v2555
      %v2846 = vunpack.c.l.b16 %v2556
      %v2847 = vunpack.c.l.b16 %v2557
      %v2848 = vunpack.c.l.b16 %v2558
      %v2849 = vunpack.c.l.b16 %v2559
      %v2850 = vunpack.c.l.b16 %v2560
      %v2851 = vunpack.c.l.b16 %v2561
      %v2852 = vunpack.c.l.b16 %v2562
      %v2853 = vunpack.c.l.b16 %v2563
      %v2854 = vunpack.c.l.b16 %v2564
      %v2855 = vunpack.c.l.b16 %v2565
      %v2856 = vunpack.c.l.b16 %v2566
      %v2857 = vunpack.c.l.b16 %v2567
      %v2858 = vunpack.c.l.b16 %v2568
      %v2859 = vunpack.c.l.b16 %v2569
      %v2860 = vunpack.c.l.b16 %v2570
      %v2861 = vunpack.c.l.b16 %v2571
      %v2862 = vunpack.c.l.b16 %v2572
      %v2863 = vunpack.c.l.b16 %v2573
      %v2864 = vunpack.c.l.b16 %v2574
      %v2865 = vunpack.c.l.b16 %v2575
      %v2866 = vunpack.c.l.b16 %v2576
      %v2867 = vunpack.c.l.b16 %v2577
      %v2868 = vunpack.c.l.b16 %v2578
      %v2869 = vpack.c.b16 %v2724, %v2724
      %v2870 = vpack.c.b16 %v2725, %v2725
      %v2871 = vpack.c.b16 %v2726, %v2726
      %v2872 = vpack.c.b16 %v2727, %v2727
      %v2873 = vpack.c.b16 %v2728, %v2728
      %v2874 = vpack.c.b16 %v2729, %v2729
      %v2875 = vpack.c.b16 %v2730, %v2730
      %v2876 = vpack.c.b16 %v2731, %v2731
      %v2877 = vpack.c.b16 %v2732, %v2732
      %v2878 = vpack.c.b16 %v2733, %v2733
      %v2879 = vpack.c.b16 %v2734, %v2734
      %v2880 = vpack.c.b16 %v2735, %v2735
      %v2881 = vpack.c.b16 %v2736, %v2736
      %v2882 = vpack.c.b16 %v2737, %v2737
      %v2883 = vpack.c.b16 %v2738, %v2738
      %v2884 = vpack.c.b16 %v2739, %v2739
      %v2885 = vpack.c.b16 %v2740, %v2740
      %v2886 = vpack.c.b16 %v2741, %v2741
      %v2887 = vpack.c.b16 %v2742, %v2742
      %v2888 = vpack.c.b16 %v2743, %v2743
      %v2889 = vpack.c.b16 %v2744, %v2744
      %v2890 = vpack.c.b16 %v2745, %v2745
      %v2891 = vpack.c.b16 %v2746, %v2746
      %v2892 = vpack.c.b16 %v2747, %v2747
      %v2893 = vpack.c.b16 %v2748, %v2748
      %v2894 = vpack.c.b16 %v2749, %v2749
      %v2895 = vpack.c.b16 %v2750, %v2750
      %v2896 = vpack.c.b16 %v2751, %v2751
      %v2897 = vpack.c.b16 %v2752, %v2752
      %v2898 = vpack.c.b16 %v2753, %v2753
      %v2899 = vpack.c.b16 %v2754, %v2754
      %v2900 = vpack.c.b16 %v2755, %v2755
      %v2901 = vpack.c.b16 %v2756, %v2756
      %v2902 = vpack.c.b16 %v2757, %v2757
      %v2903 = vpack.c.b16 %v2758, %v2758
      %v2904 = vpack.c.b16 %v2759, %v2759
      %v2905 = vpack.c.b16 %v2760, %v2760
      %v2906 = vpack.c.b16 %v2761, %v2761
      %v2907 = vpack.c.b16 %v2762, %v2762
      %v2908 = vpack.c.b16 %v2763, %v2763
      %v2909 = vpack.c.b16 %v2764, %v2764
      %v2910 = vpack.c.b16 %v2765, %v2765
      %v2911 = vpack.c.b16 %v2766, %v2766
      %v2912 = vpack.c.b16 %v2767, %v2767
      %v2913 = vpack.c.b16 %v2768, %v2768
      %v2914 = vpack.c.b16 %v2769, %v2769
      %v2915 = vpack.c.b16 %v2770, %v2770
      %v2916 = vpack.c.b16 %v2771, %v2771
      %v2917 = vpack.c.b16 %v2772, %v2772
      %v2918 = vpack.c.b16 %v2773, %v2773
      %v2919 = vpack.c.b16 %v2774, %v2774
      %v2920 = vpack.c.b16 %v2775, %v2775
      %v2921 = vpack.c.b16 %v2776, %v2776
      %v2922 = vpack.c.b16 %v2777, %v2777
      %v2923 = vpack.c.b16 %v2778, %v2778
      %v2924 = vpack.c.b16 %v2779, %v2779
      %v2925 = vpack.c.b16 %v2780, %v2780
      %v2926 = vpack.c.b16 %v2781, %v2781
      %v2927 = vpack.c.b16 %v2782, %v2782
      %v2928 = vpack.c.b16 %v2783, %v2783
      %v2929 = vpack.c.b16 %v2784, %v2784
      %v2930 = vpack.c.b16 %v2785, %v2785
      %v2931 = vpack.c.b16 %v2786, %v2786
      %v2932 = vpack.c.b16 %v2787, %v2787
      %v2933 = vpack.c.b16 %v2788, %v2788
      %v2934 = vpack.c.b16 %v2789, %v2789
      %v2935 = vpack.c.b16 %v2790, %v2790
      %v2936 = vpack.c.b16 %v2791, %v2791
      %v2937 = vpack.c.b16 %v2792, %v2792
      %v2938 = vpack.c.b16 %v2793, %v2793
      %v2939 = vpack.c.b16 %v2794, %v2794
      %v2940 = vpack.c.b16 %v2795, %v2795
      %v2941 = vpack.c.b16 %v2796, %v2796
      %v2942 = vpack.c.b16 %v2797, %v2797
      %v2943 = vpack.c.b16 %v2798, %v2798
      %v2944 = vpack.c.b16 %v2799, %v2799
      %v2945 = vpack.c.b16 %v2800, %v2800
      %v2946 = vpack.c.b16 %v2801, %v2801
      %v2947 = vpack.c.b16 %v2802, %v2802
      %v2948 = vpack.c.b16 %v2803, %v2803
      %v2949 = vpack.c.b16 %v2804, %v2804
      %v2950 = vpack.c.b16 %v2805, %v2805
      %v2951 = vpack.c.b16 %v2806, %v2806
      %v2952 = vpack.c.b16 %v2807, %v2807
      %v2953 = vpack.c.b16 %v2808, %v2808
      %v2954 = vpack.c.b16 %v2809, %v2809
      %v2955 = vpack.c.b16 %v2810, %v2810
      %v2956 = vpack.c.b16 %v2811, %v2811
      %v2957 = vpack.c.b16 %v2812, %v2812
      %v2958 = vpack.c.b16 %v2813, %v2813
      %v2959 = vpack.c.b16 %v2814, %v2814
      %v2960 = vpack.c.b16 %v2815, %v2815
      %v2961 = vpack.c.b16 %v2816, %v2816
      %v2962 = vpack.c.b16 %v2817, %v2817
      %v2963 = vpack.c.b16 %v2818, %v2818
      %v2964 = vpack.c.b16 %v2819, %v2819
      %v2965 = vpack.c.b16 %v2820, %v2820
      %v2966 = vpack.c.b16 %v2821, %v2821
      %v2967 = vpack.c.b16 %v2822, %v2822
      %v2968 = vpack.c.b16 %v2823, %v2823
      %v2969 = vpack.c.b16 %v2824, %v2824
      %v2970 = vpack.c.b16 %v2825, %v2825
      %v2971 = vpack.c.b16 %v2826, %v2826
      %v2972 = vpack.c.b16 %v2827, %v2827
      %v2973 = vpack.c.b16 %v2828, %v2828
      %v2974 = vpack.c.b16 %v2829, %v2829
      %v2975 = vpack.c.b16 %v2830, %v2830
      %v2976 = vpack.c.b16 %v2831, %v2831
      %v2977 = vpack.c.b16 %v2832, %v2832
      %v2978 = vpack.c.b16 %v2833, %v2833
      %v2979 = vpack.c.b16 %v2834, %v2834
      %v2980 = vpack.c.b16 %v2835, %v2835
      %v2981 = vpack.c.b16 %v2836, %v2836
      %v2982 = vpack.c.b16 %v2837, %v2837
      %v2983 = vpack.c.b16 %v2838, %v2838
      %v2984 = vpack.c.b16 %v2839, %v2839
      %v2985 = vpack.c.b16 %v2840, %v2840
      %v2986 = vpack.c.b16 %v2841, %v2841
      %v2987 = vpack.c.b16 %v2842, %v2842
      %v2988 = vpack.c.b16 %v2843, %v2843
      %v2989 = vpack.c.b16 %v2844, %v2844
      %v2990 = vpack.c.b16 %v2845, %v2845
      %v2991 = vpack.c.b16 %v2846, %v2846
      %v2992 = vpack.c.b16 %v2847, %v2847
      %v2993 = vpack.c.b16 %v2848, %v2848
      %v2994 = vpack.c.b16 %v2849, %v2849
      %v2995 = vpack.c.b16 %v2850, %v2850
      %v2996 = vpack.c.b16 %v2851, %v2851
      %v2997 = vpack.c.b16 %v2852, %v2852
      %v2998 = vpack.c.b16 %v2853, %v2853
      %v2999 = vpack.c.b16 %v2854, %v2854
      %v3000 = vpack.c.b16 %v2855, %v2855
      %v3001 = vpack.c.b16 %v2856, %v2856
      %v3002 = vpack.c.b16 %v2857, %v2857
      %v3003 = vpack.c.b16 %v2858, %v2858
      %v3004 = vpack.c.b16 %v2859, %v2859
      %v3005 = vpack.c.b16 %v2860, %v2860
      %v3006 = vpack.c.b16 %v2861, %v2861
      %v3007 = vpack.c.b16 %v2862, %v2862
      %v3008 = vpack.c.b16 %v2863, %v2863
      %v3009 = vpack.c.b16 %v2864, %v2864
      %v3010 = vpack.c.b16 %v2865, %v2865
      %v3011 = vpack.c.b16 %v2866, %v2866
      %v3012 = vpack.c.b16 %v2867, %v2867
      %v3013 = vpack.c.b16 %v2868, %v2868
      %v3014 = vunpack.c.l.b16 %v2869
      %v3015 = vunpack.c.l.b16 %v2870
      %v3016 = vunpack.c.l.b16 %v2871
      %v3017 = vunpack.c.l.b16 %v2872
      %v3018 = vunpack.c.l.b16 %v2873
      %v3019 = vunpack.c.l.b16 %v2874
      %v3020 = vunpack.c.l.b16 %v2875
      %v3021 = vunpack.c.l.b16 %v2876
      %v3022 = vunpack.c.l.b16 %v2877
      %v3023 = vunpack.c.l.b16 %v2878
      %v3024 = vunpack.c.l.b16 %v2879
      %v3025 = vunpack.c.l.b16 %v2880
      %v3026 = vunpack.c.l.b16 %v2881
      %v3027 = vunpack.c.l.b16 %v2882
      %v3028 = vunpack.c.l.b16 %v2883
      %v3029 = vunpack.c.l.b16 %v2884
      %v3030 = vunpack.c.l.b16 %v2885
      %v3031 = vunpack.c.l.b16 %v2886
      %v3032 = vunpack.c.l.b16 %v2887
      %v3033 = vunpack.c.l.b16 %v2888
      %v3034 = vunpack.c.l.b16 %v2889
      %v3035 = vunpack.c.l.b16 %v2890
      %v3036 = vunpack.c.l.b16 %v2891
      %v3037 = vunpack.c.l.b16 %v2892
      %v3038 = vunpack.c.l.b16 %v2893
      %v3039 = vunpack.c.l.b16 %v2894
      %v3040 = vunpack.c.l.b16 %v2895
      %v3041 = vunpack.c.l.b16 %v2896
      %v3042 = vunpack.c.l.b16 %v2897
      %v3043 = vunpack.c.l.b16 %v2898
      %v3044 = vunpack.c.l.b16 %v2899
      %v3045 = vunpack.c.l.b16 %v2900
      %v3046 = vunpack.c.l.b16 %v2901
      %v3047 = vunpack.c.l.b16 %v2902
      %v3048 = vunpack.c.l.b16 %v2903
      %v3049 = vunpack.c.l.b16 %v2904
      %v3050 = vunpack.c.l.b16 %v2905
      %v3051 = vunpack.c.l.b16 %v2906
      %v3052 = vunpack.c.l.b16 %v2907
      %v3053 = vunpack.c.l.b16 %v2908
      %v3054 = vunpack.c.l.b16 %v2909
      %v3055 = vunpack.c.l.b16 %v2910
      %v3056 = vunpack.c.l.b16 %v2911
      %v3057 = vunpack.c.l.b16 %v2912
      %v3058 = vunpack.c.l.b16 %v2913
      %v3059 = vunpack.c.l.b16 %v2914
      %v3060 = vunpack.c.l.b16 %v2915
      %v3061 = vunpack.c.l.b16 %v2916
      %v3062 = vunpack.c.l.b16 %v2917
      %v3063 = vunpack.c.l.b16 %v2918
      %v3064 = vunpack.c.l.b16 %v2919
      %v3065 = vunpack.c.l.b16 %v2920
      %v3066 = vunpack.c.l.b16 %v2921
      %v3067 = vunpack.c.l.b16 %v2922
      %v3068 = vunpack.c.l.b16 %v2923
      %v3069 = vunpack.c.l.b16 %v2924
      %v3070 = vunpack.c.l.b16 %v2925
      %v3071 = vunpack.c.l.b16 %v2926
      %v3072 = vunpack.c.l.b16 %v2927
      %v3073 = vunpack.c.l.b16 %v2928
      %v3074 = vunpack.c.l.b16 %v2929
      %v3075 = vunpack.c.l.b16 %v2930
      %v3076 = vunpack.c.l.b16 %v2931
      %v3077 = vunpack.c.l.b16 %v2932
      %v3078 = vunpack.c.l.b16 %v2933
      %v3079 = vunpack.c.l.b16 %v2934
      %v3080 = vunpack.c.l.b16 %v2935
      %v3081 = vunpack.c.l.b16 %v2936
      %v3082 = vunpack.c.l.b16 %v2937
      %v3083 = vunpack.c.l.b16 %v2938
      %v3084 = vunpack.c.l.b16 %v2939
      %v3085 = vunpack.c.l.b16 %v2940
      %v3086 = vunpack.c.l.b16 %v2941
      %v3087 = vunpack.c.l.b16 %v2942
      %v3088 = vunpack.c.l.b16 %v2943
      %v3089 = vunpack.c.l.b16 %v2944
      %v3090 = vunpack.c.l.b16 %v2945
      %v3091 = vunpack.c.l.b16 %v2946
      %v3092 = vunpack.c.l.b16 %v2947
      %v3093 = vunpack.c.l.b16 %v2948
      %v3094 = vunpack.c.l.b16 %v2949
      %v3095 = vunpack.c.l.b16 %v2950
      %v3096 = vunpack.c.l.b16 %v2951
      %v3097 = vunpack.c.l.b16 %v2952
      %v3098 = vunpack.c.l.b16 %v2953
      %v3099 = vunpack.c.l.b16 %v2954
      %v3100 = vunpack.c.l.b16 %v2955
      %v3101 = vunpack.c.l.b16 %v2956
      %v3102 = vunpack.c.l.b16 %v2957
      %v3103 = vunpack.c.l.b16 %v2958
      %v3104 = vunpack.c.l.b16 %v2959
      %v3105 = vunpack.c.l.b16 %v2960
      %v3106 = vunpack.c.l.b16 %v2961
      %v3107 = vunpack.c.l.b16 %v2962
      %v3108 = vunpack.c.l.b16 %v2963
      %v3109 = vunpack.c.l.b16 %v2964
      %v3110 = vunpack.c.l.b16 %v2965
      %v3111 = vunpack.c.l.b16 %v2966
      %v3112 = vunpack.c.l.b16 %v2967
      %v3113 = vunpack.c.l.b16 %v2968
      %v3114 = vunpack.c.l.b16 %v2969
      %v3115 = vunpack.c.l.b16 %v2970
      %v3116 = vunpack.c.l.b16 %v2971
      %v3117 = vunpack.c.l.b16 %v2972
      %v3118 = vunpack.c.l.b16 %v2973
      %v3119 = vunpack.c.l.b16 %v2974
      %v3120 = vunpack.c.l.b16 %v2975
      %v3121 = vunpack.c.l.b16 %v2976
      %v3122 = vunpack.c.l.b16 %v2977
      %v3123 = vunpack.c.l.b16 %v2978
      %v3124 = vunpack.c.l.b16 %v2979
      %v3125 = vunpack.c.l.b16 %v2980
      %v3126 = vunpack.c.l.b16 %v2981
      %v3127 = vunpack.c.l.b16 %v2982
      %v3128 = vunpack.c.l.b16 %v2983
      %v3129 = vunpack.c.l.b16 %v2984
      %v3130 = vunpack.c.l.b16 %v2985
      %v3131 = vunpack.c.l.b16 %v2986
      %v3132 = vunpack.c.l.b16 %v2987
      %v3133 = vunpack.c.l.b16 %v2988
      %v3134 = vunpack.c.l.b16 %v2989
      %v3135 = vunpack.c.l.b16 %v2990
      %v3136 = vunpack.c.l.b16 %v2991
      %v3137 = vunpack.c.l.b16 %v2992
      %v3138 = vunpack.c.l.b16 %v2993
      %v3139 = vunpack.c.l.b16 %v2994
      %v3140 = vunpack.c.l.b16 %v2995
      %v3141 = vunpack.c.l.b16 %v2996
      %v3142 = vunpack.c.l.b16 %v2997
      %v3143 = vunpack.c.l.b16 %v2998
      %v3144 = vunpack.c.l.b16 %v2999
      %v3145 = vunpack.c.l.b16 %v3000
      %v3146 = vunpack.c.l.b16 %v3001
      %v3147 = vunpack.c.l.b16 %v3002
      %v3148 = vunpack.c.l.b16 %v3003
      %v3149 = vunpack.c.l.b16 %v3004
      %v3150 = vunpack.c.l.b16 %v3005
      %v3151 = vunpack.c.l.b16 %v3006
      %v3152 = vunpack.c.l.b16 %v3007
      %v3153 = vunpack.c.l.b16 %v3008
      %v3154 = vunpack.c.l.b16 %v3009
      %v3155 = vunpack.c.l.b16 %v3010
      %v3156 = vunpack.c.l.b16 %v3011
      %v3157 = vunpack.c.l.b16 %v3012
      %v3158 = vunpack.c.l.b16 %v3013
      %vm3159 = vcmask 1041409
      %v3160 = vsel %vm3159, %v3015, %v3014
      %vm3161 = vcmask 1042434
      %v3162 = vsel %vm3161, %v3016, %v3160
      %vm3163 = vcmask 1043459
      %v3164 = vsel %vm3163, %v3017, %v3162
      %vm3165 = vcmask 1044484
      %v3166 = vsel %vm3165, %v3018, %v3164
      %vm3167 = vcmask 1045509
      %v3168 = vsel %vm3167, %v3019, %v3166
      %vm3169 = vcmask 1046534
      %v3170 = vsel %vm3169, %v3020, %v3168
      %vm3171 = vcmask 1047559
      %v3172 = vsel %vm3171, %v3021, %v3170
      %v3173 = vsel %vm3159, %v3023, %v3022
      %v3174 = vsel %vm3161, %v3024, %v3173
      %v3175 = vsel %vm3163, %v3025, %v3174
      %v3176 = vsel %vm3165, %v3026, %v3175
      %v3177 = vsel %vm3167, %v3027, %v3176
      %v3178 = vsel %vm3169, %v3028, %v3177
      %v3179 = vsel %vm3171, %v3029, %v3178
      %v3180 = vsel %vm3159, %v3031, %v3030
      %v3181 = vsel %vm3161, %v3032, %v3180
      %v3182 = vsel %vm3163, %v3033, %v3181
      %v3183 = vsel %vm3165, %v3034, %v3182
      %v3184 = vsel %vm3167, %v3035, %v3183
      %v3185 = vsel %vm3169, %v3036, %v3184
      %v3186 = vsel %vm3171, %v3037, %v3185
      %v3187 = vsel %vm3159, %v3039, %v3038
      %v3188 = vsel %vm3161, %v3040, %v3187
      %v3189 = vsel %vm3163, %v3041, %v3188
      %v3190 = vsel %vm3165, %v3042, %v3189
      %v3191 = vsel %vm3167, %v3043, %v3190
      %v3192 = vsel %vm3169, %v3044, %v3191
      %v3193 = vsel %vm3171, %v3045, %v3192
      %v3194 = vsel %vm3159, %v3047, %v3046
      %v3195 = vsel %vm3161, %v3048, %v3194
      %v3196 = vsel %vm3163, %v3049, %v3195
      %v3197 = vsel %vm3165, %v3050, %v3196
      %v3198 = vsel %vm3167, %v3051, %v3197
      %v3199 = vsel %vm3169, %v3052, %v3198
      %v3200 = vsel %vm3171, %v3053, %v3199
      %v3201 = vsel %vm3159, %v3055, %v3054
      %v3202 = vsel %vm3161, %v3056, %v3201
      %v3203 = vsel %vm3163, %v3057, %v3202
      %v3204 = vsel %vm3165, %v3058, %v3203
      %v3205 = vsel %vm3167, %v3059, %v3204
      %v3206 = vsel %vm3169, %v3060, %v3205
      %v3207 = vsel %vm3171, %v3061, %v3206
      %v3208 = vsel %vm3159, %v3063, %v3062
      %v3209 = vsel %vm3161, %v3064, %v3208
      %v3210 = vsel %vm3163, %v3065, %v3209
      %v3211 = vsel %vm3165, %v3066, %v3210
      %v3212 = vsel %vm3167, %v3067, %v3211
      %v3213 = vsel %vm3169, %v3068, %v3212
      %v3214 = vsel %vm3171, %v3069, %v3213
      %v3215 = vsel %vm3159, %v3071, %v3070
      %v3216 = vsel %vm3161, %v3072, %v3215
      %v3217 = vsel %vm3163, %v3073, %v3216
      %v3218 = vsel %vm3165, %v3074, %v3217
      %v3219 = vsel %vm3167, %v3075, %v3218
      %v3220 = vsel %vm3169, %v3076, %v3219
      %v3221 = vsel %vm3171, %v3077, %v3220
      %v3222 = vsel %vm3159, %v3079, %v3078
      %v3223 = vsel %vm3161, %v3080, %v3222
      %v3224 = vsel %vm3163, %v3081, %v3223
      %v3225 = vsel %vm3165, %v3082, %v3224
      %v3226 = vsel %vm3167, %v3083, %v3225
      %v3227 = vsel %vm3169, %v3084, %v3226
      %v3228 = vsel %vm3171, %v3085, %v3227
      %v3229 = vsel %vm3159, %v3087, %v3086
      %v3230 = vsel %vm3161, %v3088, %v3229
      %v3231 = vsel %vm3163, %v3089, %v3230
      %v3232 = vsel %vm3165, %v3090, %v3231
      %v3233 = vsel %vm3167, %v3091, %v3232
      %v3234 = vsel %vm3169, %v3092, %v3233
      %v3235 = vsel %vm3171, %v3093, %v3234
      %v3236 = vsel %vm3159, %v3095, %v3094
      %v3237 = vsel %vm3161, %v3096, %v3236
      %v3238 = vsel %vm3163, %v3097, %v3237
      %v3239 = vsel %vm3165, %v3098, %v3238
      %v3240 = vsel %vm3167, %v3099, %v3239
      %v3241 = vsel %vm3169, %v3100, %v3240
      %v3242 = vsel %vm3171, %v3101, %v3241
      %v3243 = vsel %vm3159, %v3103, %v3102
      %v3244 = vsel %vm3161, %v3104, %v3243
      %v3245 = vsel %vm3163, %v3105, %v3244
      %v3246 = vsel %vm3165, %v3106, %v3245
      %v3247 = vsel %vm3167, %v3107, %v3246
      %v3248 = vsel %vm3169, %v3108, %v3247
      %v3249 = vsel %vm3171, %v3109, %v3248
      %v3250 = vsel %vm3159, %v3111, %v3110
      %v3251 = vsel %vm3161, %v3112, %v3250
      %v3252 = vsel %vm3163, %v3113, %v3251
      %v3253 = vsel %vm3165, %v3114, %v3252
      %v3254 = vsel %vm3167, %v3115, %v3253
      %v3255 = vsel %vm3169, %v3116, %v3254
      %v3256 = vsel %vm3171, %v3117, %v3255
      %v3257 = vsel %vm3159, %v3119, %v3118
      %v3258 = vsel %vm3161, %v3120, %v3257
      %v3259 = vsel %vm3163, %v3121, %v3258
      %v3260 = vsel %vm3165, %v3122, %v3259
      %v3261 = vsel %vm3167, %v3123, %v3260
      %v3262 = vsel %vm3169, %v3124, %v3261
      %v3263 = vsel %vm3171, %v3125, %v3262
      %v3264 = vsel %vm3159, %v3127, %v3126
      %v3265 = vsel %vm3161, %v3128, %v3264
      %v3266 = vsel %vm3163, %v3129, %v3265
      %v3267 = vsel %vm3165, %v3130, %v3266
      %v3268 = vsel %vm3167, %v3131, %v3267
      %v3269 = vsel %vm3169, %v3132, %v3268
      %v3270 = vsel %vm3171, %v3133, %v3269
      %v3271 = vsel %vm3159, %v3135, %v3134
      %v3272 = vsel %vm3161, %v3136, %v3271
      %v3273 = vsel %vm3163, %v3137, %v3272
      %v3274 = vsel %vm3165, %v3138, %v3273
      %v3275 = vsel %vm3167, %v3139, %v3274
      %v3276 = vsel %vm3169, %v3140, %v3275
      %v3277 = vsel %vm3171, %v3141, %v3276
      %v3278 = vsel %vm3159, %v3143, %v3142
      %v3279 = vsel %vm3161, %v3144, %v3278
      %v3280 = vsel %vm3163, %v3145, %v3279
      %v3281 = vsel %vm3165, %v3146, %v3280
      %v3282 = vsel %vm3167, %v3147, %v3281
      %v3283 = vsel %vm3169, %v3148, %v3282
      %v3284 = vsel %vm3171, %v3149, %v3283
      %v3285 = vsel %vm3159, %v3151, %v3150
      %v3286 = vsel %vm3161, %v3152, %v3285
      %v3287 = vsel %vm3163, %v3153, %v3286
      %v3288 = vsel %vm3165, %v3154, %v3287
      %v3289 = vsel %vm3167, %v3155, %v3288
      %v3290 = vsel %vm3169, %v3156, %v3289
      %v3291 = vsel %vm3171, %v3157, %v3290
      %v3292 = vpack.c.b16 %v3172, %v3172
      %v3293 = vpack.c.b16 %v3179, %v3179
      %v3294 = vpack.c.b16 %v3186, %v3186
      %v3295 = vpack.c.b16 %v3193, %v3193
      %v3296 = vpack.c.b16 %v3200, %v3200
      %v3297 = vpack.c.b16 %v3207, %v3207
      %v3298 = vpack.c.b16 %v3214, %v3214
      %v3299 = vpack.c.b16 %v3221, %v3221
      %v3300 = vpack.c.b16 %v3228, %v3228
      %v3301 = vpack.c.b16 %v3235, %v3235
      %v3302 = vpack.c.b16 %v3242, %v3242
      %v3303 = vpack.c.b16 %v3249, %v3249
      %v3304 = vpack.c.b16 %v3256, %v3256
      %v3305 = vpack.c.b16 %v3263, %v3263
      %v3306 = vpack.c.b16 %v3270, %v3270
      %v3307 = vpack.c.b16 %v3277, %v3277
      %v3308 = vpack.c.b16 %v3284, %v3284
      %v3309 = vpack.c.b16 %v3291, %v3291
      %v3310 = vpack.c.b16 %v3158, %v3158
      %3330 = vst.msk [vmem:[#allocation2] sm:$0xf] %vm1418, %v3292
      %3331 = vst.msk [vmem:[#allocation2 + $0x4] sm:$0xf] %vm1418, %v3293
      %3332 = vst.msk [vmem:[#allocation2 + $0x8] sm:$0xf] %vm1418, %v3294
      %3333 = vst.msk [vmem:[#allocation2 + $0xc] sm:$0xf] %vm1418, %v3295
      %3334 = vst.msk [vmem:[#allocation2 + $0x10] sm:$0xf] %vm1418, %v3296
      %3335 = vst.msk [vmem:[#allocation2 + $0x14] sm:$0xf] %vm1418, %v3297
      %3336 = vst.msk [vmem:[#allocation2 + $0x18] sm:$0xf] %vm1418, %v3298
      %3337 = vst.msk [vmem:[#allocation2 + $0x1c] sm:$0xf] %vm1418, %v3299
      %3338 = vst.msk [vmem:[#allocation2 + $0x20] sm:$0xf] %vm1418, %v3300
      %3339 = vst.msk [vmem:[#allocation2 + $0x24] sm:$0xf] %vm1418, %v3301
      %3340 = vst.msk [vmem:[#allocation2 + $0x28] sm:$0xf] %vm1418, %v3302
      %3341 = vst.msk [vmem:[#allocation2 + $0x2c] sm:$0xf] %vm1418, %v3303
      %3342 = vst.msk [vmem:[#allocation2 + $0x30] sm:$0xf] %vm1418, %v3304
      %3343 = vst.msk [vmem:[#allocation2 + $0x34] sm:$0xf] %vm1418, %v3305
      %3344 = vst.msk [vmem:[#allocation2 + $0x38] sm:$0xf] %vm1418, %v3306
      %3345 = vst.msk [vmem:[#allocation2 + $0x3c] sm:$0xf] %vm1418, %v3307
      %3346 = vst.msk [vmem:[#allocation2 + $0x40] sm:$0xf] %vm1418, %v3308
      %3347 = vst.msk [vmem:[#allocation2 + $0x44] sm:$0xf] %vm1418, %v3309
      %vm3348 = vcmask 253952
      %vm3349 = vsmask.f32 256
      %vm3350 = vmand %vm3348, %vm3349
      %v3351 = vld [vmem:[#allocation2 + $0x48] sm:$0x1]
      %v3352 = vsel %vm3350, %v3310, %v3351
      %3353 = vst [vmem:[#allocation2 + $0x48] sm:$0x1] %v3352
      %vm3354 = vcmask 257024
      %vm3355 = vsmask.f32 7938
      %vm3356 = vmand %vm3354, %vm3355
      %v3357 = vld [vmem:[#allocation2 + $0x48] sm:$0xf]
      %v3358 = vsel %vm3356, 0, %v3357
      %3359 = vst [vmem:[#allocation2 + $0x48] sm:$0xf] %v3358
      %v3360 = vld [vmem:[#allocation2] sm:$0xf]
      %v3361 = vld [vmem:[#allocation2 + $0x4] sm:$0xf]
      %v3362 = vld [vmem:[#allocation2 + $0x8] sm:$0xf]
      %v3363 = vld [vmem:[#allocation2 + $0xc] sm:$0xf]
      %v3364 = vld [vmem:[#allocation2 + $0x10] sm:$0xf]
      %v3365 = vld [vmem:[#allocation2 + $0x14] sm:$0xf]
      %v3366 = vld [vmem:[#allocation2 + $0x18] sm:$0xf]
      %v3367 = vld [vmem:[#allocation2 + $0x1c] sm:$0xf]
      %v3368 = vld [vmem:[#allocation2 + $0x20] sm:$0xf]
      %v3369 = vld [vmem:[#allocation2 + $0x24] sm:$0xf]
      %v3370 = vld [vmem:[#allocation2 + $0x28] sm:$0xf]
      %v3371 = vld [vmem:[#allocation2 + $0x2c] sm:$0xf]
      %v3372 = vld [vmem:[#allocation2 + $0x30] sm:$0xf]
      %v3373 = vld [vmem:[#allocation2 + $0x34] sm:$0xf]
      %v3374 = vld [vmem:[#allocation2 + $0x38] sm:$0xf]
      %v3375 = vld [vmem:[#allocation2 + $0x3c] sm:$0xf]
      %v3376 = vld [vmem:[#allocation2 + $0x40] sm:$0xf]
      %v3377 = vld [vmem:[#allocation2 + $0x44] sm:$0xf]
      %v3378 = vld [vmem:[%s3] sm:$0xf]
      %v3379 = vld [vmem:[%s3 + $0x4] sm:$0xf]
      %v3380 = vld [vmem:[%s3 + $0x8] sm:$0xf]
      %v3381 = vld [vmem:[%s3 + $0xc] sm:$0xf]
      %v3382 = vld [vmem:[#allocation2 + $0x48] sm:$0x1]
      %s3383 = scalar_lea.vmem %s3, 16
      %v3384 = vld [vmem:[%s3383] sm:$0xf]
      %v3385 = vld [vmem:[%s3383 + $0x4] sm:$0xf]
      %v3386 = vld [vmem:[%s3383 + $0x8] sm:$0xf]
      %v3387 = vld [vmem:[%s3383 + $0xc] sm:$0xf]
      %v3407 = vunpack.c.l.b16 %v3360
      %v3408 = vunpack.c.l.b16 %v3361
      %v3409 = vunpack.c.l.b16 %v3362
      %v3410 = vunpack.c.l.b16 %v3363
      %v3411 = vunpack.c.l.b16 %v3364
      %v3412 = vunpack.c.l.b16 %v3365
      %v3413 = vunpack.c.l.b16 %v3366
      %v3414 = vunpack.c.l.b16 %v3367
      %v3415 = vunpack.c.l.b16 %v3368
      %v3416 = vunpack.c.l.b16 %v3369
      %v3417 = vunpack.c.l.b16 %v3370
      %v3418 = vunpack.c.l.b16 %v3371
      %v3419 = vunpack.c.l.b16 %v3372
      %v3420 = vunpack.c.l.b16 %v3373
      %v3421 = vunpack.c.l.b16 %v3374
      %v3422 = vunpack.c.l.b16 %v3375
      %v3423 = vunpack.c.l.b16 %v3376
      %v3424 = vunpack.c.l.b16 %v3377
      %v3425 = vunpack.c.l.b16 %v3382
      %v3426 = vpack.c.b16 %v3408, %v3407
      %v3427 = vpack.c.b16 %v3410, %v3409
      %v3428 = vpack.c.b16 %v3412, %v3411
      %v3429 = vpack.c.b16 %v3414, %v3413
      %v3430 = vpack.c.b16 %v3416, %v3415
      %v3431 = vpack.c.b16 %v3418, %v3417
      %v3432 = vpack.c.b16 %v3420, %v3419
      %v3433 = vpack.c.b16 %v3422, %v3421
      %v3434 = vpack.c.b16 %v3424, %v3423
      %v3435 = vpack.c.b16 %v3425, %v3425
      %vm3436 = vsmask.f32 7424
      %v3438 = vshrl.u32 %v3426, 16
      %v3440 = vshll.u32 %v3426, 16
      %v3442 = vrot.slane %v3440, 1
      %v3443 = vor.u32 %v3438, %v3442
      %v3445 = vshll.u32 %v3427, 16
      %v3447 = vrot.slane %v3445, 1
      %v3448 = vsel %vm3436, %v3443, %v3447
      %v3449 = vshrl.u32 %v3427, 16
      %v3451 = vor.u32 %v3449, %v3447
      %v3453 = vshll.u32 %v3428, 16
      %v3455 = vrot.slane %v3453, 1
      %v3456 = vsel %vm3436, %v3451, %v3455
      %v3457 = vshrl.u32 %v3428, 16
      %v3459 = vor.u32 %v3457, %v3455
      %v3461 = vshll.u32 %v3429, 16
      %v3463 = vrot.slane %v3461, 1
      %v3464 = vsel %vm3436, %v3459, %v3463
      %v3465 = vshrl.u32 %v3429, 16
      %v3467 = vor.u32 %v3465, %v3463
      %v3469 = vshll.u32 %v3430, 16
      %v3471 = vrot.slane %v3469, 1
      %v3472 = vsel %vm3436, %v3467, %v3471
      %v3473 = vshrl.u32 %v3430, 16
      %v3475 = vor.u32 %v3473, %v3471
      %v3477 = vshll.u32 %v3431, 16
      %v3479 = vrot.slane %v3477, 1
      %v3480 = vsel %vm3436, %v3475, %v3479
      %v3481 = vshrl.u32 %v3431, 16
      %v3483 = vor.u32 %v3481, %v3479
      %v3485 = vshll.u32 %v3432, 16
      %v3487 = vrot.slane %v3485, 1
      %v3488 = vsel %vm3436, %v3483, %v3487
      %v3489 = vshrl.u32 %v3432, 16
      %v3491 = vor.u32 %v3489, %v3487
      %v3493 = vshll.u32 %v3433, 16
      %v3495 = vrot.slane %v3493, 1
      %v3496 = vsel %vm3436, %v3491, %v3495
      %v3497 = vshrl.u32 %v3433, 16
      %v3499 = vor.u32 %v3497, %v3495
      %v3501 = vshll.u32 %v3434, 16
      %v3503 = vrot.slane %v3501, 1
      %v3504 = vsel %vm3436, %v3499, %v3503
      %v3505 = vshrl.u32 %v3434, 16
      %v3507 = vor.u32 %v3505, %v3503
      %v3509 = vshll.u32 %v3435, 16
      %v3511 = vrot.slane %v3509, 1
      %v3512 = vsel %vm3436, %v3507, %v3511
      %v3517 = vunpack.c.l.b16 %v3384
      %v3518 = vunpack.c.l.b16 %v3385
      %v3519 = vunpack.c.l.b16 %v3386
      %v3520 = vunpack.c.l.b16 %v3387
      %v3521 = vpack.c.b16 %v3518, %v3517
      %v3522 = vpack.c.b16 %v3520, %v3519
      %vm3525 = vcmask 261120
      %v3527 = vsel %vm3525, %v3448, 0
      %v3530 = vsel %vm3525, %v3456, 0
      %v3533 = vsel %vm3525, %v3464, 0
      %v3536 = vsel %vm3525, %v3472, 0
      %v3539 = vsel %vm3525, %v3480, 0
      %v3542 = vsel %vm3525, %v3488, 0
      %v3545 = vsel %vm3525, %v3496, 0
      %v3548 = vsel %vm3525, %v3504, 0
      %v3551 = vsel %vm3525, %v3512, 0
      %3553 = vmatprep.subr.bf16.mxu0 0
      %3554 = vmatpush1.bf16.msra.mxu0 %v3521
      %3555 = vmatprep.subr.bf16.mxu0 0
      %3556 = vmatpush1.bf16.msra.mxu0 %v3522
      %3557 = vmatprep.subr.bf16.mxu0 0
      %3558 = vmatpush1.bf16.msra.mxu0 0
      %3559 = vmatprep.subr.bf16.mxu0 0
      %3560 = vmatpush1.bf16.msra.mxu0 0
      %3561 = vmatprep.subr.bf16.mxu0 0
      %3562 = vmatpush1.bf16.msra.mxu0 0
      %3563 = vmatprep.subr.bf16.mxu0 0
      %3564 = vmatpush1.bf16.msra.mxu0 0
      %3565 = vmatprep.subr.bf16.mxu0 0
      %3566 = vmatpush1.bf16.msra.mxu0 0
      %3567 = vmatprep.subr.bf16.mxu0 0
      %3568 = vmatpush1.bf16.msra.mxu0 0
      %3569 = vmatprep.subr.bf16.mxu0 0
      %3570 = vmatpush1.bf16.msra.mxu0 0
      %3571 = vmatprep.subr.bf16.mxu0 0
      %3572 = vmatpush1.bf16.msra.mxu0 0
      %3573 = vmatprep.subr.bf16.mxu0 0
      %3574 = vmatpush1.bf16.msra.mxu0 0
      %3575 = vmatprep.subr.bf16.mxu0 0
      %3576 = vmatpush1.bf16.msra.mxu0 0
      %3577 = vmatprep.subr.bf16.mxu0 0
      %3578 = vmatpush1.bf16.msra.mxu0 0
      %3579 = vmatprep.subr.bf16.mxu0 0
      %3580 = vmatpush1.bf16.msra.mxu0 0
      %3581 = vmatprep.subr.bf16.mxu0 0
      %3582 = vmatpush1.bf16.msra.mxu0 0
      %3583 = vmatprep.subr.bf16.mxu0 0
      %3584 = vmatpush1.bf16.msra.mxu0 0
      %3585 = vmatprep.mubr.bf16.mxu0 0
      %3586 = vmatmul.mubr.bf16.gmra.mrb[0].mxu0 %v3527
      %v3587 = vpop.f32.mrb[0].mxu0
      %v3588 = vadd.f32 0.0, %v3587
      %v3589 = vpop.f32.mrb[0].mxu0
      %v3590 = vpop.f32.mrb[0].mxu0
      %v3591 = vadd.f32 0.0, %v3590
      %v3592 = vpop.f32.mrb[0].mxu0
      %3593 = vmatprep.mubr.bf16.mxu0 0
      %3594 = vmatmul.mubr.bf16.gmra.mrb[0].mxu0 %v3530
      %v3595 = vpop.f32.mrb[0].mxu0
      %v3596 = vadd.f32 0.0, %v3595
      %v3597 = vpop.f32.mrb[0].mxu0
      %v3598 = vpop.f32.mrb[0].mxu0
      %v3599 = vadd.f32 0.0, %v3598
      %v3600 = vpop.f32.mrb[0].mxu0
      %3601 = vmatprep.mubr.bf16.mxu0 0
      %3602 = vmatmul.mubr.bf16.gmra.mrb[0].mxu0 %v3533
      %v3603 = vpop.f32.mrb[0].mxu0
      %v3604 = vadd.f32 0.0, %v3603
      %v3605 = vpop.f32.mrb[0].mxu0
      %v3606 = vpop.f32.mrb[0].mxu0
      %v3607 = vadd.f32 0.0, %v3606
      %v3608 = vpop.f32.mrb[0].mxu0
      %3609 = vmatprep.mubr.bf16.mxu0 0
      %3610 = vmatmul.mubr.bf16.gmra.mrb[0].mxu0 %v3536
      %v3611 = vpop.f32.mrb[0].mxu0
      %v3612 = vadd.f32 0.0, %v3611
      %v3613 = vpop.f32.mrb[0].mxu0
      %v3614 = vpop.f32.mrb[0].mxu0
      %v3615 = vadd.f32 0.0, %v3614
      %v3616 = vpop.f32.mrb[0].mxu0
      %3617 = vmatprep.mubr.bf16.mxu0 0
      %3618 = vmatmul.mubr.bf16.gmra.mrb[0].mxu0 %v3539
      %v3619 = vpop.f32.mrb[0].mxu0
      %v3620 = vadd.f32 0.0, %v3619
      %v3621 = vpop.f32.mrb[0].mxu0
      %v3622 = vpop.f32.mrb[0].mxu0
      %v3623 = vadd.f32 0.0, %v3622
      %v3624 = vpop.f32.mrb[0].mxu0
      %3625 = vmatprep.mubr.bf16.mxu0 0
      %3626 = vmatmul.mubr.bf16.gmra.mrb[0].mxu0 %v3542
      %v3627 = vpop.f32.mrb[0].mxu0
      %v3628 = vadd.f32 0.0, %v3627
      %v3629 = vpop.f32.mrb[0].mxu0
      %v3630 = vpop.f32.mrb[0].mxu0
      %v3631 = vadd.f32 0.0, %v3630
      %v3632 = vpop.f32.mrb[0].mxu0
      %3633 = vmatprep.mubr.bf16.mxu0 0
      %3634 = vmatmul.mubr.bf16.gmra.mrb[0].mxu0 %v3545
      %v3635 = vpop.f32.mrb[0].mxu0
      %v3636 = vadd.f32 0.0, %v3635
      %v3637 = vpop.f32.mrb[0].mxu0
      %v3638 = vpop.f32.mrb[0].mxu0
      %v3639 = vadd.f32 0.0, %v3638
      %v3640 = vpop.f32.mrb[0].mxu0
      %3641 = vmatprep.mubr.bf16.mxu0 0
      %3642 = vmatmul.mubr.bf16.gmra.mrb[0].mxu0 %v3548
      %v3643 = vpop.f32.mrb[0].mxu0
      %v3644 = vadd.f32 0.0, %v3643
      %v3645 = vpop.f32.mrb[0].mxu0
      %v3646 = vpop.f32.mrb[0].mxu0
      %v3647 = vadd.f32 0.0, %v3646
      %v3648 = vpop.f32.mrb[0].mxu0
      %3649 = vmatprep.mubr.bf16.mxu0 0
      %3650 = vmatmul.mubr.bf16.gmra.mrb[0].mxu0 %v3551
      %v3651 = vpop.f32.mrb[0].mxu0
      %v3652 = vadd.f32 0.0, %v3651
      %v3653 = vpop.f32.mrb[0].mxu0
      %v3654 = vpop.f32.mrb[0].mxu0
      %v3655 = vadd.f32 0.0, %v3654
      %v3656 = vpop.f32.mrb[0].mxu0
      %3657 = vdwg.mxu0
      %v3662 = vunpack.c.l.b16 %v3378
      %v3663 = vunpack.c.l.b16 %v3379
      %v3664 = vunpack.c.l.b16 %v3380
      %v3665 = vunpack.c.l.b16 %v3381
      %v3666 = vpack.c.b16 %v3663, %v3662
      %v3667 = vpack.c.b16 %v3665, %v3664
      %v3670 = vsel %vm3525, %v3426, 0
      %v3672 = vsel %vm3525, %v3427, 0
      %v3674 = vsel %vm3525, %v3428, 0
      %v3676 = vsel %vm3525, %v3429, 0
      %v3678 = vsel %vm3525, %v3430, 0
      %v3680 = vsel %vm3525, %v3431, 0
      %v3682 = vsel %vm3525, %v3432, 0
      %v3684 = vsel %vm3525, %v3433, 0
      %v3686 = vsel %vm3525, %v3434, 0
      %3688 = vmatprep.subr.bf16.mxu0 0
      %3689 = vmatpush1.bf16.msra.mxu0 %v3666
      %3690 = vmatprep.subr.bf16.mxu0 0
      %3691 = vmatpush1.bf16.msra.mxu0 %v3667
      %3692 = vmatprep.subr.bf16.mxu0 0
      %3693 = vmatpush1.bf16.msra.mxu0 0
      %3694 = vmatprep.subr.bf16.mxu0 0
      %3695 = vmatpush1.bf16.msra.mxu0 0
      %3696 = vmatprep.subr.bf16.mxu0 0
      %3697 = vmatpush1.bf16.msra.mxu0 0
      %3698 = vmatprep.subr.bf16.mxu0 0
      %3699 = vmatpush1.bf16.msra.mxu0 0
      %3700 = vmatprep.subr.bf16.mxu0 0
      %3701 = vmatpush1.bf16.msra.mxu0 0
      %3702 = vmatprep.subr.bf16.mxu0 0
      %3703 = vmatpush1.bf16.msra.mxu0 0
      %3704 = vmatprep.subr.bf16.mxu0 0
      %3705 = vmatpush1.bf16.msra.mxu0 0
      %3706 = vmatprep.subr.bf16.mxu0 0
      %3707 = vmatpush1.bf16.msra.mxu0 0
      %3708 = vmatprep.subr.bf16.mxu0 0
      %3709 = vmatpush1.bf16.msra.mxu0 0
      %3710 = vmatprep.subr.bf16.mxu0 0
      %3711 = vmatpush1.bf16.msra.mxu0 0
      %3712 = vmatprep.subr.bf16.mxu0 0
      %3713 = vmatpush1.bf16.msra.mxu0 0
      %3714 = vmatprep.subr.bf16.mxu0 0
      %3715 = vmatpush1.bf16.msra.mxu0 0
      %3716 = vmatprep.subr.bf16.mxu0 0
      %3717 = vmatpush1.bf16.msra.mxu0 0
      %3718 = vmatprep.subr.bf16.mxu0 0
      %3719 = vmatpush1.bf16.msra.mxu0 0
      %3720 = vmatprep.mubr.bf16.mxu0 0
      %3721 = vmatmul.mubr.bf16.gmra.mrb[0].mxu0 %v3670
      %v3722 = vpop.f32.mrb[0].mxu0
      %v3723 = vadd.f32 %v3588, %v3722
      %v3724 = vpop.f32.mrb[0].mxu0
      %v3725 = vpop.f32.mrb[0].mxu0
      %v3726 = vadd.f32 %v3591, %v3725
      %v3727 = vpop.f32.mrb[0].mxu0
      %3728 = vmatprep.mubr.bf16.mxu0 0
      %3729 = vmatmul.mubr.bf16.gmra.mrb[0].mxu0 %v3672
      %v3730 = vpop.f32.mrb[0].mxu0
      %v3731 = vadd.f32 %v3596, %v3730
      %v3732 = vpop.f32.mrb[0].mxu0
      %v3733 = vpop.f32.mrb[0].mxu0
      %v3734 = vadd.f32 %v3599, %v3733
      %v3735 = vpop.f32.mrb[0].mxu0
      %3736 = vmatprep.mubr.bf16.mxu0 0
      %3737 = vmatmul.mubr.bf16.gmra.mrb[0].mxu0 %v3674
      %v3738 = vpop.f32.mrb[0].mxu0
      %v3739 = vadd.f32 %v3604, %v3738
      %v3740 = vpop.f32.mrb[0].mxu0
      %v3741 = vpop.f32.mrb[0].mxu0
      %v3742 = vadd.f32 %v3607, %v3741
      %v3743 = vpop.f32.mrb[0].mxu0
      %3744 = vmatprep.mubr.bf16.mxu0 0
      %3745 = vmatmul.mubr.bf16.gmra.mrb[0].mxu0 %v3676
      %v3746 = vpop.f32.mrb[0].mxu0
      %v3747 = vadd.f32 %v3612, %v3746
      %v3748 = vpop.f32.mrb[0].mxu0
      %v3749 = vpop.f32.mrb[0].mxu0
      %v3750 = vadd.f32 %v3615, %v3749
      %v3751 = vpop.f32.mrb[0].mxu0
      %3752 = vmatprep.mubr.bf16.mxu0 0
      %3753 = vmatmul.mubr.bf16.gmra.mrb[0].mxu0 %v3678
      %v3754 = vpop.f32.mrb[0].mxu0
      %v3755 = vadd.f32 %v3620, %v3754
      %v3756 = vpop.f32.mrb[0].mxu0
      %v3757 = vpop.f32.mrb[0].mxu0
      %v3758 = vadd.f32 %v3623, %v3757
      %v3759 = vpop.f32.mrb[0].mxu0
      %3760 = vmatprep.mubr.bf16.mxu0 0
      %3761 = vmatmul.mubr.bf16.gmra.mrb[0].mxu0 %v3680
      %v3762 = vpop.f32.mrb[0].mxu0
      %v3763 = vadd.f32 %v3628, %v3762
      %v3764 = vpop.f32.mrb[0].mxu0
      %v3765 = vpop.f32.mrb[0].mxu0
      %v3766 = vadd.f32 %v3631, %v3765
      %v3767 = vpop.f32.mrb[0].mxu0
      %3768 = vmatprep.mubr.bf16.mxu0 0
      %3769 = vmatmul.mubr.bf16.gmra.mrb[0].mxu0 %v3682
      %v3770 = vpop.f32.mrb[0].mxu0
      %v3771 = vadd.f32 %v3636, %v3770
      %v3772 = vpop.f32.mrb[0].mxu0
      %v3773 = vpop.f32.mrb[0].mxu0
      %v3774 = vadd.f32 %v3639, %v3773
      %v3775 = vpop.f32.mrb[0].mxu0
      %3776 = vmatprep.mubr.bf16.mxu0 0
      %3777 = vmatmul.mubr.bf16.gmra.mrb[0].mxu0 %v3684
      %v3778 = vpop.f32.mrb[0].mxu0
      %v3779 = vadd.f32 %v3644, %v3778
      %v3780 = vpop.f32.mrb[0].mxu0
      %v3781 = vpop.f32.mrb[0].mxu0
      %v3782 = vadd.f32 %v3647, %v3781
      %v3783 = vpop.f32.mrb[0].mxu0
      %3784 = vmatprep.mubr.bf16.mxu0 0
      %3785 = vmatmul.mubr.bf16.gmra.mrb[0].mxu0 %v3686
      %v3786 = vpop.f32.mrb[0].mxu0
      %v3787 = vadd.f32 %v3652, %v3786
      %v3788 = vpop.f32.mrb[0].mxu0
      %v3789 = vpop.f32.mrb[0].mxu0
      %v3790 = vadd.f32 %v3655, %v3789
      %v3791 = vpop.f32.mrb[0].mxu0
      %3792 = vdwg.mxu0
      %v3793 = vld [vmem:[#allocation2] sm:$0xe]
      %s3794 = scalar_lea.vmem %s3, 32
      %v3795 = vld [vmem:[%s3794] sm:$0xf]
      %v3796 = vld [vmem:[%s3794 + $0x4] sm:$0xf]
      %v3797 = vld [vmem:[%s3794 + $0x8] sm:$0xf]
      %v3798 = vld [vmem:[%s3794 + $0xc] sm:$0xf]
      %v3800 = vunpack.c.l.b16 %v3793
      %v3801 = vpack.c.b16 %v3408, %v3800
      %vm3802 = vcmask 1046528
      %v3803 = vrot.slane %v3801, 1
      %v3804 = vrot.slane %v3427, 1
      %v3805 = vsel %vm3802, %v3803, %v3804
      %v3806 = vrot.slane %v3428, 1
      %v3807 = vsel %vm3802, %v3804, %v3806
      %v3808 = vrot.slane %v3429, 1
      %v3809 = vsel %vm3802, %v3806, %v3808
      %v3810 = vrot.slane %v3430, 1
      %v3811 = vsel %vm3802, %v3808, %v3810
      %v3812 = vrot.slane %v3431, 1
      %v3813 = vsel %vm3802, %v3810, %v3812
      %v3814 = vrot.slane %v3432, 1
      %v3815 = vsel %vm3802, %v3812, %v3814
      %v3816 = vrot.slane %v3433, 1
      %v3817 = vsel %vm3802, %v3814, %v3816
      %v3818 = vrot.slane %v3434, 1
      %v3819 = vsel %vm3802, %v3816, %v3818
      %v3820 = vrot.slane %v3435, 1
      %v3821 = vsel %vm3802, %v3818, %v3820
      %v3826 = vunpack.c.l.b16 %v3795
      %v3827 = vunpack.c.l.b16 %v3796
      %v3828 = vunpack.c.l.b16 %v3797
      %v3829 = vunpack.c.l.b16 %v3798
      %v3830 = vpack.c.b16 %v3827, %v3826
      %v3831 = vpack.c.b16 %v3829, %v3828
      %v3835 = vsel %vm3525, %v3805, 0
      %v3838 = vsel %vm3525, %v3807, 0
      %v3841 = vsel %vm3525, %v3809, 0
      %v3844 = vsel %vm3525, %v3811, 0
      %v3847 = vsel %vm3525, %v3813, 0
      %v3850 = vsel %vm3525, %v3815, 0
      %v3853 = vsel %vm3525, %v3817, 0
      %v3856 = vsel %vm3525, %v3819, 0
      %v3859 = vsel %vm3525, %v3821, 0
      %3861 = vmatprep.subr.bf16.mxu0 0
      %3862 = vmatpush1.bf16.msra.mxu0 %v3830
      %3863 = vmatprep.subr.bf16.mxu0 0
      %3864 = vmatpush1.bf16.msra.mxu0 %v3831
      %3865 = vmatprep.subr.bf16.mxu0 0
      %3866 = vmatpush1.bf16.msra.mxu0 0
      %3867 = vmatprep.subr.bf16.mxu0 0
      %3868 = vmatpush1.bf16.msra.mxu0 0
      %3869 = vmatprep.subr.bf16.mxu0 0
      %3870 = vmatpush1.bf16.msra.mxu0 0
      %3871 = vmatprep.subr.bf16.mxu0 0
      %3872 = vmatpush1.bf16.msra.mxu0 0
      %3873 = vmatprep.subr.bf16.mxu0 0
      %3874 = vmatpush1.bf16.msra.mxu0 0
      %3875 = vmatprep.subr.bf16.mxu0 0
      %3876 = vmatpush1.bf16.msra.mxu0 0
      %3877 = vmatprep.subr.bf16.mxu0 0
      %3878 = vmatpush1.bf16.msra.mxu0 0
      %3879 = vmatprep.subr.bf16.mxu0 0
      %3880 = vmatpush1.bf16.msra.mxu0 0
      %3881 = vmatprep.subr.bf16.mxu0 0
      %3882 = vmatpush1.bf16.msra.mxu0 0
      %3883 = vmatprep.subr.bf16.mxu0 0
      %3884 = vmatpush1.bf16.msra.mxu0 0
      %3885 = vmatprep.subr.bf16.mxu0 0
      %3886 = vmatpush1.bf16.msra.mxu0 0
      %3887 = vmatprep.subr.bf16.mxu0 0
      %3888 = vmatpush1.bf16.msra.mxu0 0
      %3889 = vmatprep.subr.bf16.mxu0 0
      %3890 = vmatpush1.bf16.msra.mxu0 0
      %3891 = vmatprep.subr.bf16.mxu0 0
      %3892 = vmatpush1.bf16.msra.mxu0 0
      %3893 = vmatprep.mubr.bf16.mxu0 0
      %3894 = vmatmul.mubr.bf16.gmra.mrb[0].mxu0 %v3835
      %v3895 = vpop.f32.mrb[0].mxu0
      %v3896 = vadd.f32 0.0, %v3895
      %v3897 = vpop.f32.mrb[0].mxu0
      %v3898 = vpop.f32.mrb[0].mxu0
      %v3899 = vadd.f32 0.0, %v3898
      %v3900 = vpop.f32.mrb[0].mxu0
      %3901 = vmatprep.mubr.bf16.mxu0 0
      %3902 = vmatmul.mubr.bf16.gmra.mrb[0].mxu0 %v3838
      %v3903 = vpop.f32.mrb[0].mxu0
      %v3904 = vadd.f32 0.0, %v3903
      %v3905 = vpop.f32.mrb[0].mxu0
      %v3906 = vpop.f32.mrb[0].mxu0
      %v3907 = vadd.f32 0.0, %v3906
      %v3908 = vpop.f32.mrb[0].mxu0
      %3909 = vmatprep.mubr.bf16.mxu0 0
      %3910 = vmatmul.mubr.bf16.gmra.mrb[0].mxu0 %v3841
      %v3911 = vpop.f32.mrb[0].mxu0
      %v3912 = vadd.f32 0.0, %v3911
      %v3913 = vpop.f32.mrb[0].mxu0
      %v3914 = vpop.f32.mrb[0].mxu0
      %v3915 = vadd.f32 0.0, %v3914
      %v3916 = vpop.f32.mrb[0].mxu0
      %3917 = vmatprep.mubr.bf16.mxu0 0
      %3918 = vmatmul.mubr.bf16.gmra.mrb[0].mxu0 %v3844
      %v3919 = vpop.f32.mrb[0].mxu0
      %v3920 = vadd.f32 0.0, %v3919
      %v3921 = vpop.f32.mrb[0].mxu0
      %v3922 = vpop.f32.mrb[0].mxu0
      %v3923 = vadd.f32 0.0, %v3922
      %v3924 = vpop.f32.mrb[0].mxu0
      %3925 = vmatprep.mubr.bf16.mxu0 0
      %3926 = vmatmul.mubr.bf16.gmra.mrb[0].mxu0 %v3847
      %v3927 = vpop.f32.mrb[0].mxu0
      %v3928 = vadd.f32 0.0, %v3927
      %v3929 = vpop.f32.mrb[0].mxu0
      %v3930 = vpop.f32.mrb[0].mxu0
      %v3931 = vadd.f32 0.0, %v3930
      %v3932 = vpop.f32.mrb[0].mxu0
      %3933 = vmatprep.mubr.bf16.mxu0 0
      %3934 = vmatmul.mubr.bf16.gmra.mrb[0].mxu0 %v3850
      %v3935 = vpop.f32.mrb[0].mxu0
      %v3936 = vadd.f32 0.0, %v3935
      %v3937 = vpop.f32.mrb[0].mxu0
      %v3938 = vpop.f32.mrb[0].mxu0
      %v3939 = vadd.f32 0.0, %v3938
      %v3940 = vpop.f32.mrb[0].mxu0
      %3941 = vmatprep.mubr.bf16.mxu0 0
      %3942 = vmatmul.mubr.bf16.gmra.mrb[0].mxu0 %v3853
      %v3943 = vpop.f32.mrb[0].mxu0
      %v3944 = vadd.f32 0.0, %v3943
      %v3945 = vpop.f32.mrb[0].mxu0
      %v3946 = vpop.f32.mrb[0].mxu0
      %v3947 = vadd.f32 0.0, %v3946
      %v3948 = vpop.f32.mrb[0].mxu0
      %3949 = vmatprep.mubr.bf16.mxu0 0
      %3950 = vmatmul.mubr.bf16.gmra.mrb[0].mxu0 %v3856
      %v3951 = vpop.f32.mrb[0].mxu0
      %v3952 = vadd.f32 0.0, %v3951
      %v3953 = vpop.f32.mrb[0].mxu0
      %v3954 = vpop.f32.mrb[0].mxu0
      %v3955 = vadd.f32 0.0, %v3954
      %v3956 = vpop.f32.mrb[0].mxu0
      %3957 = vmatprep.mubr.bf16.mxu0 0
      %3958 = vmatmul.mubr.bf16.gmra.mrb[0].mxu0 %v3859
      %v3959 = vpop.f32.mrb[0].mxu0
      %v3960 = vadd.f32 0.0, %v3959
      %v3961 = vpop.f32.mrb[0].mxu0
      %v3962 = vpop.f32.mrb[0].mxu0
      %v3963 = vadd.f32 0.0, %v3962
      %v3964 = vpop.f32.mrb[0].mxu0
      %3965 = vdwg.mxu0
      %v3966 = vadd.f32 %v3723, %v3896
      %v3967 = vadd.f32 %v3726, %v3899
      %v3968 = vadd.f32 %v3731, %v3904
      %v3969 = vadd.f32 %v3734, %v3907
      %v3970 = vadd.f32 %v3739, %v3912
      %v3971 = vadd.f32 %v3742, %v3915
      %v3972 = vadd.f32 %v3747, %v3920
      %v3973 = vadd.f32 %v3750, %v3923
      %v3974 = vadd.f32 %v3755, %v3928
      %v3975 = vadd.f32 %v3758, %v3931
      %v3976 = vadd.f32 %v3763, %v3936
      %v3977 = vadd.f32 %v3766, %v3939
      %v3978 = vadd.f32 %v3771, %v3944
      %v3979 = vadd.f32 %v3774, %v3947
      %v3980 = vadd.f32 %v3779, %v3952
      %v3981 = vadd.f32 %v3782, %v3955
      %v3982 = vadd.f32 %v3787, %v3960
      %v3983 = vadd.f32 %v3790, %v3963
      %v3984 = vld [vmem:[#allocation2 + $0x48] sm:$0x3]
      %s3985 = scalar_lea.vmem %s3, 48
      %v3986 = vld [vmem:[%s3985] sm:$0xf]
      %v3987 = vld [vmem:[%s3985 + $0x4] sm:$0xf]
      %v3988 = vld [vmem:[%s3985 + $0x8] sm:$0xf]
      %v3989 = vld [vmem:[%s3985 + $0xc] sm:$0xf]
      %v3991 = vunpack.c.l.b16 %v3984
      %v3992 = vpack.c.b16 %v3991, %v3991
      %vm3993 = vsmask.f32 6400
      %v3995 = vshrl.u32 %v3801, 16
      %v3997 = vrot.slane %v3995, 1
      %v3998 = vshll.u32 %v3801, 16
      %v4000 = vrot.slane %v3998, 2
      %v4001 = vor.u32 %v3997, %v4000
      %v4002 = vrot.slane %v3449, 1
      %v4003 = vrot.slane %v3445, 2
      %v4004 = vor.u32 %v4002, %v4003
      %v4005 = vsel %vm3993, %v4001, %v4004
      %v4006 = vrot.slane %v3457, 1
      %v4007 = vrot.slane %v3453, 2
      %v4008 = vor.u32 %v4006, %v4007
      %v4009 = vsel %vm3993, %v4004, %v4008
      %v4010 = vrot.slane %v3465, 1
      %v4011 = vrot.slane %v3461, 2
      %v4012 = vor.u32 %v4010, %v4011
      %v4013 = vsel %vm3993, %v4008, %v4012
      %v4014 = vrot.slane %v3473, 1
      %v4015 = vrot.slane %v3469, 2
      %v4016 = vor.u32 %v4014, %v4015
      %v4017 = vsel %vm3993, %v4012, %v4016
      %v4018 = vrot.slane %v3481, 1
      %v4019 = vrot.slane %v3477, 2
      %v4020 = vor.u32 %v4018, %v4019
      %v4021 = vsel %vm3993, %v4016, %v4020
      %v4022 = vrot.slane %v3489, 1
      %v4023 = vrot.slane %v3485, 2
      %v4024 = vor.u32 %v4022, %v4023
      %v4025 = vsel %vm3993, %v4020, %v4024
      %v4026 = vrot.slane %v3497, 1
      %v4027 = vrot.slane %v3493, 2
      %v4028 = vor.u32 %v4026, %v4027
      %v4029 = vsel %vm3993, %v4024, %v4028
      %v4030 = vrot.slane %v3505, 1
      %v4031 = vrot.slane %v3501, 2
      %v4032 = vor.u32 %v4030, %v4031
      %v4033 = vsel %vm3993, %v4028, %v4032
      %v4035 = vshrl.u32 %v3992, 16
      %v4037 = vrot.slane %v4035, 1
      %v4038 = vshll.u32 %v3992, 16
      %v4040 = vrot.slane %v4038, 2
      %v4041 = vor.u32 %v4037, %v4040
      %v4042 = vsel %vm3993, %v4032, %v4041
      %v4047 = vunpack.c.l.b16 %v3986
      %v4048 = vunpack.c.l.b16 %v3987
      %v4049 = vunpack.c.l.b16 %v3988
      %v4050 = vunpack.c.l.b16 %v3989
      %v4051 = vpack.c.b16 %v4048, %v4047
      %v4052 = vpack.c.b16 %v4050, %v4049
      %v4056 = vsel %vm3525, %v4005, 0
      %v4059 = vsel %vm3525, %v4009, 0
      %v4062 = vsel %vm3525, %v4013, 0
      %v4065 = vsel %vm3525, %v4017, 0
      %v4068 = vsel %vm3525, %v4021, 0
      %v4071 = vsel %vm3525, %v4025, 0
      %v4074 = vsel %vm3525, %v4029, 0
      %v4077 = vsel %vm3525, %v4033, 0
      %v4080 = vsel %vm3525, %v4042, 0
      %4082 = vmatprep.subr.bf16.mxu0 0
      %4083 = vmatpush1.bf16.msra.mxu0 %v4051
      %4084 = vmatprep.subr.bf16.mxu0 0
      %4085 = vmatpush1.bf16.msra.mxu0 %v4052
      %4086 = vmatprep.subr.bf16.mxu0 0
      %4087 = vmatpush1.bf16.msra.mxu0 0
      %4088 = vmatprep.subr.bf16.mxu0 0
      %4089 = vmatpush1.bf16.msra.mxu0 0
      %4090 = vmatprep.subr.bf16.mxu0 0
      %4091 = vmatpush1.bf16.msra.mxu0 0
      %4092 = vmatprep.subr.bf16.mxu0 0
      %4093 = vmatpush1.bf16.msra.mxu0 0
      %4094 = vmatprep.subr.bf16.mxu0 0
      %4095 = vmatpush1.bf16.msra.mxu0 0
      %4096 = vmatprep.subr.bf16.mxu0 0
      %4097 = vmatpush1.bf16.msra.mxu0 0
      %4098 = vmatprep.subr.bf16.mxu0 0
      %4099 = vmatpush1.bf16.msra.mxu0 0
      %4100 = vmatprep.subr.bf16.mxu0 0
      %4101 = vmatpush1.bf16.msra.mxu0 0
      %4102 = vmatprep.subr.bf16.mxu0 0
      %4103 = vmatpush1.bf16.msra.mxu0 0
      %4104 = vmatprep.subr.bf16.mxu0 0
      %4105 = vmatpush1.bf16.msra.mxu0 0
      %4106 = vmatprep.subr.bf16.mxu0 0
      %4107 = vmatpush1.bf16.msra.mxu0 0
      %4108 = vmatprep.subr.bf16.mxu0 0
      %4109 = vmatpush1.bf16.msra.mxu0 0
      %4110 = vmatprep.subr.bf16.mxu0 0
      %4111 = vmatpush1.bf16.msra.mxu0 0
      %4112 = vmatprep.subr.bf16.mxu0 0
      %4113 = vmatpush1.bf16.msra.mxu0 0
      %4114 = vmatprep.mubr.bf16.mxu0 0
      %4115 = vmatmul.mubr.bf16.gmra.mrb[0].mxu0 %v4056
      %v4116 = vpop.f32.mrb[0].mxu0
      %v4117 = vadd.f32 0.0, %v4116
      %v4118 = vpop.f32.mrb[0].mxu0
      %v4119 = vpop.f32.mrb[0].mxu0
      %v4120 = vadd.f32 0.0, %v4119
      %v4121 = vpop.f32.mrb[0].mxu0
      %4122 = vmatprep.mubr.bf16.mxu0 0
      %4123 = vmatmul.mubr.bf16.gmra.mrb[0].mxu0 %v4059
      %v4124 = vpop.f32.mrb[0].mxu0
      %v4125 = vadd.f32 0.0, %v4124
      %v4126 = vpop.f32.mrb[0].mxu0
      %v4127 = vpop.f32.mrb[0].mxu0
      %v4128 = vadd.f32 0.0, %v4127
      %v4129 = vpop.f32.mrb[0].mxu0
      %4130 = vmatprep.mubr.bf16.mxu0 0
      %4131 = vmatmul.mubr.bf16.gmra.mrb[0].mxu0 %v4062
      %v4132 = vpop.f32.mrb[0].mxu0
      %v4133 = vadd.f32 0.0, %v4132
      %v4134 = vpop.f32.mrb[0].mxu0
      %v4135 = vpop.f32.mrb[0].mxu0
      %v4136 = vadd.f32 0.0, %v4135
      %v4137 = vpop.f32.mrb[0].mxu0
      %4138 = vmatprep.mubr.bf16.mxu0 0
      %4139 = vmatmul.mubr.bf16.gmra.mrb[0].mxu0 %v4065
      %v4140 = vpop.f32.mrb[0].mxu0
      %v4141 = vadd.f32 0.0, %v4140
      %v4142 = vpop.f32.mrb[0].mxu0
      %v4143 = vpop.f32.mrb[0].mxu0
      %v4144 = vadd.f32 0.0, %v4143
      %v4145 = vpop.f32.mrb[0].mxu0
      %4146 = vmatprep.mubr.bf16.mxu0 0
      %4147 = vmatmul.mubr.bf16.gmra.mrb[0].mxu0 %v4068
      %v4148 = vpop.f32.mrb[0].mxu0
      %v4149 = vadd.f32 0.0, %v4148
      %v4150 = vpop.f32.mrb[0].mxu0
      %v4151 = vpop.f32.mrb[0].mxu0
      %v4152 = vadd.f32 0.0, %v4151
      %v4153 = vpop.f32.mrb[0].mxu0
      %4154 = vmatprep.mubr.bf16.mxu0 0
      %4155 = vmatmul.mubr.bf16.gmra.mrb[0].mxu0 %v4071
      %v4156 = vpop.f32.mrb[0].mxu0
      %v4157 = vadd.f32 0.0, %v4156
      %v4158 = vpop.f32.mrb[0].mxu0
      %v4159 = vpop.f32.mrb[0].mxu0
      %v4160 = vadd.f32 0.0, %v4159
      %v4161 = vpop.f32.mrb[0].mxu0
      %4162 = vmatprep.mubr.bf16.mxu0 0
      %4163 = vmatmul.mubr.bf16.gmra.mrb[0].mxu0 %v4074
      %v4164 = vpop.f32.mrb[0].mxu0
      %v4165 = vadd.f32 0.0, %v4164
      %v4166 = vpop.f32.mrb[0].mxu0
      %v4167 = vpop.f32.mrb[0].mxu0
      %v4168 = vadd.f32 0.0, %v4167
      %v4169 = vpop.f32.mrb[0].mxu0
      %4170 = vmatprep.mubr.bf16.mxu0 0
      %4171 = vmatmul.mubr.bf16.gmra.mrb[0].mxu0 %v4077
      %v4172 = vpop.f32.mrb[0].mxu0
      %v4173 = vadd.f32 0.0, %v4172
      %v4174 = vpop.f32.mrb[0].mxu0
      %v4175 = vpop.f32.mrb[0].mxu0
      %v4176 = vadd.f32 0.0, %v4175
      %v4177 = vpop.f32.mrb[0].mxu0
      %4178 = vmatprep.mubr.bf16.mxu0 0
      %4179 = vmatmul.mubr.bf16.gmra.mrb[0].mxu0 %v4080
      %v4180 = vpop.f32.mrb[0].mxu0
      %v4181 = vadd.f32 0.0, %v4180
      %v4182 = vpop.f32.mrb[0].mxu0
      %v4183 = vpop.f32.mrb[0].mxu0
      %v4184 = vadd.f32 0.0, %v4183
      %v4185 = vpop.f32.mrb[0].mxu0
      %4186 = vdwg.mxu0
      %v4187 = vadd.f32 %v3966, %v4117
      %v4188 = vadd.f32 %v3967, %v4120
      %v4189 = vadd.f32 %v3968, %v4125
      %v4190 = vadd.f32 %v3969, %v4128
      %v4191 = vadd.f32 %v3970, %v4133
      %v4192 = vadd.f32 %v3971, %v4136
      %v4193 = vadd.f32 %v3972, %v4141
      %v4194 = vadd.f32 %v3973, %v4144
      %v4195 = vadd.f32 %v3974, %v4149
      %v4196 = vadd.f32 %v3975, %v4152
      %v4197 = vadd.f32 %v3976, %v4157
      %v4198 = vadd.f32 %v3977, %v4160
      %v4199 = vadd.f32 %v3978, %v4165
      %v4200 = vadd.f32 %v3979, %v4168
      %v4201 = vadd.f32 %v3980, %v4173
      %v4202 = vadd.f32 %v3981, %v4176
      %v4203 = vadd.f32 %v3982, %v4181
      %v4204 = vadd.f32 %v3983, %v4184
      %v4205 = vld [vmem:[#allocation2] sm:$0xc]
      %s4206 = scalar_lea.vmem %s3, 64
      %v4207 = vld [vmem:[%s4206] sm:$0xf]
      %v4208 = vld [vmem:[%s4206 + $0x4] sm:$0xf]
      %v4209 = vld [vmem:[%s4206 + $0x8] sm:$0xf]
      %v4210 = vld [vmem:[%s4206 + $0xc] sm:$0xf]
      %v4212 = vunpack.c.l.b16 %v4205
      %v4213 = vpack.c.b16 %v3408, %v4212
      %vm4214 = vcmask 1045504
      %v4215 = vrot.slane %v4213, 2
      %v4216 = vrot.slane %v3427, 2
      %v4217 = vsel %vm4214, %v4215, %v4216
      %v4218 = vrot.slane %v3428, 2
      %v4219 = vsel %vm4214, %v4216, %v4218
      %v4220 = vrot.slane %v3429, 2
      %v4221 = vsel %vm4214, %v4218, %v4220
      %v4222 = vrot.slane %v3430, 2
      %v4223 = vsel %vm4214, %v4220, %v4222
      %v4224 = vrot.slane %v3431, 2
      %v4225 = vsel %vm4214, %v4222, %v4224
      %v4226 = vrot.slane %v3432, 2
      %v4227 = vsel %vm4214, %v4224, %v4226
      %v4228 = vrot.slane %v3433, 2
      %v4229 = vsel %vm4214, %v4226, %v4228
      %v4230 = vrot.slane %v3434, 2
      %v4231 = vsel %vm4214, %v4228, %v4230
      %v4232 = vrot.slane %v3992, 2
      %v4233 = vsel %vm4214, %v4230, %v4232
      %v4238 = vunpack.c.l.b16 %v4207
      %v4239 = vunpack.c.l.b16 %v4208
      %v4240 = vunpack.c.l.b16 %v4209
      %v4241 = vunpack.c.l.b16 %v4210
      %v4242 = vpack.c.b16 %v4239, %v4238
      %v4243 = vpack.c.b16 %v4241, %v4240
      %v4247 = vsel %vm3525, %v4217, 0
      %v4250 = vsel %vm3525, %v4219, 0
      %v4253 = vsel %vm3525, %v4221, 0
      %v4256 = vsel %vm3525, %v4223, 0
      %v4259 = vsel %vm3525, %v4225, 0
      %v4262 = vsel %vm3525, %v4227, 0
      %v4265 = vsel %vm3525, %v4229, 0
      %v4268 = vsel %vm3525, %v4231, 0
      %v4271 = vsel %vm3525, %v4233, 0
      %4273 = vmatprep.subr.bf16.mxu0 0
      %4274 = vmatpush1.bf16.msra.mxu0 %v4242
      %4275 = vmatprep.subr.bf16.mxu0 0
      %4276 = vmatpush1.bf16.msra.mxu0 %v4243
      %4277 = vmatprep.subr.bf16.mxu0 0
      %4278 = vmatpush1.bf16.msra.mxu0 0
      %4279 = vmatprep.subr.bf16.mxu0 0
      %4280 = vmatpush1.bf16.msra.mxu0 0
      %4281 = vmatprep.subr.bf16.mxu0 0
      %4282 = vmatpush1.bf16.msra.mxu0 0
      %4283 = vmatprep.subr.bf16.mxu0 0
      %4284 = vmatpush1.bf16.msra.mxu0 0
      %4285 = vmatprep.subr.bf16.mxu0 0
      %4286 = vmatpush1.bf16.msra.mxu0 0
      %4287 = vmatprep.subr.bf16.mxu0 0
      %4288 = vmatpush1.bf16.msra.mxu0 0
      %4289 = vmatprep.subr.bf16.mxu0 0
      %4290 = vmatpush1.bf16.msra.mxu0 0
      %4291 = vmatprep.subr.bf16.mxu0 0
      %4292 = vmatpush1.bf16.msra.mxu0 0
      %4293 = vmatprep.subr.bf16.mxu0 0
      %4294 = vmatpush1.bf16.msra.mxu0 0
      %4295 = vmatprep.subr.bf16.mxu0 0
      %4296 = vmatpush1.bf16.msra.mxu0 0
      %4297 = vmatprep.subr.bf16.mxu0 0
      %4298 = vmatpush1.bf16.msra.mxu0 0
      %4299 = vmatprep.subr.bf16.mxu0 0
      %4300 = vmatpush1.bf16.msra.mxu0 0
      %4301 = vmatprep.subr.bf16.mxu0 0
      %4302 = vmatpush1.bf16.msra.mxu0 0
      %4303 = vmatprep.subr.bf16.mxu0 0
      %4304 = vmatpush1.bf16.msra.mxu0 0
      %4305 = vmatprep.mubr.bf16.mxu0 0
      %4306 = vmatmul.mubr.bf16.gmra.mrb[0].mxu0 %v4247
      %v4307 = vpop.f32.mrb[0].mxu0
      %v4308 = vadd.f32 0.0, %v4307
      %v4309 = vpop.f32.mrb[0].mxu0
      %v4310 = vpop.f32.mrb[0].mxu0
      %v4311 = vadd.f32 0.0, %v4310
      %v4312 = vpop.f32.mrb[0].mxu0
      %4313 = vmatprep.mubr.bf16.mxu0 0
      %4314 = vmatmul.mubr.bf16.gmra.mrb[0].mxu0 %v4250
      %v4315 = vpop.f32.mrb[0].mxu0
      %v4316 = vadd.f32 0.0, %v4315
      %v4317 = vpop.f32.mrb[0].mxu0
      %v4318 = vpop.f32.mrb[0].mxu0
      %v4319 = vadd.f32 0.0, %v4318
      %v4320 = vpop.f32.mrb[0].mxu0
      %4321 = vmatprep.mubr.bf16.mxu0 0
      %4322 = vmatmul.mubr.bf16.gmra.mrb[0].mxu0 %v4253
      %v4323 = vpop.f32.mrb[0].mxu0
      %v4324 = vadd.f32 0.0, %v4323
      %v4325 = vpop.f32.mrb[0].mxu0
      %v4326 = vpop.f32.mrb[0].mxu0
      %v4327 = vadd.f32 0.0, %v4326
      %v4328 = vpop.f32.mrb[0].mxu0
      %4329 = vmatprep.mubr.bf16.mxu0 0
      %4330 = vmatmul.mubr.bf16.gmra.mrb[0].mxu0 %v4256
      %v4331 = vpop.f32.mrb[0].mxu0
      %v4332 = vadd.f32 0.0, %v4331
      %v4333 = vpop.f32.mrb[0].mxu0
      %v4334 = vpop.f32.mrb[0].mxu0
      %v4335 = vadd.f32 0.0, %v4334
      %v4336 = vpop.f32.mrb[0].mxu0
      %4337 = vmatprep.mubr.bf16.mxu0 0
      %4338 = vmatmul.mubr.bf16.gmra.mrb[0].mxu0 %v4259
      %v4339 = vpop.f32.mrb[0].mxu0
      %v4340 = vadd.f32 0.0, %v4339
      %v4341 = vpop.f32.mrb[0].mxu0
      %v4342 = vpop.f32.mrb[0].mxu0
      %v4343 = vadd.f32 0.0, %v4342
      %v4344 = vpop.f32.mrb[0].mxu0
      %4345 = vmatprep.mubr.bf16.mxu0 0
      %4346 = vmatmul.mubr.bf16.gmra.mrb[0].mxu0 %v4262
      %v4347 = vpop.f32.mrb[0].mxu0
      %v4348 = vadd.f32 0.0, %v4347
      %v4349 = vpop.f32.mrb[0].mxu0
      %v4350 = vpop.f32.mrb[0].mxu0
      %v4351 = vadd.f32 0.0, %v4350
      %v4352 = vpop.f32.mrb[0].mxu0
      %4353 = vmatprep.mubr.bf16.mxu0 0
      %4354 = vmatmul.mubr.bf16.gmra.mrb[0].mxu0 %v4265
      %v4355 = vpop.f32.mrb[0].mxu0
      %v4356 = vadd.f32 0.0, %v4355
      %v4357 = vpop.f32.mrb[0].mxu0
      %v4358 = vpop.f32.mrb[0].mxu0
      %v4359 = vadd.f32 0.0, %v4358
      %v4360 = vpop.f32.mrb[0].mxu0
      %4361 = vmatprep.mubr.bf16.mxu0 0
      %4362 = vmatmul.mubr.bf16.gmra.mrb[0].mxu0 %v4268
      %v4363 = vpop.f32.mrb[0].mxu0
      %v4364 = vadd.f32 0.0, %v4363
      %v4365 = vpop.f32.mrb[0].mxu0
      %v4366 = vpop.f32.mrb[0].mxu0
      %v4367 = vadd.f32 0.0, %v4366
      %v4368 = vpop.f32.mrb[0].mxu0
      %4369 = vmatprep.mubr.bf16.mxu0 0
      %4370 = vmatmul.mubr.bf16.gmra.mrb[0].mxu0 %v4271
      %v4371 = vpop.f32.mrb[0].mxu0
      %v4372 = vadd.f32 0.0, %v4371
      %v4373 = vpop.f32.mrb[0].mxu0
      %v4374 = vpop.f32.mrb[0].mxu0
      %v4375 = vadd.f32 0.0, %v4374
      %v4376 = vpop.f32.mrb[0].mxu0
      %4377 = vdwg.mxu0
      %v4378 = vadd.f32 %v4187, %v4308
      %v4379 = vadd.f32 %v4188, %v4311
      %v4380 = vadd.f32 %v4189, %v4316
      %v4381 = vadd.f32 %v4190, %v4319
      %v4382 = vadd.f32 %v4191, %v4324
      %v4383 = vadd.f32 %v4192, %v4327
      %v4384 = vadd.f32 %v4193, %v4332
      %v4385 = vadd.f32 %v4194, %v4335
      %v4386 = vadd.f32 %v4195, %v4340
      %v4387 = vadd.f32 %v4196, %v4343
      %v4388 = vadd.f32 %v4197, %v4348
      %v4389 = vadd.f32 %v4198, %v4351
      %v4390 = vadd.f32 %v4199, %v4356
      %v4391 = vadd.f32 %v4200, %v4359
      %v4392 = vadd.f32 %v4201, %v4364
      %v4393 = vadd.f32 %v4202, %v4367
      %v4394 = vadd.f32 %v4203, %v4372
      %v4395 = vadd.f32 %v4204, %v4375
      %v4396 = vld [vmem:[%s4] sm:$0x1]
      %v4398 = vlaneseq
      %v4399 = vshrl.u32 %v4398, 7
      %v4400 = vsub.s32 0, %v4399
      %v4401 = vrot.slane %v4396, %v4400
      %v4403 = vadd.f32 %v4378, %v4401
      %v4404 = vadd.f32 %v4379, %v4401
      %v4405 = vadd.f32 %v4380, %v4401
      %v4406 = vadd.f32 %v4381, %v4401
      %v4407 = vadd.f32 %v4382, %v4401
      %v4408 = vadd.f32 %v4383, %v4401
      %v4409 = vadd.f32 %v4384, %v4401
      %v4410 = vadd.f32 %v4385, %v4401
      %v4411 = vadd.f32 %v4386, %v4401
      %v4412 = vadd.f32 %v4387, %v4401
      %v4413 = vadd.f32 %v4388, %v4401
      %v4414 = vadd.f32 %v4389, %v4401
      %v4415 = vadd.f32 %v4390, %v4401
      %v4416 = vadd.f32 %v4391, %v4401
      %v4417 = vadd.f32 %v4392, %v4401
      %v4418 = vadd.f32 %v4393, %v4401
      %v4419 = vadd.f32 %v4394, %v4401
      %v4420 = vadd.f32 %v4395, %v4401
      %v4421 = vmax.f32 %v4403, 0.0
      %v4422 = vmax.f32 %v4404, 0.0
      %v4423 = vmax.f32 %v4405, 0.0
      %v4424 = vmax.f32 %v4406, 0.0
      %v4425 = vmax.f32 %v4407, 0.0
      %v4426 = vmax.f32 %v4408, 0.0
      %v4427 = vmax.f32 %v4409, 0.0
      %v4428 = vmax.f32 %v4410, 0.0
      %v4429 = vmax.f32 %v4411, 0.0
      %v4430 = vmax.f32 %v4412, 0.0
      %v4431 = vmax.f32 %v4413, 0.0
      %v4432 = vmax.f32 %v4414, 0.0
      %v4433 = vmax.f32 %v4415, 0.0
      %v4434 = vmax.f32 %v4416, 0.0
      %v4435 = vmax.f32 %v4417, 0.0
      %v4436 = vmax.f32 %v4418, 0.0
      %v4437 = vmax.f32 %v4419, 0.0
      %v4438 = vmax.f32 %v4420, 0.0
      %v4456 = vcombine.high %v4421, %v4421
      %v4457 = vcombine.high %v4422, %v4422
      %v4458 = vcombine.high %v4423, %v4423
      %v4459 = vcombine.high %v4424, %v4424
      %v4460 = vcombine.high %v4425, %v4425
      %v4461 = vcombine.high %v4426, %v4426
      %v4462 = vcombine.high %v4427, %v4427
      %v4463 = vcombine.high %v4428, %v4428
      %v4464 = vcombine.high %v4429, %v4429
      %v4465 = vcombine.high %v4430, %v4430
      %v4466 = vcombine.high %v4431, %v4431
      %v4467 = vcombine.high %v4432, %v4432
      %v4468 = vcombine.high %v4433, %v4433
      %v4469 = vcombine.high %v4434, %v4434
      %v4470 = vcombine.high %v4435, %v4435
      %v4471 = vcombine.high %v4436, %v4436
      %v4472 = vcombine.high %v4437, %v4437
      %v4490 = vsel %vm1418, %v4421, -inf
      %v4491 = vrot.slane %v4490, 4
      %v4492 = vmax.f32 %v4490, %v4491
      %v4493 = vrot.slane %v4492, 2
      %v4494 = vmax.f32 %v4492, %v4493
      %v4495 = vrot.slane %v4494, 1
      %v4496 = vmax.f32 %v4494, %v4495
      %v4497 = vsel %vm1418, %v4456, -inf
      %v4498 = vrot.slane %v4497, 4
      %v4499 = vmax.f32 %v4497, %v4498
      %v4500 = vrot.slane %v4499, 2
      %v4501 = vmax.f32 %v4499, %v4500
      %v4502 = vrot.slane %v4501, 1
      %v4503 = vmax.f32 %v4501, %v4502
      %v4504 = vsel %vm1418, %v4422, -inf
      %v4505 = vrot.slane %v4504, 4
      %v4506 = vmax.f32 %v4504, %v4505
      %v4507 = vrot.slane %v4506, 2
      %v4508 = vmax.f32 %v4506, %v4507
      %v4509 = vrot.slane %v4508, 1
      %v4510 = vmax.f32 %v4508, %v4509
      %v4511 = vsel %vm1418, %v4457, -inf
      %v4512 = vrot.slane %v4511, 4
      %v4513 = vmax.f32 %v4511, %v4512
      %v4514 = vrot.slane %v4513, 2
      %v4515 = vmax.f32 %v4513, %v4514
      %v4516 = vrot.slane %v4515, 1
      %v4517 = vmax.f32 %v4515, %v4516
      %v4518 = vsel %vm1418, %v4423, -inf
      %v4519 = vrot.slane %v4518, 4
      %v4520 = vmax.f32 %v4518, %v4519
      %v4521 = vrot.slane %v4520, 2
      %v4522 = vmax.f32 %v4520, %v4521
      %v4523 = vrot.slane %v4522, 1
      %v4524 = vmax.f32 %v4522, %v4523
      %v4525 = vsel %vm1418, %v4458, -inf
      %v4526 = vrot.slane %v4525, 4
      %v4527 = vmax.f32 %v4525, %v4526
      %v4528 = vrot.slane %v4527, 2
      %v4529 = vmax.f32 %v4527, %v4528
      %v4530 = vrot.slane %v4529, 1
      %v4531 = vmax.f32 %v4529, %v4530
      %v4532 = vsel %vm1418, %v4424, -inf
      %v4533 = vrot.slane %v4532, 4
      %v4534 = vmax.f32 %v4532, %v4533
      %v4535 = vrot.slane %v4534, 2
      %v4536 = vmax.f32 %v4534, %v4535
      %v4537 = vrot.slane %v4536, 1
      %v4538 = vmax.f32 %v4536, %v4537
      %v4539 = vsel %vm1418, %v4459, -inf
      %v4540 = vrot.slane %v4539, 4
      %v4541 = vmax.f32 %v4539, %v4540
      %v4542 = vrot.slane %v4541, 2
      %v4543 = vmax.f32 %v4541, %v4542
      %v4544 = vrot.slane %v4543, 1
      %v4545 = vmax.f32 %v4543, %v4544
      %v4546 = vsel %vm1418, %v4425, -inf
      %v4547 = vrot.slane %v4546, 4
      %v4548 = vmax.f32 %v4546, %v4547
      %v4549 = vrot.slane %v4548, 2
      %v4550 = vmax.f32 %v4548, %v4549
      %v4551 = vrot.slane %v4550, 1
      %v4552 = vmax.f32 %v4550, %v4551
      %v4553 = vsel %vm1418, %v4460, -inf
      %v4554 = vrot.slane %v4553, 4
      %v4555 = vmax.f32 %v4553, %v4554
      %v4556 = vrot.slane %v4555, 2
      %v4557 = vmax.f32 %v4555, %v4556
      %v4558 = vrot.slane %v4557, 1
      %v4559 = vmax.f32 %v4557, %v4558
      %v4560 = vsel %vm1418, %v4426, -inf
      %v4561 = vrot.slane %v4560, 4
      %v4562 = vmax.f32 %v4560, %v4561
      %v4563 = vrot.slane %v4562, 2
      %v4564 = vmax.f32 %v4562, %v4563
      %v4565 = vrot.slane %v4564, 1
      %v4566 = vmax.f32 %v4564, %v4565
      %v4567 = vsel %vm1418, %v4461, -inf
      %v4568 = vrot.slane %v4567, 4
      %v4569 = vmax.f32 %v4567, %v4568
      %v4570 = vrot.slane %v4569, 2
      %v4571 = vmax.f32 %v4569, %v4570
      %v4572 = vrot.slane %v4571, 1
      %v4573 = vmax.f32 %v4571, %v4572
      %v4574 = vsel %vm1418, %v4427, -inf
      %v4575 = vrot.slane %v4574, 4
      %v4576 = vmax.f32 %v4574, %v4575
      %v4577 = vrot.slane %v4576, 2
      %v4578 = vmax.f32 %v4576, %v4577
      %v4579 = vrot.slane %v4578, 1
      %v4580 = vmax.f32 %v4578, %v4579
      %v4581 = vsel %vm1418, %v4462, -inf
      %v4582 = vrot.slane %v4581, 4
      %v4583 = vmax.f32 %v4581, %v4582
      %v4584 = vrot.slane %v4583, 2
      %v4585 = vmax.f32 %v4583, %v4584
      %v4586 = vrot.slane %v4585, 1
      %v4587 = vmax.f32 %v4585, %v4586
      %v4588 = vsel %vm1418, %v4428, -inf
      %v4589 = vrot.slane %v4588, 4
      %v4590 = vmax.f32 %v4588, %v4589
      %v4591 = vrot.slane %v4590, 2
      %v4592 = vmax.f32 %v4590, %v4591
      %v4593 = vrot.slane %v4592, 1
      %v4594 = vmax.f32 %v4592, %v4593
      %v4595 = vsel %vm1418, %v4463, -inf
      %v4596 = vrot.slane %v4595, 4
      %v4597 = vmax.f32 %v4595, %v4596
      %v4598 = vrot.slane %v4597, 2
      %v4599 = vmax.f32 %v4597, %v4598
      %v4600 = vrot.slane %v4599, 1
      %v4601 = vmax.f32 %v4599, %v4600
      %v4602 = vsel %vm1418, %v4429, -inf
      %v4603 = vrot.slane %v4602, 4
      %v4604 = vmax.f32 %v4602, %v4603
      %v4605 = vrot.slane %v4604, 2
      %v4606 = vmax.f32 %v4604, %v4605
      %v4607 = vrot.slane %v4606, 1
      %v4608 = vmax.f32 %v4606, %v4607
      %v4609 = vsel %vm1418, %v4464, -inf
      %v4610 = vrot.slane %v4609, 4
      %v4611 = vmax.f32 %v4609, %v4610
      %v4612 = vrot.slane %v4611, 2
      %v4613 = vmax.f32 %v4611, %v4612
      %v4614 = vrot.slane %v4613, 1
      %v4615 = vmax.f32 %v4613, %v4614
      %v4616 = vsel %vm1418, %v4430, -inf
      %v4617 = vrot.slane %v4616, 4
      %v4618 = vmax.f32 %v4616, %v4617
      %v4619 = vrot.slane %v4618, 2
      %v4620 = vmax.f32 %v4618, %v4619
      %v4621 = vrot.slane %v4620, 1
      %v4622 = vmax.f32 %v4620, %v4621
      %v4623 = vsel %vm1418, %v4465, -inf
      %v4624 = vrot.slane %v4623, 4
      %v4625 = vmax.f32 %v4623, %v4624
      %v4626 = vrot.slane %v4625, 2
      %v4627 = vmax.f32 %v4625, %v4626
      %v4628 = vrot.slane %v4627, 1
      %v4629 = vmax.f32 %v4627, %v4628
      %v4630 = vsel %vm1418, %v4431, -inf
      %v4631 = vrot.slane %v4630, 4
      %v4632 = vmax.f32 %v4630, %v4631
      %v4633 = vrot.slane %v4632, 2
      %v4634 = vmax.f32 %v4632, %v4633
      %v4635 = vrot.slane %v4634, 1
      %v4636 = vmax.f32 %v4634, %v4635
      %v4637 = vsel %vm1418, %v4466, -inf
      %v4638 = vrot.slane %v4637, 4
      %v4639 = vmax.f32 %v4637, %v4638
      %v4640 = vrot.slane %v4639, 2
      %v4641 = vmax.f32 %v4639, %v4640
      %v4642 = vrot.slane %v4641, 1
      %v4643 = vmax.f32 %v4641, %v4642
      %v4644 = vsel %vm1418, %v4432, -inf
      %v4645 = vrot.slane %v4644, 4
      %v4646 = vmax.f32 %v4644, %v4645
      %v4647 = vrot.slane %v4646, 2
      %v4648 = vmax.f32 %v4646, %v4647
      %v4649 = vrot.slane %v4648, 1
      %v4650 = vmax.f32 %v4648, %v4649
      %v4651 = vsel %vm1418, %v4467, -inf
      %v4652 = vrot.slane %v4651, 4
      %v4653 = vmax.f32 %v4651, %v4652
      %v4654 = vrot.slane %v4653, 2
      %v4655 = vmax.f32 %v4653, %v4654
      %v4656 = vrot.slane %v4655, 1
      %v4657 = vmax.f32 %v4655, %v4656
      %v4658 = vsel %vm1418, %v4433, -inf
      %v4659 = vrot.slane %v4658, 4
      %v4660 = vmax.f32 %v4658, %v4659
      %v4661 = vrot.slane %v4660, 2
      %v4662 = vmax.f32 %v4660, %v4661
      %v4663 = vrot.slane %v4662, 1
      %v4664 = vmax.f32 %v4662, %v4663
      %v4665 = vsel %vm1418, %v4468, -inf
      %v4666 = vrot.slane %v4665, 4
      %v4667 = vmax.f32 %v4665, %v4666
      %v4668 = vrot.slane %v4667, 2
      %v4669 = vmax.f32 %v4667, %v4668
      %v4670 = vrot.slane %v4669, 1
      %v4671 = vmax.f32 %v4669, %v4670
      %v4672 = vsel %vm1418, %v4434, -inf
      %v4673 = vrot.slane %v4672, 4
      %v4674 = vmax.f32 %v4672, %v4673
      %v4675 = vrot.slane %v4674, 2
      %v4676 = vmax.f32 %v4674, %v4675
      %v4677 = vrot.slane %v4676, 1
      %v4678 = vmax.f32 %v4676, %v4677
      %v4679 = vsel %vm1418, %v4469, -inf
      %v4680 = vrot.slane %v4679, 4
      %v4681 = vmax.f32 %v4679, %v4680
      %v4682 = vrot.slane %v4681, 2
      %v4683 = vmax.f32 %v4681, %v4682
      %v4684 = vrot.slane %v4683, 1
      %v4685 = vmax.f32 %v4683, %v4684
      %v4686 = vsel %vm1418, %v4435, -inf
      %v4687 = vrot.slane %v4686, 4
      %v4688 = vmax.f32 %v4686, %v4687
      %v4689 = vrot.slane %v4688, 2
      %v4690 = vmax.f32 %v4688, %v4689
      %v4691 = vrot.slane %v4690, 1
      %v4692 = vmax.f32 %v4690, %v4691
      %v4693 = vsel %vm1418, %v4470, -inf
      %v4694 = vrot.slane %v4693, 4
      %v4695 = vmax.f32 %v4693, %v4694
      %v4696 = vrot.slane %v4695, 2
      %v4697 = vmax.f32 %v4695, %v4696
      %v4698 = vrot.slane %v4697, 1
      %v4699 = vmax.f32 %v4697, %v4698
      %v4700 = vsel %vm1418, %v4436, -inf
      %v4701 = vrot.slane %v4700, 4
      %v4702 = vmax.f32 %v4700, %v4701
      %v4703 = vrot.slane %v4702, 2
      %v4704 = vmax.f32 %v4702, %v4703
      %v4705 = vrot.slane %v4704, 1
      %v4706 = vmax.f32 %v4704, %v4705
      %v4707 = vsel %vm1418, %v4471, -inf
      %v4708 = vrot.slane %v4707, 4
      %v4709 = vmax.f32 %v4707, %v4708
      %v4710 = vrot.slane %v4709, 2
      %v4711 = vmax.f32 %v4709, %v4710
      %v4712 = vrot.slane %v4711, 1
      %v4713 = vmax.f32 %v4711, %v4712
      %v4714 = vsel %vm1418, %v4437, -inf
      %v4715 = vrot.slane %v4714, 4
      %v4716 = vmax.f32 %v4714, %v4715
      %v4717 = vrot.slane %v4716, 2
      %v4718 = vmax.f32 %v4716, %v4717
      %v4719 = vrot.slane %v4718, 1
      %v4720 = vmax.f32 %v4718, %v4719
      %v4721 = vsel %vm1418, %v4472, -inf
      %v4722 = vrot.slane %v4721, 4
      %v4723 = vmax.f32 %v4721, %v4722
      %v4724 = vrot.slane %v4723, 2
      %v4725 = vmax.f32 %v4723, %v4724
      %v4726 = vrot.slane %v4725, 1
      %v4727 = vmax.f32 %v4725, %v4726
      %v4728 = vsel %vm1418, %v4438, -inf
      %v4729 = vrot.slane %v4728, 4
      %v4730 = vmax.f32 %v4728, %v4729
      %v4731 = vrot.slane %v4730, 2
      %v4732 = vmax.f32 %v4730, %v4731
      %v4733 = vrot.slane %v4732, 1
      %v4734 = vmax.f32 %v4732, %v4733
      %v4735 = vpack.c.bf16 %v4496, %v4496
      %v4736 = vpack.c.bf16 %v4503, %v4503
      %v4737 = vpack.c.bf16 %v4510, %v4510
      %v4738 = vpack.c.bf16 %v4517, %v4517
      %v4739 = vpack.c.bf16 %v4524, %v4524
      %v4740 = vpack.c.bf16 %v4531, %v4531
      %v4741 = vpack.c.bf16 %v4538, %v4538
      %v4742 = vpack.c.bf16 %v4545, %v4545
      %v4743 = vpack.c.bf16 %v4552, %v4552
      %v4744 = vpack.c.bf16 %v4559, %v4559
      %v4745 = vpack.c.bf16 %v4566, %v4566
      %v4746 = vpack.c.bf16 %v4573, %v4573
      %v4747 = vpack.c.bf16 %v4580, %v4580
      %v4748 = vpack.c.bf16 %v4587, %v4587
      %v4749 = vpack.c.bf16 %v4594, %v4594
      %v4750 = vpack.c.bf16 %v4601, %v4601
      %v4751 = vpack.c.bf16 %v4608, %v4608
      %v4752 = vpack.c.bf16 %v4615, %v4615
      %v4753 = vpack.c.bf16 %v4622, %v4622
      %v4754 = vpack.c.bf16 %v4629, %v4629
      %v4755 = vpack.c.bf16 %v4636, %v4636
      %v4756 = vpack.c.bf16 %v4643, %v4643
      %v4757 = vpack.c.bf16 %v4650, %v4650
      %v4758 = vpack.c.bf16 %v4657, %v4657
      %v4759 = vpack.c.bf16 %v4664, %v4664
      %v4760 = vpack.c.bf16 %v4671, %v4671
      %v4761 = vpack.c.bf16 %v4678, %v4678
      %v4762 = vpack.c.bf16 %v4685, %v4685
      %v4763 = vpack.c.bf16 %v4692, %v4692
      %v4764 = vpack.c.bf16 %v4699, %v4699
      %v4765 = vpack.c.bf16 %v4706, %v4706
      %v4766 = vpack.c.bf16 %v4713, %v4713
      %v4767 = vpack.c.bf16 %v4720, %v4720
      %v4768 = vpack.c.bf16 %v4727, %v4727
      %v4769 = vpack.c.bf16 %v4734, %v4734
      %v4805 = vunpack.c.l.b16 %v4735
      %v4806 = vunpack.c.l.b16 %v4736
      %v4807 = vunpack.c.l.b16 %v4737
      %v4808 = vunpack.c.l.b16 %v4738
      %v4809 = vunpack.c.l.b16 %v4739
      %v4810 = vunpack.c.l.b16 %v4740
      %v4811 = vunpack.c.l.b16 %v4741
      %v4812 = vunpack.c.l.b16 %v4742
      %v4813 = vunpack.c.l.b16 %v4743
      %v4814 = vunpack.c.l.b16 %v4744
      %v4815 = vunpack.c.l.b16 %v4745
      %v4816 = vunpack.c.l.b16 %v4746
      %v4817 = vunpack.c.l.b16 %v4747
      %v4818 = vunpack.c.l.b16 %v4748
      %v4819 = vunpack.c.l.b16 %v4749
      %v4820 = vunpack.c.l.b16 %v4750
      %v4821 = vunpack.c.l.b16 %v4751
      %v4822 = vunpack.c.l.b16 %v4752
      %v4823 = vunpack.c.l.b16 %v4753
      %v4824 = vunpack.c.l.b16 %v4754
      %v4825 = vunpack.c.l.b16 %v4755
      %v4826 = vunpack.c.l.b16 %v4756
      %v4827 = vunpack.c.l.b16 %v4757
      %v4828 = vunpack.c.l.b16 %v4758
      %v4829 = vunpack.c.l.b16 %v4759
      %v4830 = vunpack.c.l.b16 %v4760
      %v4831 = vunpack.c.l.b16 %v4761
      %v4832 = vunpack.c.l.b16 %v4762
      %v4833 = vunpack.c.l.b16 %v4763
      %v4834 = vunpack.c.l.b16 %v4764
      %v4835 = vunpack.c.l.b16 %v4765
      %v4836 = vunpack.c.l.b16 %v4766
      %v4837 = vunpack.c.l.b16 %v4767
      %v4838 = vunpack.c.l.b16 %v4768
      %v4839 = vunpack.c.l.b16 %v4769
      %v4840 = vpack.c.b16 %v4805, %v4805
      %v4841 = vpack.c.b16 %v4806, %v4806
      %v4842 = vpack.c.b16 %v4807, %v4807
      %v4843 = vpack.c.b16 %v4808, %v4808
      %v4844 = vpack.c.b16 %v4809, %v4809
      %v4845 = vpack.c.b16 %v4810, %v4810
      %v4846 = vpack.c.b16 %v4811, %v4811
      %v4847 = vpack.c.b16 %v4812, %v4812
      %v4848 = vpack.c.b16 %v4813, %v4813
      %v4849 = vpack.c.b16 %v4814, %v4814
      %v4850 = vpack.c.b16 %v4815, %v4815
      %v4851 = vpack.c.b16 %v4816, %v4816
      %v4852 = vpack.c.b16 %v4817, %v4817
      %v4853 = vpack.c.b16 %v4818, %v4818
      %v4854 = vpack.c.b16 %v4819, %v4819
      %v4855 = vpack.c.b16 %v4820, %v4820
      %v4856 = vpack.c.b16 %v4821, %v4821
      %v4857 = vpack.c.b16 %v4822, %v4822
      %v4858 = vpack.c.b16 %v4823, %v4823
      %v4859 = vpack.c.b16 %v4824, %v4824
      %v4860 = vpack.c.b16 %v4825, %v4825
      %v4861 = vpack.c.b16 %v4826, %v4826
      %v4862 = vpack.c.b16 %v4827, %v4827
      %v4863 = vpack.c.b16 %v4828, %v4828
      %v4864 = vpack.c.b16 %v4829, %v4829
      %v4865 = vpack.c.b16 %v4830, %v4830
      %v4866 = vpack.c.b16 %v4831, %v4831
      %v4867 = vpack.c.b16 %v4832, %v4832
      %v4868 = vpack.c.b16 %v4833, %v4833
      %v4869 = vpack.c.b16 %v4834, %v4834
      %v4870 = vpack.c.b16 %v4835, %v4835
      %v4871 = vpack.c.b16 %v4836, %v4836
      %v4872 = vpack.c.b16 %v4837, %v4837
      %v4873 = vpack.c.b16 %v4838, %v4838
      %v4874 = vpack.c.b16 %v4839, %v4839
      %v4875 = vunpack.c.l.b16 %v4840
      %v4876 = vunpack.c.l.b16 %v4841
      %v4877 = vunpack.c.l.b16 %v4842
      %v4878 = vunpack.c.l.b16 %v4843
      %v4879 = vunpack.c.l.b16 %v4844
      %v4880 = vunpack.c.l.b16 %v4845
      %v4881 = vunpack.c.l.b16 %v4846
      %v4882 = vunpack.c.l.b16 %v4847
      %v4883 = vunpack.c.l.b16 %v4848
      %v4884 = vunpack.c.l.b16 %v4849
      %v4885 = vunpack.c.l.b16 %v4850
      %v4886 = vunpack.c.l.b16 %v4851
      %v4887 = vunpack.c.l.b16 %v4852
      %v4888 = vunpack.c.l.b16 %v4853
      %v4889 = vunpack.c.l.b16 %v4854
      %v4890 = vunpack.c.l.b16 %v4855
      %v4891 = vunpack.c.l.b16 %v4856
      %v4892 = vunpack.c.l.b16 %v4857
      %v4893 = vunpack.c.l.b16 %v4858
      %v4894 = vunpack.c.l.b16 %v4859
      %v4895 = vunpack.c.l.b16 %v4860
      %v4896 = vunpack.c.l.b16 %v4861
      %v4897 = vunpack.c.l.b16 %v4862
      %v4898 = vunpack.c.l.b16 %v4863
      %v4899 = vunpack.c.l.b16 %v4864
      %v4900 = vunpack.c.l.b16 %v4865
      %v4901 = vunpack.c.l.b16 %v4866
      %v4902 = vunpack.c.l.b16 %v4867
      %v4903 = vunpack.c.l.b16 %v4868
      %v4904 = vunpack.c.l.b16 %v4869
      %v4905 = vunpack.c.l.b16 %v4870
      %v4906 = vunpack.c.l.b16 %v4871
      %v4907 = vunpack.c.l.b16 %v4872
      %v4908 = vunpack.c.l.b16 %v4873
      %v4909 = vunpack.c.l.b16 %v4874
      %v4910 = vsel %vm3159, %v4876, %v4875
      %v4911 = vsel %vm3161, %v4877, %v4910
      %v4912 = vsel %vm3163, %v4878, %v4911
      %v4913 = vsel %vm3165, %v4879, %v4912
      %v4914 = vsel %vm3167, %v4880, %v4913
      %v4915 = vsel %vm3169, %v4881, %v4914
      %v4916 = vsel %vm3171, %v4882, %v4915
      %v4917 = vsel %vm3159, %v4884, %v4883
      %v4918 = vsel %vm3161, %v4885, %v4917
      %v4919 = vsel %vm3163, %v4886, %v4918
      %v4920 = vsel %vm3165, %v4887, %v4919
      %v4921 = vsel %vm3167, %v4888, %v4920
      %v4922 = vsel %vm3169, %v4889, %v4921
      %v4923 = vsel %vm3171, %v4890, %v4922
      %v4924 = vsel %vm3159, %v4892, %v4891
      %v4925 = vsel %vm3161, %v4893, %v4924
      %v4926 = vsel %vm3163, %v4894, %v4925
      %v4927 = vsel %vm3165, %v4895, %v4926
      %v4928 = vsel %vm3167, %v4896, %v4927
      %v4929 = vsel %vm3169, %v4897, %v4928
      %v4930 = vsel %vm3171, %v4898, %v4929
      %v4931 = vsel %vm3159, %v4900, %v4899
      %v4932 = vsel %vm3161, %v4901, %v4931
      %v4933 = vsel %vm3163, %v4902, %v4932
      %v4934 = vsel %vm3165, %v4903, %v4933
      %v4935 = vsel %vm3167, %v4904, %v4934
      %v4936 = vsel %vm3169, %v4905, %v4935
      %v4937 = vsel %vm3171, %v4906, %v4936
      %v4938 = vsel %vm3159, %v4908, %v4907
      %v4939 = vsel %vm3161, %v4909, %v4938
      %v4940 = vpack.c.b16 %v4916, %v4916
      %v4941 = vpack.c.b16 %v4923, %v4923
      %v4942 = vpack.c.b16 %v4930, %v4930
      %v4943 = vpack.c.b16 %v4937, %v4937
      %v4944 = vpack.c.b16 %v4939, %v4939
      %4950 = vst.msk [vmem:[#allocation3] sm:$0xf] %vm1418, %v4940
      %4951 = vst.msk [vmem:[#allocation3 + $0x4] sm:$0xf] %vm1418, %v4941
      %4952 = vst.msk [vmem:[#allocation3 + $0x8] sm:$0xf] %vm1418, %v4942
      %4953 = vst.msk [vmem:[#allocation3 + $0xc] sm:$0xf] %vm1418, %v4943
      %vm4954 = vcmask 254976
      %vm4955 = vsmask.f32 1280
      %vm4956 = vmand %vm4954, %vm4955
      %v4957 = vld [vmem:[#allocation3 + $0x10] sm:$0x3]
      %v4958 = vsel %vm4956, %v4944, %v4957
      %4959 = vst [vmem:[#allocation3 + $0x10] sm:$0x3] %v4958
      %vm4960 = vcmask 257025
      %vm4961 = vsmask.f32 7942
      %vm4962 = vmand %vm4960, %vm4961
      %v4963 = vld [vmem:[#allocation3 + $0x10] sm:$0xe]
      %v4964 = vsel %vm4962, 0, %v4963
      %4965 = vst [vmem:[#allocation3 + $0x10] sm:$0xe] %v4964
      %v4966 = vld [vmem:[#allocation3] sm:$0xf]
      %v4967 = vld [vmem:[#allocation3 + $0x4] sm:$0xf]
      %v4968 = vld [vmem:[#allocation3 + $0x8] sm:$0xf]
      %v4969 = vld [vmem:[#allocation3 + $0xc] sm:$0xf]
      %v4970 = vld [vmem:[%s5] sm:$0xf]
      %v4971 = vld [vmem:[%s5 + $0x4] sm:$0xf]
      %v4972 = vld [vmem:[%s5 + $0x8] sm:$0xf]
      %v4973 = vld [vmem:[%s5 + $0xc] sm:$0xf]
      %v4974 = vld [vmem:[#allocation3 + $0x10] sm:$0x1]
      %s4975 = scalar_lea.vmem %s5, 16
      %v4976 = vld [vmem:[%s4975] sm:$0xf]
      %v4977 = vld [vmem:[%s4975 + $0x4] sm:$0xf]
      %v4978 = vld [vmem:[%s4975 + $0x8] sm:$0xf]
      %v4979 = vld [vmem:[%s4975 + $0xc] sm:$0xf]
      %v4985 = vunpack.c.l.b16 %v4966
      %v4986 = vunpack.c.l.b16 %v4967
      %v4987 = vunpack.c.l.b16 %v4968
      %v4988 = vunpack.c.l.b16 %v4969
      %v4989 = vunpack.c.l.b16 %v4974
      %v4990 = vpack.c.b16 %v4986, %v4985
      %v4991 = vpack.c.b16 %v4988, %v4987
      %v4992 = vpack.c.b16 %v4989, %v4989
      %v4994 = vshrl.u32 %v4990, 16
      %v4996 = vshll.u32 %v4990, 16
      %v4998 = vrot.slane %v4996, 1
      %v4999 = vor.u32 %v4994, %v4998
      %v5001 = vshll.u32 %v4991, 16
      %v5003 = vrot.slane %v5001, 1
      %v5004 = vsel %vm3436, %v4999, %v5003
      %v5005 = vshrl.u32 %v4991, 16
      %v5007 = vor.u32 %v5005, %v5003
      %v5009 = vshll.u32 %v4992, 16
      %v5011 = vrot.slane %v5009, 1
      %v5012 = vsel %vm3436, %v5007, %v5011
      %v5017 = vunpack.c.l.b16 %v4976
      %v5018 = vunpack.c.l.b16 %v4977
      %v5019 = vunpack.c.l.b16 %v4978
      %v5020 = vunpack.c.l.b16 %v4979
      %v5021 = vpack.c.b16 %v5018, %v5017
      %v5022 = vpack.c.b16 %v5020, %v5019
      %v5026 = vsel %vm3525, %v5004, 0
      %v5029 = vsel %vm3525, %v5012, 0
      %5031 = vmatprep.subr.bf16.mxu0 0
      %5032 = vmatpush1.bf16.msra.mxu0 %v5021
      %5033 = vmatprep.subr.bf16.mxu0 0
      %5034 = vmatpush1.bf16.msra.mxu0 %v5022
      %5035 = vmatprep.subr.bf16.mxu0 0
      %5036 = vmatpush1.bf16.msra.mxu0 0
      %5037 = vmatprep.subr.bf16.mxu0 0
      %5038 = vmatpush1.bf16.msra.mxu0 0
      %5039 = vmatprep.subr.bf16.mxu0 0
      %5040 = vmatpush1.bf16.msra.mxu0 0
      %5041 = vmatprep.subr.bf16.mxu0 0
      %5042 = vmatpush1.bf16.msra.mxu0 0
      %5043 = vmatprep.subr.bf16.mxu0 0
      %5044 = vmatpush1.bf16.msra.mxu0 0
      %5045 = vmatprep.subr.bf16.mxu0 0
      %5046 = vmatpush1.bf16.msra.mxu0 0
      %5047 = vmatprep.subr.bf16.mxu0 0
      %5048 = vmatpush1.bf16.msra.mxu0 0
      %5049 = vmatprep.subr.bf16.mxu0 0
      %5050 = vmatpush1.bf16.msra.mxu0 0
      %5051 = vmatprep.subr.bf16.mxu0 0
      %5052 = vmatpush1.bf16.msra.mxu0 0
      %5053 = vmatprep.subr.bf16.mxu0 0
      %5054 = vmatpush1.bf16.msra.mxu0 0
      %5055 = vmatprep.subr.bf16.mxu0 0
      %5056 = vmatpush1.bf16.msra.mxu0 0
      %5057 = vmatprep.subr.bf16.mxu0 0
      %5058 = vmatpush1.bf16.msra.mxu0 0
      %5059 = vmatprep.subr.bf16.mxu0 0
      %5060 = vmatpush1.bf16.msra.mxu0 0
      %5061 = vmatprep.subr.bf16.mxu0 0
      %5062 = vmatpush1.bf16.msra.mxu0 0
      %5063 = vmatprep.mubr.bf16.mxu0 0
      %5064 = vmatmul.mubr.bf16.gmra.mrb[0].mxu0 %v5026
      %v5065 = vpop.f32.mrb[0].mxu0
      %v5066 = vadd.f32 0.0, %v5065
      %v5067 = vpop.f32.mrb[0].mxu0
      %v5068 = vpop.f32.mrb[0].mxu0
      %v5069 = vadd.f32 0.0, %v5068
      %v5070 = vpop.f32.mrb[0].mxu0
      %5071 = vmatprep.mubr.bf16.mxu0 0
      %5072 = vmatmul.mubr.bf16.gmra.mrb[0].mxu0 %v5029
      %v5073 = vpop.f32.mrb[0].mxu0
      %v5074 = vadd.f32 0.0, %v5073
      %v5075 = vpop.f32.mrb[0].mxu0
      %v5076 = vpop.f32.mrb[0].mxu0
      %v5077 = vadd.f32 0.0, %v5076
      %v5078 = vpop.f32.mrb[0].mxu0
      %5079 = vdwg.mxu0
      %v5084 = vunpack.c.l.b16 %v4970
      %v5085 = vunpack.c.l.b16 %v4971
      %v5086 = vunpack.c.l.b16 %v4972
      %v5087 = vunpack.c.l.b16 %v4973
      %v5088 = vpack.c.b16 %v5085, %v5084
      %v5089 = vpack.c.b16 %v5087, %v5086
      %v5092 = vsel %vm3525, %v4990, 0
      %v5094 = vsel %vm3525, %v4991, 0
      %5096 = vmatprep.subr.bf16.mxu0 0
      %5097 = vmatpush1.bf16.msra.mxu0 %v5088
      %5098 = vmatprep.subr.bf16.mxu0 0
      %5099 = vmatpush1.bf16.msra.mxu0 %v5089
      %5100 = vmatprep.subr.bf16.mxu0 0
      %5101 = vmatpush1.bf16.msra.mxu0 0
      %5102 = vmatprep.subr.bf16.mxu0 0
      %5103 = vmatpush1.bf16.msra.mxu0 0
      %5104 = vmatprep.subr.bf16.mxu0 0
      %5105 = vmatpush1.bf16.msra.mxu0 0
      %5106 = vmatprep.subr.bf16.mxu0 0
      %5107 = vmatpush1.bf16.msra.mxu0 0
      %5108 = vmatprep.subr.bf16.mxu0 0
      %5109 = vmatpush1.bf16.msra.mxu0 0
      %5110 = vmatprep.subr.bf16.mxu0 0
      %5111 = vmatpush1.bf16.msra.mxu0 0
      %5112 = vmatprep.subr.bf16.mxu0 0
      %5113 = vmatpush1.bf16.msra.mxu0 0
      %5114 = vmatprep.subr.bf16.mxu0 0
      %5115 = vmatpush1.bf16.msra.mxu0 0
      %5116 = vmatprep.subr.bf16.mxu0 0
      %5117 = vmatpush1.bf16.msra.mxu0 0
      %5118 = vmatprep.subr.bf16.mxu0 0
      %5119 = vmatpush1.bf16.msra.mxu0 0
      %5120 = vmatprep.subr.bf16.mxu0 0
      %5121 = vmatpush1.bf16.msra.mxu0 0
      %5122 = vmatprep.subr.bf16.mxu0 0
      %5123 = vmatpush1.bf16.msra.mxu0 0
      %5124 = vmatprep.subr.bf16.mxu0 0
      %5125 = vmatpush1.bf16.msra.mxu0 0
      %5126 = vmatprep.subr.bf16.mxu0 0
      %5127 = vmatpush1.bf16.msra.mxu0 0
      %5128 = vmatprep.mubr.bf16.mxu0 0
      %5129 = vmatmul.mubr.bf16.gmra.mrb[0].mxu0 %v5092
      %v5130 = vpop.f32.mrb[0].mxu0
      %v5131 = vadd.f32 %v5066, %v5130
      %v5132 = vpop.f32.mrb[0].mxu0
      %v5133 = vpop.f32.mrb[0].mxu0
      %v5134 = vadd.f32 %v5069, %v5133
      %v5135 = vpop.f32.mrb[0].mxu0
      %5136 = vmatprep.mubr.bf16.mxu0 0
      %5137 = vmatmul.mubr.bf16.gmra.mrb[0].mxu0 %v5094
      %v5138 = vpop.f32.mrb[0].mxu0
      %v5139 = vadd.f32 %v5074, %v5138
      %v5140 = vpop.f32.mrb[0].mxu0
      %v5141 = vpop.f32.mrb[0].mxu0
      %v5142 = vadd.f32 %v5077, %v5141
      %v5143 = vpop.f32.mrb[0].mxu0
      %5144 = vdwg.mxu0
      %v5145 = vld [vmem:[#allocation3] sm:$0xe]
      %s5146 = scalar_lea.vmem %s5, 32
      %v5147 = vld [vmem:[%s5146] sm:$0xf]
      %v5148 = vld [vmem:[%s5146 + $0x4] sm:$0xf]
      %v5149 = vld [vmem:[%s5146 + $0x8] sm:$0xf]
      %v5150 = vld [vmem:[%s5146 + $0xc] sm:$0xf]
      %v5152 = vunpack.c.l.b16 %v5145
      %v5153 = vpack.c.b16 %v4986, %v5152
      %v5154 = vrot.slane %v5153, 1
      %v5155 = vrot.slane %v4991, 1
      %v5156 = vsel %vm3802, %v5154, %v5155
      %v5157 = vrot.slane %v4992, 1
      %v5158 = vsel %vm3802, %v5155, %v5157
      %v5163 = vunpack.c.l.b16 %v5147
      %v5164 = vunpack.c.l.b16 %v5148
      %v5165 = vunpack.c.l.b16 %v5149
      %v5166 = vunpack.c.l.b16 %v5150
      %v5167 = vpack.c.b16 %v5164, %v5163
      %v5168 = vpack.c.b16 %v5166, %v5165
      %v5172 = vsel %vm3525, %v5156, 0
      %v5175 = vsel %vm3525, %v5158, 0
      %5177 = vmatprep.subr.bf16.mxu0 0
      %5178 = vmatpush1.bf16.msra.mxu0 %v5167
      %5179 = vmatprep.subr.bf16.mxu0 0
      %5180 = vmatpush1.bf16.msra.mxu0 %v5168
      %5181 = vmatprep.subr.bf16.mxu0 0
      %5182 = vmatpush1.bf16.msra.mxu0 0
      %5183 = vmatprep.subr.bf16.mxu0 0
      %5184 = vmatpush1.bf16.msra.mxu0 0
      %5185 = vmatprep.subr.bf16.mxu0 0
      %5186 = vmatpush1.bf16.msra.mxu0 0
      %5187 = vmatprep.subr.bf16.mxu0 0
      %5188 = vmatpush1.bf16.msra.mxu0 0
      %5189 = vmatprep.subr.bf16.mxu0 0
      %5190 = vmatpush1.bf16.msra.mxu0 0
      %5191 = vmatprep.subr.bf16.mxu0 0
      %5192 = vmatpush1.bf16.msra.mxu0 0
      %5193 = vmatprep.subr.bf16.mxu0 0
      %5194 = vmatpush1.bf16.msra.mxu0 0
      %5195 = vmatprep.subr.bf16.mxu0 0
      %5196 = vmatpush1.bf16.msra.mxu0 0
      %5197 = vmatprep.subr.bf16.mxu0 0
      %5198 = vmatpush1.bf16.msra.mxu0 0
      %5199 = vmatprep.subr.bf16.mxu0 0
      %5200 = vmatpush1.bf16.msra.mxu0 0
      %5201 = vmatprep.subr.bf16.mxu0 0
      %5202 = vmatpush1.bf16.msra.mxu0 0
      %5203 = vmatprep.subr.bf16.mxu0 0
      %5204 = vmatpush1.bf16.msra.mxu0 0
      %5205 = vmatprep.subr.bf16.mxu0 0
      %5206 = vmatpush1.bf16.msra.mxu0 0
      %5207 = vmatprep.subr.bf16.mxu0 0
      %5208 = vmatpush1.bf16.msra.mxu0 0
      %5209 = vmatprep.mubr.bf16.mxu0 0
      %5210 = vmatmul.mubr.bf16.gmra.mrb[0].mxu0 %v5172
      %v5211 = vpop.f32.mrb[0].mxu0
      %v5212 = vadd.f32 0.0, %v5211
      %v5213 = vpop.f32.mrb[0].mxu0
      %v5214 = vpop.f32.mrb[0].mxu0
      %v5215 = vadd.f32 0.0, %v5214
      %v5216 = vpop.f32.mrb[0].mxu0
      %5217 = vmatprep.mubr.bf16.mxu0 0
      %5218 = vmatmul.mubr.bf16.gmra.mrb[0].mxu0 %v5175
      %v5219 = vpop.f32.mrb[0].mxu0
      %v5220 = vadd.f32 0.0, %v5219
      %v5221 = vpop.f32.mrb[0].mxu0
      %v5222 = vpop.f32.mrb[0].mxu0
      %v5223 = vadd.f32 0.0, %v5222
      %v5224 = vpop.f32.mrb[0].mxu0
      %5225 = vdwg.mxu0
      %v5226 = vadd.f32 %v5131, %v5212
      %v5227 = vadd.f32 %v5134, %v5215
      %v5228 = vadd.f32 %v5139, %v5220
      %v5229 = vadd.f32 %v5142, %v5223
      %v5230 = vld [vmem:[%s6] sm:$0x1]
      %v5232 = vlaneseq
      %v5233 = vshrl.u32 %v5232, 7
      %v5234 = vsub.s32 0, %v5233
      %v5235 = vrot.slane %v5230, %v5234
      %v5237 = vadd.f32 %v5226, %v5235
      %v5238 = vadd.f32 %v5227, %v5235
      %v5239 = vadd.f32 %v5228, %v5235
      %v5240 = vadd.f32 %v5229, %v5235
      %v5241 = vmax.f32 %v5237, 0.0
      %v5242 = vmax.f32 %v5238, 0.0
      %v5243 = vmax.f32 %v5239, 0.0
      %v5244 = vmax.f32 %v5240, 0.0
      %v5246 = vrot.slane %v5241, 1
      %v5248 = vmax.f32 %v5241, %v5246
      %v5249 = vpack.c.bf16 %v5248, %v5248
      %v5250 = vld [vmem:[#allocation4] sm:$0x1]
      %v5251 = vsel %vm3350, %v5249, %v5250
      %5252 = vst [vmem:[#allocation4] sm:$0x1] %v5251
      %v5255 = vunpack.c.l.s4 1966171168
      %v5256 = vunpack.c.0.s8 %v5255
      %v5257 = vlaneseq
      %v5258 = vshrl.u32 %v5257, 7
      %v5259 = vsub.s32 %v5256, %v5258
      %v5260 = vrot.slane %v5249, %v5259
      %v5261 = vcombine.high %v5260, %v5260
      %v5263 = vunpack.c.l.s4 1966171168
      %v5264 = vunpack.c.0.s8 %v5263
      %v5265 = vlaneseq
      %v5266 = vshrl.u32 %v5265, 7
      %v5267 = vsub.s32 %v5264, %v5266
      %v5268 = vrot.slane %v5260, %v5267
      %v5270 = vunpack.c.l.s4 1966171168
      %v5271 = vunpack.c.0.s8 %v5270
      %v5272 = vlaneseq
      %v5273 = vshrl.u32 %v5272, 7
      %v5274 = vsub.s32 %v5271, %v5273
      %v5275 = vrot.slane %v5261, %v5274
      %5276 = vrot.lane.b32.xlu0 %v5275, 32
      %v5277 = vpop.permute.xlu0 %5276
      %vm5279 = vcmask 516352
      %vm5280 = vmand %vm5279, %vm3349
      %v5281 = vld [vmem:[#allocation4] sm:$0x1]
      %v5282 = vsel %vm5280, %v5277, %v5281
      %5283 = vst [vmem:[#allocation4] sm:$0x1] %v5282
      %v5284 = vcombine.high %v5268, %v5268
      %5285 = vrot.lane.b32.xlu0 %v5284, 64
      %v5286 = vpop.permute.xlu0 %5285
      %vm5288 = vcmask 778752
      %vm5289 = vmand %vm5288, %vm3349
      %v5290 = vld [vmem:[#allocation4] sm:$0x1]
      %v5291 = vsel %vm5289, %v5286, %v5290
      %5292 = vst [vmem:[#allocation4] sm:$0x1] %v5291
      %v5293 = vcombine.high %v5275, %v5275
      %5294 = vrot.lane.b32.xlu0 %v5293, 96
      %v5295 = vpop.permute.xlu0 %5294
      %vm5297 = vcmask 1041152
      %vm5298 = vmand %vm5297, %vm3349
      %v5299 = vld [vmem:[#allocation4] sm:$0x1]
      %v5300 = vsel %vm5298, %v5295, %v5299
      %5301 = vst [vmem:[#allocation4] sm:$0x1] %v5300
      %v5303 = vrot.slane %v5242, 1
      %v5305 = vmax.f32 %v5242, %v5303
      %v5306 = vpack.c.bf16 %v5305, %v5305
      %v5307 = vld [vmem:[#allocation4 + $0x1] sm:$0x1]
      %v5308 = vsel %vm3350, %v5306, %v5307
      %5309 = vst [vmem:[#allocation4 + $0x1] sm:$0x1] %v5308
      %v5312 = vunpack.c.l.s4 1966171168
      %v5313 = vunpack.c.0.s8 %v5312
      %v5314 = vlaneseq
      %v5315 = vshrl.u32 %v5314, 7
      %v5316 = vsub.s32 %v5313, %v5315
      %v5317 = vrot.slane %v5306, %v5316
      %v5318 = vcombine.high %v5317, %v5317
      %v5320 = vunpack.c.l.s4 1966171168
      %v5321 = vunpack.c.0.s8 %v5320
      %v5322 = vlaneseq
      %v5323 = vshrl.u32 %v5322, 7
      %v5324 = vsub.s32 %v5321, %v5323
      %v5325 = vrot.slane %v5317, %v5324
      %v5327 = vunpack.c.l.s4 1966171168
      %v5328 = vunpack.c.0.s8 %v5327
      %v5329 = vlaneseq
      %v5330 = vshrl.u32 %v5329, 7
      %v5331 = vsub.s32 %v5328, %v5330
      %v5332 = vrot.slane %v5318, %v5331
      %5333 = vrot.lane.b32.xlu0 %v5332, 32
      %v5334 = vpop.permute.xlu0 %5333
      %v5336 = vld [vmem:[#allocation4 + $0x1] sm:$0x1]
      %v5337 = vsel %vm5280, %v5334, %v5336
      %5338 = vst [vmem:[#allocation4 + $0x1] sm:$0x1] %v5337
      %v5339 = vcombine.high %v5325, %v5325
      %5340 = vrot.lane.b32.xlu0 %v5339, 64
      %v5341 = vpop.permute.xlu0 %5340
      %v5343 = vld [vmem:[#allocation4 + $0x1] sm:$0x1]
      %v5344 = vsel %vm5289, %v5341, %v5343
      %5345 = vst [vmem:[#allocation4 + $0x1] sm:$0x1] %v5344
      %v5346 = vcombine.high %v5332, %v5332
      %5347 = vrot.lane.b32.xlu0 %v5346, 96
      %v5348 = vpop.permute.xlu0 %5347
      %v5350 = vld [vmem:[#allocation4 + $0x1] sm:$0x1]
      %v5351 = vsel %vm5298, %v5348, %v5350
      %5352 = vst [vmem:[#allocation4 + $0x1] sm:$0x1] %v5351
      %v5354 = vrot.slane %v5243, 1
      %v5356 = vmax.f32 %v5243, %v5354
      %v5357 = vpack.c.bf16 %v5356, %v5356
      %v5358 = vld [vmem:[#allocation4 + $0x2] sm:$0x1]
      %v5359 = vsel %vm3350, %v5357, %v5358
      %5360 = vst [vmem:[#allocation4 + $0x2] sm:$0x1] %v5359
      %v5363 = vunpack.c.l.s4 1966171168
      %v5364 = vunpack.c.0.s8 %v5363
      %v5365 = vlaneseq
      %v5366 = vshrl.u32 %v5365, 7
      %v5367 = vsub.s32 %v5364, %v5366
      %v5368 = vrot.slane %v5357, %v5367
      %v5369 = vcombine.high %v5368, %v5368
      %v5371 = vunpack.c.l.s4 1966171168
      %v5372 = vunpack.c.0.s8 %v5371
      %v5373 = vlaneseq
      %v5374 = vshrl.u32 %v5373, 7
      %v5375 = vsub.s32 %v5372, %v5374
      %v5376 = vrot.slane %v5368, %v5375
      %v5378 = vunpack.c.l.s4 1966171168
      %v5379 = vunpack.c.0.s8 %v5378
      %v5380 = vlaneseq
      %v5381 = vshrl.u32 %v5380, 7
      %v5382 = vsub.s32 %v5379, %v5381
      %v5383 = vrot.slane %v5369, %v5382
      %5384 = vrot.lane.b32.xlu0 %v5383, 32
      %v5385 = vpop.permute.xlu0 %5384
      %v5387 = vld [vmem:[#allocation4 + $0x2] sm:$0x1]
      %v5388 = vsel %vm5280, %v5385, %v5387
      %5389 = vst [vmem:[#allocation4 + $0x2] sm:$0x1] %v5388
      %v5390 = vcombine.high %v5376, %v5376
      %5391 = vrot.lane.b32.xlu0 %v5390, 64
      %v5392 = vpop.permute.xlu0 %5391
      %v5394 = vld [vmem:[#allocation4 + $0x2] sm:$0x1]
      %v5395 = vsel %vm5289, %v5392, %v5394
      %5396 = vst [vmem:[#allocation4 + $0x2] sm:$0x1] %v5395
      %v5397 = vcombine.high %v5383, %v5383
      %5398 = vrot.lane.b32.xlu0 %v5397, 96
      %v5399 = vpop.permute.xlu0 %5398
      %v5401 = vld [vmem:[#allocation4 + $0x2] sm:$0x1]
      %v5402 = vsel %vm5298, %v5399, %v5401
      %5403 = vst [vmem:[#allocation4 + $0x2] sm:$0x1] %v5402
      %v5405 = vrot.slane %v5244, 1
      %v5407 = vmax.f32 %v5244, %v5405
      %v5408 = vpack.c.bf16 %v5407, %v5407
      %v5409 = vld [vmem:[#allocation4 + $0x3] sm:$0x1]
      %v5410 = vsel %vm3350, %v5408, %v5409
      %5411 = vst [vmem:[#allocation4 + $0x3] sm:$0x1] %v5410
      %v5414 = vunpack.c.l.s4 1966171168
      %v5415 = vunpack.c.0.s8 %v5414
      %v5416 = vlaneseq
      %v5417 = vshrl.u32 %v5416, 7
      %v5418 = vsub.s32 %v5415, %v5417
      %v5419 = vrot.slane %v5408, %v5418
      %v5420 = vcombine.high %v5419, %v5419
      %v5422 = vunpack.c.l.s4 1966171168
      %v5423 = vunpack.c.0.s8 %v5422
      %v5424 = vlaneseq
      %v5425 = vshrl.u32 %v5424, 7
      %v5426 = vsub.s32 %v5423, %v5425
      %v5427 = vrot.slane %v5419, %v5426
      %v5429 = vunpack.c.l.s4 1966171168
      %v5430 = vunpack.c.0.s8 %v5429
      %v5431 = vlaneseq
      %v5432 = vshrl.u32 %v5431, 7
      %v5433 = vsub.s32 %v5430, %v5432
      %v5434 = vrot.slane %v5420, %v5433
      %5435 = vrot.lane.b32.xlu0 %v5434, 32
      %v5436 = vpop.permute.xlu0 %5435
      %v5438 = vld [vmem:[#allocation4 + $0x3] sm:$0x1]
      %v5439 = vsel %vm5280, %v5436, %v5438
      %5440 = vst [vmem:[#allocation4 + $0x3] sm:$0x1] %v5439
      %v5441 = vcombine.high %v5427, %v5427
      %5442 = vrot.lane.b32.xlu0 %v5441, 64
      %v5443 = vpop.permute.xlu0 %5442
      %v5445 = vld [vmem:[#allocation4 + $0x3] sm:$0x1]
      %v5446 = vsel %vm5289, %v5443, %v5445
      %5447 = vst [vmem:[#allocation4 + $0x3] sm:$0x1] %v5446
      %v5448 = vcombine.high %v5434, %v5434
      %5449 = vrot.lane.b32.xlu0 %v5448, 96
      %v5450 = vpop.permute.xlu0 %5449
      %v5452 = vld [vmem:[#allocation4 + $0x3] sm:$0x1]
      %v5453 = vsel %vm5298, %v5450, %v5452
      %5454 = vst [vmem:[#allocation4 + $0x3] sm:$0x1] %v5453
      %v5455 = vld [vmem:[#allocation4] sm:$0xf]
      %v5456 = vld [vmem:[%s7] sm:$0xf]
      %v5457 = vld [vmem:[%s7 + $0x4] sm:$0xf]
      %v5458 = vld [vmem:[%s7 + $0x8] sm:$0xf]
      %v5459 = vld [vmem:[%s7 + $0xc] sm:$0xf]
      %v5460 = vld [vmem:[%s7 + $0x10] sm:$0xf]
      %v5461 = vld [vmem:[%s7 + $0x14] sm:$0xf]
      %v5462 = vld [vmem:[%s7 + $0x18] sm:$0xf]
      %v5463 = vld [vmem:[%s7 + $0x1c] sm:$0xf]
      %v5464 = vld [vmem:[%s7 + $0x20] sm:$0xf]
      %v5465 = vld [vmem:[%s7 + $0x24] sm:$0xf]
      %v5466 = vld [vmem:[%s7 + $0x28] sm:$0xf]
      %v5467 = vld [vmem:[%s7 + $0x2c] sm:$0xf]
      %v5468 = vld [vmem:[%s7 + $0x30] sm:$0xf]
      %v5469 = vld [vmem:[%s7 + $0x34] sm:$0xf]
      %v5470 = vld [vmem:[%s7 + $0x38] sm:$0xf]
      %v5471 = vld [vmem:[%s7 + $0x3c] sm:$0xf]
      %v5472 = vld [vmem:[%s7 + $0x40] sm:$0xf]
      %v5473 = vld [vmem:[%s7 + $0x44] sm:$0xf]
      %v5474 = vld [vmem:[%s7 + $0x48] sm:$0xf]
      %v5475 = vld [vmem:[%s7 + $0x4c] sm:$0xf]
      %v5476 = vld [vmem:[%s7 + $0x50] sm:$0xf]
      %v5477 = vld [vmem:[%s7 + $0x54] sm:$0xf]
      %v5478 = vld [vmem:[%s7 + $0x58] sm:$0xf]
      %v5479 = vld [vmem:[%s7 + $0x5c] sm:$0xf]
      %v5480 = vld [vmem:[%s7 + $0x60] sm:$0xf]
      %v5481 = vld [vmem:[%s7 + $0x64] sm:$0xf]
      %v5482 = vld [vmem:[%s7 + $0x68] sm:$0xf]
      %v5483 = vld [vmem:[%s7 + $0x6c] sm:$0xf]
      %v5484 = vld [vmem:[%s7 + $0x70] sm:$0xf]
      %v5485 = vld [vmem:[%s7 + $0x74] sm:$0xf]
      %v5486 = vld [vmem:[%s7 + $0x78] sm:$0xf]
      %v5487 = vld [vmem:[%s7 + $0x7c] sm:$0xf]
      %v5488 = vld [vmem:[%s7 + $0x80] sm:$0xf]
      %v5489 = vld [vmem:[%s7 + $0x84] sm:$0xf]
      %v5490 = vld [vmem:[%s7 + $0x88] sm:$0xf]
      %v5491 = vld [vmem:[%s7 + $0x8c] sm:$0xf]
      %v5492 = vld [vmem:[%s7 + $0x90] sm:$0xf]
      %v5493 = vld [vmem:[%s7 + $0x94] sm:$0xf]
      %v5494 = vld [vmem:[%s7 + $0x98] sm:$0xf]
      %v5495 = vld [vmem:[%s7 + $0x9c] sm:$0xf]
      %v5496 = vld [vmem:[%s7 + $0xa0] sm:$0xf]
      %v5497 = vld [vmem:[%s7 + $0xa4] sm:$0xf]
      %v5498 = vld [vmem:[%s7 + $0xa8] sm:$0xf]
      %v5499 = vld [vmem:[%s7 + $0xac] sm:$0xf]
      %v5500 = vld [vmem:[%s7 + $0xb0] sm:$0xf]
      %v5501 = vld [vmem:[%s7 + $0xb4] sm:$0xf]
      %v5502 = vld [vmem:[%s7 + $0xb8] sm:$0xf]
      %v5503 = vld [vmem:[%s7 + $0xbc] sm:$0xf]
      %v5504 = vld [vmem:[%s7 + $0xc0] sm:$0xf]
      %v5505 = vld [vmem:[%s7 + $0xc4] sm:$0xf]
      %v5506 = vld [vmem:[%s7 + $0xc8] sm:$0xf]
      %v5507 = vld [vmem:[%s7 + $0xcc] sm:$0xf]
      %v5508 = vld [vmem:[%s7 + $0xd0] sm:$0xf]
      %v5509 = vld [vmem:[%s7 + $0xd4] sm:$0xf]
      %v5510 = vld [vmem:[%s7 + $0xd8] sm:$0xf]
      %v5511 = vld [vmem:[%s7 + $0xdc] sm:$0xf]
      %v5512 = vld [vmem:[%s7 + $0xe0] sm:$0xf]
      %v5513 = vld [vmem:[%s7 + $0xe4] sm:$0xf]
      %v5514 = vld [vmem:[%s7 + $0xe8] sm:$0xf]
      %v5515 = vld [vmem:[%s7 + $0xec] sm:$0xf]
      %v5516 = vld [vmem:[%s7 + $0xf0] sm:$0xf]
      %v5517 = vld [vmem:[%s7 + $0xf4] sm:$0xf]
      %v5518 = vld [vmem:[%s7 + $0xf8] sm:$0xf]
      %v5519 = vld [vmem:[%s7 + $0xfc] sm:$0xf]
      %v5520 = vld [vmem:[%s8] sm:$0x1]
      %v5523 = vunpack.c.l.s4 1966171168
      %v5524 = vunpack.c.0.s8 %v5523
      %v5525 = vlaneseq
      %v5526 = vshrl.u32 %v5525, 7
      %v5527 = vsub.s32 %v5524, %v5526
      %v5528 = vrot.slane %v5455, %v5527
      %v5529 = vcombine.high %v5528, %v5528
      %v5531 = vunpack.c.l.s4 1966171168
      %v5532 = vunpack.c.0.s8 %v5531
      %v5533 = vlaneseq
      %v5534 = vshrl.u32 %v5533, 7
      %v5535 = vsub.s32 %v5532, %v5534
      %v5536 = vrot.slane %v5528, %v5535
      %v5538 = vunpack.c.l.s4 1966171168
      %v5539 = vunpack.c.0.s8 %v5538
      %v5540 = vlaneseq
      %v5541 = vshrl.u32 %v5540, 7
      %v5542 = vsub.s32 %v5539, %v5541
      %v5543 = vrot.slane %v5529, %v5542
      %v5544 = vcombine.high %v5536, %v5536
      %v5545 = vcombine.high %v5543, %v5543
      %v5614 = vunpack.c.l.b16 %v5456
      %v5615 = vunpack.c.l.b16 %v5457
      %v5616 = vunpack.c.l.b16 %v5458
      %v5617 = vunpack.c.l.b16 %v5459
      %v5618 = vunpack.c.l.b16 %v5460
      %v5619 = vunpack.c.l.b16 %v5461
      %v5620 = vunpack.c.l.b16 %v5462
      %v5621 = vunpack.c.l.b16 %v5463
      %v5622 = vunpack.c.l.b16 %v5464
      %v5623 = vunpack.c.l.b16 %v5465
      %v5624 = vunpack.c.l.b16 %v5466
      %v5625 = vunpack.c.l.b16 %v5467
      %v5626 = vunpack.c.l.b16 %v5468
      %v5627 = vunpack.c.l.b16 %v5469
      %v5628 = vunpack.c.l.b16 %v5470
      %v5629 = vunpack.c.l.b16 %v5471
      %v5630 = vunpack.c.l.b16 %v5472
      %v5631 = vunpack.c.l.b16 %v5473
      %v5632 = vunpack.c.l.b16 %v5474
      %v5633 = vunpack.c.l.b16 %v5475
      %v5634 = vunpack.c.l.b16 %v5476
      %v5635 = vunpack.c.l.b16 %v5477
      %v5636 = vunpack.c.l.b16 %v5478
      %v5637 = vunpack.c.l.b16 %v5479
      %v5638 = vunpack.c.l.b16 %v5480
      %v5639 = vunpack.c.l.b16 %v5481
      %v5640 = vunpack.c.l.b16 %v5482
      %v5641 = vunpack.c.l.b16 %v5483
      %v5642 = vunpack.c.l.b16 %v5484
      %v5643 = vunpack.c.l.b16 %v5485
      %v5644 = vunpack.c.l.b16 %v5486
      %v5645 = vunpack.c.l.b16 %v5487
      %v5646 = vunpack.c.l.b16 %v5488
      %v5647 = vunpack.c.l.b16 %v5489
      %v5648 = vunpack.c.l.b16 %v5490
      %v5649 = vunpack.c.l.b16 %v5491
      %v5650 = vunpack.c.l.b16 %v5492
      %v5651 = vunpack.c.l.b16 %v5493
      %v5652 = vunpack.c.l.b16 %v5494
      %v5653 = vunpack.c.l.b16 %v5495
      %v5654 = vunpack.c.l.b16 %v5496
      %v5655 = vunpack.c.l.b16 %v5497
      %v5656 = vunpack.c.l.b16 %v5498
      %v5657 = vunpack.c.l.b16 %v5499
      %v5658 = vunpack.c.l.b16 %v5500
      %v5659 = vunpack.c.l.b16 %v5501
      %v5660 = vunpack.c.l.b16 %v5502
      %v5661 = vunpack.c.l.b16 %v5503
      %v5662 = vunpack.c.l.b16 %v5504
      %v5663 = vunpack.c.l.b16 %v5505
      %v5664 = vunpack.c.l.b16 %v5506
      %v5665 = vunpack.c.l.b16 %v5507
      %v5666 = vunpack.c.l.b16 %v5508
      %v5667 = vunpack.c.l.b16 %v5509
      %v5668 = vunpack.c.l.b16 %v5510
      %v5669 = vunpack.c.l.b16 %v5511
      %v5670 = vunpack.c.l.b16 %v5512
      %v5671 = vunpack.c.l.b16 %v5513
      %v5672 = vunpack.c.l.b16 %v5514
      %v5673 = vunpack.c.l.b16 %v5515
      %v5674 = vunpack.c.l.b16 %v5516
      %v5675 = vunpack.c.l.b16 %v5517
      %v5676 = vunpack.c.l.b16 %v5518
      %v5677 = vunpack.c.l.b16 %v5519
      %v5678 = vpack.c.b16 %v5615, %v5614
      %v5679 = vpack.c.b16 %v5617, %v5616
      %v5680 = vpack.c.b16 %v5619, %v5618
      %v5681 = vpack.c.b16 %v5621, %v5620
      %v5682 = vpack.c.b16 %v5623, %v5622
      %v5683 = vpack.c.b16 %v5625, %v5624
      %v5684 = vpack.c.b16 %v5627, %v5626
      %v5685 = vpack.c.b16 %v5629, %v5628
      %v5686 = vpack.c.b16 %v5631, %v5630
      %v5687 = vpack.c.b16 %v5633, %v5632
      %v5688 = vpack.c.b16 %v5635, %v5634
      %v5689 = vpack.c.b16 %v5637, %v5636
      %v5690 = vpack.c.b16 %v5639, %v5638
      %v5691 = vpack.c.b16 %v5641, %v5640
      %v5692 = vpack.c.b16 %v5643, %v5642
      %v5693 = vpack.c.b16 %v5645, %v5644
      %v5694 = vpack.c.b16 %v5647, %v5646
      %v5695 = vpack.c.b16 %v5649, %v5648
      %v5696 = vpack.c.b16 %v5651, %v5650
      %v5697 = vpack.c.b16 %v5653, %v5652
      %v5698 = vpack.c.b16 %v5655, %v5654
      %v5699 = vpack.c.b16 %v5657, %v5656
      %v5700 = vpack.c.b16 %v5659, %v5658
      %v5701 = vpack.c.b16 %v5661, %v5660
      %v5702 = vpack.c.b16 %v5663, %v5662
      %v5703 = vpack.c.b16 %v5665, %v5664
      %v5704 = vpack.c.b16 %v5667, %v5666
      %v5705 = vpack.c.b16 %v5669, %v5668
      %v5706 = vpack.c.b16 %v5671, %v5670
      %v5707 = vpack.c.b16 %v5673, %v5672
      %v5708 = vpack.c.b16 %v5675, %v5674
      %v5709 = vpack.c.b16 %v5677, %v5676
      %5742 = vmatprep.subr.bf16.mxu0 0
      %5743 = vmatpush1.bf16.msra.mxu0 %v5678
      %5744 = vmatprep.subr.bf16.mxu0 0
      %5745 = vmatpush1.bf16.msra.mxu0 %v5679
      %5746 = vmatprep.subr.bf16.mxu0 0
      %5747 = vmatpush1.bf16.msra.mxu0 %v5680
      %5748 = vmatprep.subr.bf16.mxu0 0
      %5749 = vmatpush1.bf16.msra.mxu0 %v5681
      %5750 = vmatprep.subr.bf16.mxu0 0
      %5751 = vmatpush1.bf16.msra.mxu0 %v5682
      %5752 = vmatprep.subr.bf16.mxu0 0
      %5753 = vmatpush1.bf16.msra.mxu0 %v5683
      %5754 = vmatprep.subr.bf16.mxu0 0
      %5755 = vmatpush1.bf16.msra.mxu0 %v5684
      %5756 = vmatprep.subr.bf16.mxu0 0
      %5757 = vmatpush1.bf16.msra.mxu0 %v5685
      %5758 = vmatprep.subr.bf16.mxu0 0
      %5759 = vmatpush1.bf16.msra.mxu0 %v5686
      %5760 = vmatprep.subr.bf16.mxu0 0
      %5761 = vmatpush1.bf16.msra.mxu0 %v5687
      %5762 = vmatprep.subr.bf16.mxu0 0
      %5763 = vmatpush1.bf16.msra.mxu0 %v5688
      %5764 = vmatprep.subr.bf16.mxu0 0
      %5765 = vmatpush1.bf16.msra.mxu0 %v5689
      %5766 = vmatprep.subr.bf16.mxu0 0
      %5767 = vmatpush1.bf16.msra.mxu0 %v5690
      %5768 = vmatprep.subr.bf16.mxu0 0
      %5769 = vmatpush1.bf16.msra.mxu0 %v5691
      %5770 = vmatprep.subr.bf16.mxu0 0
      %5771 = vmatpush1.bf16.msra.mxu0 %v5692
      %5772 = vmatprep.subr.bf16.mxu0 0
      %5773 = vmatpush1.bf16.msra.mxu0 %v5693
      %5774 = vmatprep.mubr.bf16.mxu0 %v5543
      %5775 = vmatmul.mubr.bf16.gmra.mrb[0].mxu0 %v5536
      %v5776 = vpop.f32.mrb[0].mxu0
      %v5777 = vadd.f32 %v5520, %v5776
      %v5778 = vpop.f32.mrb[0].mxu0
      %v5779 = vpop.f32.mrb[0].mxu0
      %v5780 = vpop.f32.mrb[0].mxu0
      %5781 = vdwg.mxu0
      %5782 = vmatprep.subr.bf16.mxu0 0
      %5783 = vmatpush1.bf16.msra.mxu0 %v5694
      %5784 = vmatprep.subr.bf16.mxu0 0
      %5785 = vmatpush1.bf16.msra.mxu0 %v5695
      %5786 = vmatprep.subr.bf16.mxu0 0
      %5787 = vmatpush1.bf16.msra.mxu0 %v5696
      %5788 = vmatprep.subr.bf16.mxu0 0
      %5789 = vmatpush1.bf16.msra.mxu0 %v5697
      %5790 = vmatprep.subr.bf16.mxu0 0
      %5791 = vmatpush1.bf16.msra.mxu0 %v5698
      %5792 = vmatprep.subr.bf16.mxu0 0
      %5793 = vmatpush1.bf16.msra.mxu0 %v5699
      %5794 = vmatprep.subr.bf16.mxu0 0
      %5795 = vmatpush1.bf16.msra.mxu0 %v5700
      %5796 = vmatprep.subr.bf16.mxu0 0
      %5797 = vmatpush1.bf16.msra.mxu0 %v5701
      %5798 = vmatprep.subr.bf16.mxu0 0
      %5799 = vmatpush1.bf16.msra.mxu0 %v5702
      %5800 = vmatprep.subr.bf16.mxu0 0
      %5801 = vmatpush1.bf16.msra.mxu0 %v5703
      %5802 = vmatprep.subr.bf16.mxu0 0
      %5803 = vmatpush1.bf16.msra.mxu0 %v5704
      %5804 = vmatprep.subr.bf16.mxu0 0
      %5805 = vmatpush1.bf16.msra.mxu0 %v5705
      %5806 = vmatprep.subr.bf16.mxu0 0
      %5807 = vmatpush1.bf16.msra.mxu0 %v5706
      %5808 = vmatprep.subr.bf16.mxu0 0
      %5809 = vmatpush1.bf16.msra.mxu0 %v5707
      %5810 = vmatprep.subr.bf16.mxu0 0
      %5811 = vmatpush1.bf16.msra.mxu0 %v5708
      %5812 = vmatprep.subr.bf16.mxu0 0
      %5813 = vmatpush1.bf16.msra.mxu0 %v5709
      %5814 = vmatprep.mubr.bf16.mxu0 %v5545
      %5815 = vmatmul.mubr.bf16.gmra.mrb[0].mxu0 %v5544
      %v5816 = vpop.f32.mrb[0].mxu0
      %v5817 = vadd.f32 %v5777, %v5816
      %v5818 = vpop.f32.mrb[0].mxu0
      %v5819 = vpop.f32.mrb[0].mxu0
      %v5820 = vpop.f32.mrb[0].mxu0
      %5821 = vdwg.mxu0
      %v5822 = vmax.f32 %v5817, 0.0
      %v5823 = vld [vmem:[%s9] sm:$0x1]
      %v5824 = vmul.f32 %v5822, %v5823
      %vm5825 = vcmask 253952
      %v5826 = vsel %vm5825, %v5824, 0.0
      %5827 = vadd.xlane.f32.xlu0 %v5826
      %v5828 = vpop.xlane.xlu0 %5827
      %v5829 = vld [vmem:[#allocation5] sm:$0x1]
      %v5830 = vadd.f32 %v5828, %v5829
      %v5831 = vxor.u32 %v5830, 2147483648
      %v5832 = vmul.f32 %v5831, 1.442695
      %v5833 = vpow.pop %v5832
      %v5834 = vadd.f32 %v5833, 1.0
      %v5835 = vrcp.pop %v5834
      %v5836 = vmul.f32 1.0, %v5835
      %vm5837 = vcmask 0
      %5838 = vst.msk [vmem:[%s384] sm:$0x1] %vm5837, %v5836
      %p5839 = scmp.lt.s32.totalorder %s24, 1
      %s5840 = scalar_select %p5839, %s24, 1
      %s5841 = scalar_lea.vmem %s11, %s5840
      // Predicated region
      $region65: #{forward.1} parent=63 // pred_check
        %p5842 = pneg %p278
      $region66: #{forward.1} parent=63 // pred_check_branch
        %5844 = sbr.rel (%p5842) target = $region68
      $region67: #{forward.1} parent=63 // pred_region
        _
      $region68: #{forward.1} parent=63 // pred_fallthru
        _
    $region64: #{forward.1} parent=5 // pred_fallthru
      _
    %p5845 = scmp.le.s32.totalorder 2, %s19
    // Predicated region
    $region69: #{forward.1} parent=5 // pred_check
      %p5846 = pneg %p5845
    $region70: #{forward.1} parent=5 // pred_check_branch
      %5848 = sbr.rel (%p5846) target = $region72
    $region71: #{forward.1} parent=5 // pred_region
      %s5849 = ssub.s32 %s19, 2
      // Predicated region
      $region73: #{forward.1} parent=71 // pred_check
        %p5850 = pneg %p284
      $region74: #{forward.1} parent=71 // pred_check_branch
        %5852 = sbr.rel (%p5850) target = $region76
      $region75: #{forward.1} parent=71 // pred_region
        %p5853 = scmp.lt.s32.totalorder %s25, 1
        %s5854 = scalar_select %p5853, %s25, 1
        %s5855 = scalar_lea.vmem %s11, %s5854
      $region76: #{forward.1} parent=71 // pred_fallthru
        _
    $region72: #{forward.1} parent=5 // pred_fallthru
      _
  $region6: #{forward.1} parent=0 // loop_footer
    %s23 = sadd.s32 1, %s19
  $region7: #{forward.1} parent=0 // loop_footer_branch
    %18 = sbr.rel target = $region3
  $region8: #{forward.1} parent=0 // loop_exit
    _

</llo_original>
